<compile_context>
chip_gen: v6e
topology: v6e:2x2x1
jax: 0.10.0
libtpu: 0.0.40
codegen_flags: <defaults>
</compile_context>

<pallas_src>
import jax
import jax.numpy as jnp
from jax import lax
from jax.experimental import pallas as pl
from jax.experimental.pallas import tpu as pltpu


_TAPS = tuple((di, dj) for di in range(3) for dj in range(3))


def _basic_block_kernel(xp_ref, w1_ref, s1_ref, b1_ref, w2_ref, s2_ref, b2_ref,
                        out_ref, hp_ref):
  """One batch element per grid step.

  xp_ref : (1, H+2, W+2, Cp)  zero-padded input tile (VMEM, f32)
  w1_ref : (9*Cp, Cp)         conv1 weights (bf16), taps stacked along rows
  w2_ref : (9*Cp, Cp)         conv2 weights (bf16)
  s*_ref : (1, Cp)            folded BN scale (f32)
  b*_ref : (1, Cp)            folded BN bias  (f32)
  out_ref: (1, H, W, Cp)
  hp_ref : (H+2, W+2, Cp)     VMEM scratch: zero-padded conv1 activation (f32)
  """
  _, H, W, Cp = out_ref.shape

  xp = xp_ref[0]                                          # (H+2, W+2, Cp) f32
  xb = xp.astype(jnp.bfloat16)                            # one cast, reused 9x

  # ---- conv1: single im2col matmul (K = 9*Cp) on the MXU, f32 accumulate ----
  patches1 = jnp.concatenate(
      [xb[di:di + H, dj:dj + W, :] for (di, dj) in _TAPS], axis=-1)
  patches1 = patches1.reshape(H * W, 9 * Cp)
  acc1 = jnp.dot(patches1, w1_ref[...], preferred_element_type=jnp.float32)

  # ---- bn1 + relu (f32), written into the padded VMEM scratch ----
  # Zero the whole scratch every step (a few dozen vst's, negligible). This
  # also stays correct if the batch grid axis gets sharded across TensorCores,
  # where a "zero only on program_id==0" pl.when would leave one core's halo
  # uninitialized.
  hp_ref[...] = jnp.zeros_like(hp_ref)
  h = jnp.maximum(acc1 * s1_ref[...] + b1_ref[...], 0.0)
  hp_ref[1:H + 1, 1:W + 1, :] = h.reshape(H, W, Cp)

  # ---- conv2: same single-dot im2col form, reading the scratch ----
  hb = hp_ref[...].astype(jnp.bfloat16)                   # one cast, reused 9x
  patches2 = jnp.concatenate(
      [hb[di:di + H, dj:dj + W, :] for (di, dj) in _TAPS], axis=-1)
  patches2 = patches2.reshape(H * W, 9 * Cp)
  acc2 = jnp.dot(patches2, w2_ref[...], preferred_element_type=jnp.float32)

  # ---- bn2 + residual add + relu (all f32) ----
  identity = xp[1:H + 1, 1:W + 1, :].reshape(H * W, Cp)
  o = jnp.maximum(acc2 * s2_ref[...] + b2_ref[...] + identity, 0.0)
  out_ref[0] = o.reshape(H, W, Cp).astype(out_ref.dtype)


def basic_block_forward(x_nhwc, params, *, eps=1e-5):
  """x_nhwc: (N, H, W, C) float32. Returns (N, H, W, C)."""
  N, H, W, C = x_nhwc.shape
  Cp = max(128, ((C + 127) // 128) * 128)      # lane-dense channel padding

  # Spatial zero-pad (conv padding=1) + channel pad to Cp, done once here.
  xp = jnp.pad(x_nhwc, ((0, 0), (1, 1), (1, 1), (0, Cp - C)))

  # Fold inference-mode BN into per-channel scale/bias (padded lanes -> 0).
  def fold_bn(gamma, beta, mean, var):
    scale = gamma / jnp.sqrt(var + eps)
    bias = beta - mean * scale
    return (jnp.pad(scale, (0, Cp - C)).reshape(1, Cp),
            jnp.pad(bias, (0, Cp - C)).reshape(1, Cp))

  s1, b1 = fold_bn(params["g1"], params["be1"], params["m1"], params["v1"])
  s2, b2 = fold_bn(params["g2"], params["be2"], params["m2"], params["v2"])

  # Conv weights: (Cout, Cin, 3, 3) -> (3, 3, Cin_p, Cout_p) -> (9*Cp, Cp),
  # taps stacked row-major so tap t occupies rows [t*Cp, (t+1)*Cp). bf16.
  def repack(w):
    cout, cin = w.shape[0], w.shape[1]
    wt = jnp.transpose(w, (2, 3, 1, 0))
    wt = jnp.pad(wt, ((0, 0), (0, 0), (0, Cp - cin), (0, Cp - cout)))
    return wt.reshape(9 * Cp, Cp).astype(jnp.bfloat16)

  w1 = repack(params["w1"])
  w2 = repack(params["w2"])

  out_p = pl.pallas_call(
      _basic_block_kernel,
      out_shape=jax.ShapeDtypeStruct((N, H, W, Cp), x_nhwc.dtype),
      grid_spec=pltpu.PrefetchScalarGridSpec(
          num_scalar_prefetch=0,
          grid=(N,),
          in_specs=[
              pl.BlockSpec((1, H + 2, W + 2, Cp), lambda n: (n, 0, 0, 0)),
              pl.BlockSpec((9 * Cp, Cp), lambda n: (0, 0)),
              pl.BlockSpec((1, Cp), lambda n: (0, 0)),
              pl.BlockSpec((1, Cp), lambda n: (0, 0)),
              pl.BlockSpec((9 * Cp, Cp), lambda n: (0, 0)),
              pl.BlockSpec((1, Cp), lambda n: (0, 0)),
              pl.BlockSpec((1, Cp), lambda n: (0, 0)),
          ],
          out_specs=pl.BlockSpec((1, H, W, Cp), lambda n: (n, 0, 0, 0)),
          scratch_shapes=[pltpu.VMEM((H + 2, W + 2, Cp), jnp.float32)],
      ),
      compiler_params=pltpu.CompilerParams(
          dimension_semantics=("parallel",)),
  )(xp, w1, s1, b1, w2, s2, b2)

  return out_p[..., :C]


def basic_block_reference(x_nhwc, params, *, eps=1e-5, conv_dtype=jnp.float32):
  """Pure-JAX reference (NHWC). conv_dtype=bf16 gives the matched-precision
  version (bf16 conv operands, f32 accumulation), mirroring the kernel."""
  dn = ("NHWC", "OIHW", "NHWC")

  def conv(h, w):
    return lax.conv_general_dilated(
        h.astype(conv_dtype), w.astype(conv_dtype),
        window_strides=(1, 1), padding=((1, 1), (1, 1)),
        dimension_numbers=dn, preferred_element_type=jnp.float32)

  def bn(h, g, b, m, v):
    return (h - m) / jnp.sqrt(v + eps) * g + b

  out = conv(x_nhwc, params["w1"])
  out = bn(out, params["g1"], params["be1"], params["m1"], params["v1"])
  out = jax.nn.relu(out)
  out = conv(out, params["w2"])
  out = bn(out, params["g2"], params["be2"], params["m2"], params["v2"])
  out = out + x_nhwc
  return jax.nn.relu(out)


def init_params(key, channels):
  ks = jax.random.split(key, 10)
  C = channels
  return {
      "w1": 0.1 * jax.random.normal(ks[0], (C, C, 3, 3), jnp.float32),
      "w2": 0.1 * jax.random.normal(ks[1], (C, C, 3, 3), jnp.float32),
      "g1": 1.0 + 0.1 * jax.random.normal(ks[2], (C,), jnp.float32),
      "be1": 0.1 * jax.random.normal(ks[3], (C,), jnp.float32),
      "m1": 0.05 * jax.random.normal(ks[4], (C,), jnp.float32),
      "v1": 0.5 + jnp.abs(jax.random.normal(ks[5], (C,), jnp.float32)) * 0.1,
      "g2": 1.0 + 0.1 * jax.random.normal(ks[6], (C,), jnp.float32),
      "be2": 0.1 * jax.random.normal(ks[7], (C,), jnp.float32),
      "m2": 0.05 * jax.random.normal(ks[8], (C,), jnp.float32),
      "v2": 0.5 + jnp.abs(jax.random.normal(ks[9], (C,), jnp.float32)) * 0.1,
  }


if __name__ == "__main__":
  key = jax.random.PRNGKey(0)
  k_x, k_p = jax.random.split(key)

  N, C, H, W = 2, 8, 16, 16                       # PyTorch-style NCHW sizes
  x_nchw = jax.random.normal(k_x, (N, C, H, W), jnp.float32)
  x_nhwc = jnp.transpose(x_nchw, (0, 2, 3, 1))    # kernel layout: NHWC

  params = init_params(k_p, C)

  out = jax.block_until_ready(basic_block_forward(x_nhwc, params))
  assert out.shape == (N, H, W, C)

  # Matched-precision reference (bf16 conv operands, f32 accumulation): tight.
  ref_bf16 = jax.block_until_ready(
      basic_block_reference(x_nhwc, params, conv_dtype=jnp.bfloat16))
  err_bf16 = float(jnp.max(jnp.abs(out - ref_bf16)))
  assert err_bf16 < 1e-3, f"mismatch vs matched-precision reference: {err_bf16}"

  # Full-f32 reference: loose tolerance only accounts for bf16 operand rounding.
  ref_f32 = jax.block_until_ready(basic_block_reference(x_nhwc, params))
  err_f32 = float(jnp.max(jnp.abs(out - ref_f32)))
  assert err_f32 < 5e-2, f"mismatch vs f32 reference: {err_f32}"

  print("KERNEL_OK")
</pallas_src>

<mosaic_0001>
module attributes {stable_mosaic.version = 11 : i64} {
  func.func @_basic_block_kernel(%arg0: i32, %arg1: memref<1x18x18x128xf32, #tpu.memory_space<vmem>>, %arg2: memref<1152x128xbf16, #tpu.memory_space<vmem>>, %arg3: memref<1x128xf32, #tpu.memory_space<vmem>>, %arg4: memref<1x128xf32, #tpu.memory_space<vmem>>, %arg5: memref<1152x128xbf16, #tpu.memory_space<vmem>>, %arg6: memref<1x128xf32, #tpu.memory_space<vmem>>, %arg7: memref<1x128xf32, #tpu.memory_space<vmem>>, %arg8: memref<1x16x16x128xf32, #tpu.memory_space<vmem>>, %arg9: memref<18x18x128xf32, #tpu.memory_space<vmem>>) attributes {dimension_semantics = [#tpu.dimension_semantics<parallel>], iteration_bounds = array<i64: 2>, scalar_prefetch = 0 : i64, scratch_operands = 1 : i64, tpu.core_type = #tpu.core_type<tc>, window_params = [{transform_indices = @transform_0, window_bounds = array<i64: 1, 18, 18, 128>}, {pipeline_mode = #tpu.pipeline_mode<synchronous>, transform_indices = @transform_1, window_bounds = array<i64: 1152, 128>}, {pipeline_mode = #tpu.pipeline_mode<synchronous>, transform_indices = @transform_2, window_bounds = array<i64: 1, 128>}, {pipeline_mode = #tpu.pipeline_mode<synchronous>, transform_indices = @transform_3, window_bounds = array<i64: 1, 128>}, {pipeline_mode = #tpu.pipeline_mode<synchronous>, transform_indices = @transform_4, window_bounds = array<i64: 1152, 128>}, {pipeline_mode = #tpu.pipeline_mode<synchronous>, transform_indices = @transform_5, window_bounds = array<i64: 1, 128>}, {pipeline_mode = #tpu.pipeline_mode<synchronous>, transform_indices = @transform_6, window_bounds = array<i64: 1, 128>}, {transform_indices = @transform_7, window_bounds = array<i64: 1, 16, 16, 128>}]} {
    %c0 = arith.constant 0 : index
    %c0_0 = arith.constant 0 : index
    %c0_1 = arith.constant 0 : index
    %c0_2 = arith.constant 0 : index
    %0 = vector.load %arg1[%c0, %c0_0, %c0_1, %c0_2] : memref<1x18x18x128xf32, #tpu.memory_space<vmem>>, vector<1x18x18x128xf32>
    %1 = vector.shape_cast %0 : vector<1x18x18x128xf32> to vector<18x18x128xf32>
    %2 = arith.truncf %1 : vector<18x18x128xf32> to vector<18x18x128xbf16>
    %3 = vector.extract_strided_slice %2 {offsets = [0, 0, 0], sizes = [16, 16, 128], strides = [1, 1, 1]} : vector<18x18x128xbf16> to vector<16x16x128xbf16>
    %4 = vector.extract_strided_slice %2 {offsets = [0, 1, 0], sizes = [16, 16, 128], strides = [1, 1, 1]} : vector<18x18x128xbf16> to vector<16x16x128xbf16>
    %5 = vector.extract_strided_slice %2 {offsets = [0, 2, 0], sizes = [16, 16, 128], strides = [1, 1, 1]} : vector<18x18x128xbf16> to vector<16x16x128xbf16>
    %6 = vector.extract_strided_slice %2 {offsets = [1, 0, 0], sizes = [16, 16, 128], strides = [1, 1, 1]} : vector<18x18x128xbf16> to vector<16x16x128xbf16>
    %7 = vector.extract_strided_slice %2 {offsets = [1, 1, 0], sizes = [16, 16, 128], strides = [1, 1, 1]} : vector<18x18x128xbf16> to vector<16x16x128xbf16>
    %8 = vector.extract_strided_slice %2 {offsets = [1, 2, 0], sizes = [16, 16, 128], strides = [1, 1, 1]} : vector<18x18x128xbf16> to vector<16x16x128xbf16>
    %9 = vector.extract_strided_slice %2 {offsets = [2, 0, 0], sizes = [16, 16, 128], strides = [1, 1, 1]} : vector<18x18x128xbf16> to vector<16x16x128xbf16>
    %10 = vector.extract_strided_slice %2 {offsets = [2, 1, 0], sizes = [16, 16, 128], strides = [1, 1, 1]} : vector<18x18x128xbf16> to vector<16x16x128xbf16>
    %11 = vector.extract_strided_slice %2 {offsets = [2, 2, 0], sizes = [16, 16, 128], strides = [1, 1, 1]} : vector<18x18x128xbf16> to vector<16x16x128xbf16>
    %12 = tpu.concatenate %3, %4, %5, %6, %7, %8, %9, %10, %11 in 2 : vector<16x16x128xbf16>, vector<16x16x128xbf16>, vector<16x16x128xbf16>, vector<16x16x128xbf16>, vector<16x16x128xbf16>, vector<16x16x128xbf16>, vector<16x16x128xbf16>, vector<16x16x128xbf16>, vector<16x16x128xbf16> -> vector<16x16x1152xbf16>
    %13 = vector.shape_cast %12 : vector<16x16x1152xbf16> to vector<256x1152xbf16>
    %c0_3 = arith.constant 0 : index
    %c0_4 = arith.constant 0 : index
    %14 = vector.load %arg2[%c0_3, %c0_4] : memref<1152x128xbf16, #tpu.memory_space<vmem>>, vector<1152x128xbf16>
    %cst = arith.constant dense<0.000000e+00> : vector<256x128xf32>
    %15 = tpu.matmul %13, %14, %cst {dimension_numbers = #tpu.dot_dimension_numbers<[1], [0], [0], [1], [0, 0, 1, 1], [], []>} : vector<256x1152xbf16>, vector<1152x128xbf16>, vector<256x128xf32> -> vector<256x128xf32>
    %cst_5 = arith.constant 0.000000e+00 : f32
    %16 = vector.broadcast %cst_5 : f32 to vector<18x18x128xf32>
    %c0_6 = arith.constant 0 : index
    %c0_7 = arith.constant 0 : index
    %c0_8 = arith.constant 0 : index
    %17 = vector.load %arg9[%c0_6, %c0_7, %c0_8] : memref<18x18x128xf32, #tpu.memory_space<vmem>>, vector<18x18x128xf32>
    tpu.vector_store %arg9[%c0_6, %c0_7, %c0_8], %16 {strides = array<i32>} : memref<18x18x128xf32, #tpu.memory_space<vmem>>, vector<18x18x128xf32>,
    %c0_9 = arith.constant 0 : index
    %c0_10 = arith.constant 0 : index
    %18 = vector.load %arg3[%c0_9, %c0_10] : memref<1x128xf32, #tpu.memory_space<vmem>>, vector<1x128xf32>
    %19 = vector.broadcast %18 : vector<1x128xf32> to vector<256x128xf32>
    %20 = arith.mulf %15, %19 : vector<256x128xf32>
    %c0_11 = arith.constant 0 : index
    %c0_12 = arith.constant 0 : index
    %21 = vector.load %arg4[%c0_11, %c0_12] : memref<1x128xf32, #tpu.memory_space<vmem>>, vector<1x128xf32>
    %22 = vector.broadcast %21 : vector<1x128xf32> to vector<256x128xf32>
    %23 = arith.addf %20, %22 : vector<256x128xf32>
    %cst_13 = arith.constant 0.000000e+00 : f32
    %24 = vector.broadcast %cst_13 : f32 to vector<256x128xf32>
    %25 = arith.maximumf %23, %24 : vector<256x128xf32>
    %26 = vector.shape_cast %25 : vector<256x128xf32> to vector<16x16x128xf32>
    %c1 = arith.constant 1 : index
    %c1_14 = arith.constant 1 : index
    %c0_15 = arith.constant 0 : index
    %27 = vector.load %arg9[%c1, %c1_14, %c0_15] : memref<18x18x128xf32, #tpu.memory_space<vmem>>, vector<16x16x128xf32>
    tpu.vector_store %arg9[%c1, %c1_14, %c0_15], %26 {strides = array<i32>} : memref<18x18x128xf32, #tpu.memory_space<vmem>>, vector<16x16x128xf32>,
    %c0_16 = arith.constant 0 : index
    %c0_17 = arith.constant 0 : index
    %c0_18 = arith.constant 0 : index
    %28 = vector.load %arg9[%c0_16, %c0_17, %c0_18] : memref<18x18x128xf32, #tpu.memory_space<vmem>>, vector<18x18x128xf32>
    %29 = arith.truncf %28 : vector<18x18x128xf32> to vector<18x18x128xbf16>
    %30 = vector.extract_strided_slice %29 {offsets = [0, 0, 0], sizes = [16, 16, 128], strides = [1, 1, 1]} : vector<18x18x128xbf16> to vector<16x16x128xbf16>
    %31 = vector.extract_strided_slice %29 {offsets = [0, 1, 0], sizes = [16, 16, 128], strides = [1, 1, 1]} : vector<18x18x128xbf16> to vector<16x16x128xbf16>
    %32 = vector.extract_strided_slice %29 {offsets = [0, 2, 0], sizes = [16, 16, 128], strides = [1, 1, 1]} : vector<18x18x128xbf16> to vector<16x16x128xbf16>
    %33 = vector.extract_strided_slice %29 {offsets = [1, 0, 0], sizes = [16, 16, 128], strides = [1, 1, 1]} : vector<18x18x128xbf16> to vector<16x16x128xbf16>
    %34 = vector.extract_strided_slice %29 {offsets = [1, 1, 0], sizes = [16, 16, 128], strides = [1, 1, 1]} : vector<18x18x128xbf16> to vector<16x16x128xbf16>
    %35 = vector.extract_strided_slice %29 {offsets = [1, 2, 0], sizes = [16, 16, 128], strides = [1, 1, 1]} : vector<18x18x128xbf16> to vector<16x16x128xbf16>
    %36 = vector.extract_strided_slice %29 {offsets = [2, 0, 0], sizes = [16, 16, 128], strides = [1, 1, 1]} : vector<18x18x128xbf16> to vector<16x16x128xbf16>
    %37 = vector.extract_strided_slice %29 {offsets = [2, 1, 0], sizes = [16, 16, 128], strides = [1, 1, 1]} : vector<18x18x128xbf16> to vector<16x16x128xbf16>
    %38 = vector.extract_strided_slice %29 {offsets = [2, 2, 0], sizes = [16, 16, 128], strides = [1, 1, 1]} : vector<18x18x128xbf16> to vector<16x16x128xbf16>
    %39 = tpu.concatenate %30, %31, %32, %33, %34, %35, %36, %37, %38 in 2 : vector<16x16x128xbf16>, vector<16x16x128xbf16>, vector<16x16x128xbf16>, vector<16x16x128xbf16>, vector<16x16x128xbf16>, vector<16x16x128xbf16>, vector<16x16x128xbf16>, vector<16x16x128xbf16>, vector<16x16x128xbf16> -> vector<16x16x1152xbf16>
    %40 = vector.shape_cast %39 : vector<16x16x1152xbf16> to vector<256x1152xbf16>
    %c0_19 = arith.constant 0 : index
    %c0_20 = arith.constant 0 : index
    %41 = vector.load %arg5[%c0_19, %c0_20] : memref<1152x128xbf16, #tpu.memory_space<vmem>>, vector<1152x128xbf16>
    %cst_21 = arith.constant dense<0.000000e+00> : vector<256x128xf32>
    %42 = tpu.matmul %40, %41, %cst_21 {dimension_numbers = #tpu.dot_dimension_numbers<[1], [0], [0], [1], [0, 0, 1, 1], [], []>} : vector<256x1152xbf16>, vector<1152x128xbf16>, vector<256x128xf32> -> vector<256x128xf32>
    %43 = vector.extract_strided_slice %1 {offsets = [1, 1, 0], sizes = [16, 16, 128], strides = [1, 1, 1]} : vector<18x18x128xf32> to vector<16x16x128xf32>
    %44 = vector.shape_cast %43 : vector<16x16x128xf32> to vector<256x128xf32>
    %c0_22 = arith.constant 0 : index
    %c0_23 = arith.constant 0 : index
    %45 = vector.load %arg6[%c0_22, %c0_23] : memref<1x128xf32, #tpu.memory_space<vmem>>, vector<1x128xf32>
    %46 = vector.broadcast %45 : vector<1x128xf32> to vector<256x128xf32>
    %47 = arith.mulf %42, %46 : vector<256x128xf32>
    %c0_24 = arith.constant 0 : index
    %c0_25 = arith.constant 0 : index
    %48 = vector.load %arg7[%c0_24, %c0_25] : memref<1x128xf32, #tpu.memory_space<vmem>>, vector<1x128xf32>
    %49 = vector.broadcast %48 : vector<1x128xf32> to vector<256x128xf32>
    %50 = arith.addf %47, %49 : vector<256x128xf32>
    %51 = arith.addf %50, %44 : vector<256x128xf32>
    %cst_26 = arith.constant 0.000000e+00 : f32
    %52 = vector.broadcast %cst_26 : f32 to vector<256x128xf32>
    %53 = arith.maximumf %51, %52 : vector<256x128xf32>
    %54 = vector.shape_cast %53 : vector<256x128xf32> to vector<16x16x128xf32>
    %c0_27 = arith.constant 0 : index
    %c0_28 = arith.constant 0 : index
    %c0_29 = arith.constant 0 : index
    %c0_30 = arith.constant 0 : index
    %55 = vector.load %arg8[%c0_27, %c0_28, %c0_29, %c0_30] : memref<1x16x16x128xf32, #tpu.memory_space<vmem>>, vector<1x16x16x128xf32>
    %56 = vector.shape_cast %55 : vector<1x16x16x128xf32> to vector<16x16x128xf32>
    %57 = vector.shape_cast %54 : vector<16x16x128xf32> to vector<1x16x16x128xf32>
    tpu.vector_store %arg8[%c0_27, %c0_28, %c0_29, %c0_30], %57 {strides = array<i32>} : memref<1x16x16x128xf32, #tpu.memory_space<vmem>>, vector<1x16x16x128xf32>,
    return
  }
  func.func @transform_0(%arg0: i32) -> (i32, i32, i32, i32) {
    %c0_i32 = arith.constant 0 : i32
    %c0_i32_0 = arith.constant 0 : i32
    %c0_i32_1 = arith.constant 0 : i32
    %c0_i32_2 = arith.constant 0 : i32
    return %arg0, %c0_i32, %c0_i32_0, %c0_i32_1 : i32, i32, i32, i32
  }
  func.func @transform_1(%arg0: i32) -> (i32, i32) {
    %c0_i32 = arith.constant 0 : i32
    %c0_i32_0 = arith.constant 0 : i32
    %c0_i32_1 = arith.constant 0 : i32
    return %c0_i32, %c0_i32_0 : i32, i32
  }
  func.func @transform_2(%arg0: i32) -> (i32, i32) {
    %c0_i32 = arith.constant 0 : i32
    %c0_i32_0 = arith.constant 0 : i32
    %c0_i32_1 = arith.constant 0 : i32
    return %c0_i32, %c0_i32_0 : i32, i32
  }
  func.func @transform_3(%arg0: i32) -> (i32, i32) {
    %c0_i32 = arith.constant 0 : i32
    %c0_i32_0 = arith.constant 0 : i32
    %c0_i32_1 = arith.constant 0 : i32
    return %c0_i32, %c0_i32_0 : i32, i32
  }
  func.func @transform_4(%arg0: i32) -> (i32, i32) {
    %c0_i32 = arith.constant 0 : i32
    %c0_i32_0 = arith.constant 0 : i32
    %c0_i32_1 = arith.constant 0 : i32
    return %c0_i32, %c0_i32_0 : i32, i32
  }
  func.func @transform_5(%arg0: i32) -> (i32, i32) {
    %c0_i32 = arith.constant 0 : i32
    %c0_i32_0 = arith.constant 0 : i32
    %c0_i32_1 = arith.constant 0 : i32
    return %c0_i32, %c0_i32_0 : i32, i32
  }
  func.func @transform_6(%arg0: i32) -> (i32, i32) {
    %c0_i32 = arith.constant 0 : i32
    %c0_i32_0 = arith.constant 0 : i32
    %c0_i32_1 = arith.constant 0 : i32
    return %c0_i32, %c0_i32_0 : i32, i32
  }
  func.func @transform_7(%arg0: i32) -> (i32, i32, i32, i32) {
    %c0_i32 = arith.constant 0 : i32
    %c0_i32_0 = arith.constant 0 : i32
    %c0_i32_1 = arith.constant 0 : i32
    %c0_i32_2 = arith.constant 0 : i32
    return %arg0, %c0_i32, %c0_i32_0, %c0_i32_1 : i32, i32, i32, i32
  }
}

</mosaic_0001>

<llo_original>
// kernel: tpu_custom_call.1
$region0: #{tpu_custom_call.1}
  #allocation0 [shape = 'u32[]', space=smem, size = 0x4, offset = 0x4, fixed_abs, tag = 'smem constant byte address 0x4 - core index']
  #allocation1 [shape = 'u32[144,128]{1,0:T(1,128)}', space=vmem, size = 0x12000, scoped, tag = 'internal scratch']
  #allocation2 [shape = 'f32[18,18,128]{2,1,0:T(8,128)}', space=vmem, size = 0x36000, scoped, tag = 'scratch operand']
  %s0 = inlined_call_operand.vmem [shape: f32[2,18,18,128], index: 0, kind: input, shape index: {}]
  %s1 = inlined_call_operand.vmem [shape: bf16[1152,128], index: 1, kind: input, shape index: {}]
  %s2 = inlined_call_operand.vmem [shape: f32[1,128], index: 2, kind: input, shape index: {}]
  %s3 = inlined_call_operand.vmem [shape: f32[1,128], index: 3, kind: input, shape index: {}]
  %s4 = inlined_call_operand.vmem [shape: bf16[1152,128], index: 4, kind: input, shape index: {}]
  %s5 = inlined_call_operand.vmem [shape: f32[1,128], index: 5, kind: input, shape index: {}]
  %s6 = inlined_call_operand.vmem [shape: f32[1,128], index: 6, kind: input, shape index: {}]
  %s7 = inlined_call_operand.hbm [shape: f32[2,16,16,128], index: 7, kind: output, shape index: {}]
  %s8 = sld [smem:[#allocation0]]
  $region61: #{tpu_custom_call.1} parent=0
    _
  %s10 = ssub.s32 1, %s8
  %s11 = scalar_select 0, %s10, %s8
  $region1: #{tpu_custom_call.1} parent=0
    #allocation3 [shape = 'u8[262144]{0}', space=vmem, size = 0x40000, scoped, tag = 'output window, operand 0']
    #allocation4 [shape = 's32[2]{0}', space=sflag, size = 0x8, scoped, tag = 'scoped memory for tpu_custom_call.1']
    %12 = vsyncpa [#allocation4], 0
    %s13 = scalar_lea.sflag [#allocation4], 1
    %14 = vsyncpa %s13, 0
    loop: start=0, step=1, limit=4
    $region2: #{tpu_custom_call.1} parent=1 // loop_pre_header
      _
    $region3: #{tpu_custom_call.1} parent=1 // loop_header
      %s16 = sphi 0, %s20
      %p17 = scmp.ge.s32.totalorder %s16, 4
      %s26 = sphi 0, %s28
      %s29 = sphi 0, %s26
      %s30 = sphi 0, %s29
      %s46 = sphi 0, %s30
      %s50 = sphi 0, %s50
      %s52 = sphi 0, %s50
      %s53 = sphi 0, %s52
      %s67 = sphi 0, %s53
      %s71 = sphi 0, %s71
      %s73 = sphi 0, %s71
      %s74 = sphi 0, %s73
      %s88 = sphi 0, %s74
      %s92 = sphi 0, %s92
      %s94 = sphi 0, %s92
      %s95 = sphi 0, %s94
      %s109 = sphi 0, %s95
      %s113 = sphi 0, %s113
      %s115 = sphi 0, %s113
      %s116 = sphi 0, %s115
      %s130 = sphi 0, %s116
      %s134 = sphi 0, %s134
      %s136 = sphi 0, %s134
      %s137 = sphi 0, %s136
      %s151 = sphi 0, %s137
      %s155 = sphi 0, %s155
      %s157 = sphi 0, %s155
      %s158 = sphi 0, %s157
      %s172 = sphi 0, %s158
      %s178 = sphi 0, %s180
      %s181 = sphi 0, %s178
      %s182 = sphi 0, %s181
      %s198 = sphi 0, %s182
    $region4: #{tpu_custom_call.1} parent=1 // loop_header_branch
      %19 = sbr.rel (%p17) target = $region8
    $region5: #{tpu_custom_call.1} parent=1 // loop_body
      %s21 = ssub.s32 %s16, 1
      %s22 = ssub.s32 %s16, 2
      %s23 = sadd.s32 %s16, 1
      %s24 = ssub.s32 %s16, %s23
      %p25 = scmp.eq.s32.totalorder %s24, 0
      %s27 = sadd.s32 %s26, 1
      %s28 = scalar_select %p25, %s26, %s27
      %p31 = pneg %p25
      %p32 = scmp.eq.s32.totalorder %s16, 1
      %p33 = por %p31, %p32
      %p34 = scmp.ne.s32.totalorder %s26, %s29
      %p35 = scmp.eq.s32.totalorder %s16, 0
      %p36 = por %p34, %p35
      %p37 = scmp.ne.s32.totalorder %s26, %s29
      %p38 = scmp.eq.s32.totalorder %s21, 1
      %p39 = por %p37, %p38
      %p40 = scmp.ne.s32.totalorder %s29, %s30
      %p41 = scmp.eq.s32.totalorder %s21, 0
      %p42 = por %p40, %p41
      %p43 = scmp.ne.s32.totalorder %s29, %s30
      %p44 = scmp.eq.s32.totalorder %s22, 1
      %p45 = por %p43, %p44
      %p47 = scmp.ne.s32.totalorder %s30, %s46
      %p48 = scmp.eq.s32.totalorder %s22, 0
      %p49 = por %p47, %p48
      %s51 = sadd.s32 %s50, 1
      %p54 = scmp.eq.s32.totalorder %s16, 1
      %p55 = scmp.ne.s32.totalorder %s50, %s52
      %p56 = scmp.eq.s32.totalorder %s16, 0
      %p57 = por %p55, %p56
      %p58 = scmp.ne.s32.totalorder %s50, %s52
      %p59 = scmp.eq.s32.totalorder %s21, 1
      %p60 = por %p58, %p59
      %p61 = scmp.ne.s32.totalorder %s52, %s53
      %p62 = scmp.eq.s32.totalorder %s21, 0
      %p63 = por %p61, %p62
      %p64 = scmp.ne.s32.totalorder %s52, %s53
      %p65 = scmp.eq.s32.totalorder %s22, 1
      %p66 = por %p64, %p65
      %p68 = scmp.ne.s32.totalorder %s53, %s67
      %p69 = scmp.eq.s32.totalorder %s22, 0
      %p70 = por %p68, %p69
      %s72 = sadd.s32 %s71, 1
      %p75 = scmp.eq.s32.totalorder %s16, 1
      %p76 = scmp.ne.s32.totalorder %s71, %s73
      %p77 = scmp.eq.s32.totalorder %s16, 0
      %p78 = por %p76, %p77
      %p79 = scmp.ne.s32.totalorder %s71, %s73
      %p80 = scmp.eq.s32.totalorder %s21, 1
      %p81 = por %p79, %p80
      %p82 = scmp.ne.s32.totalorder %s73, %s74
      %p83 = scmp.eq.s32.totalorder %s21, 0
      %p84 = por %p82, %p83
      %p85 = scmp.ne.s32.totalorder %s73, %s74
      %p86 = scmp.eq.s32.totalorder %s22, 1
      %p87 = por %p85, %p86
      %p89 = scmp.ne.s32.totalorder %s74, %s88
      %p90 = scmp.eq.s32.totalorder %s22, 0
      %p91 = por %p89, %p90
      %s93 = sadd.s32 %s92, 1
      %p96 = scmp.eq.s32.totalorder %s16, 1
      %p97 = scmp.ne.s32.totalorder %s92, %s94
      %p98 = scmp.eq.s32.totalorder %s16, 0
      %p99 = por %p97, %p98
      %p100 = scmp.ne.s32.totalorder %s92, %s94
      %p101 = scmp.eq.s32.totalorder %s21, 1
      %p102 = por %p100, %p101
      %p103 = scmp.ne.s32.totalorder %s94, %s95
      %p104 = scmp.eq.s32.totalorder %s21, 0
      %p105 = por %p103, %p104
      %p106 = scmp.ne.s32.totalorder %s94, %s95
      %p107 = scmp.eq.s32.totalorder %s22, 1
      %p108 = por %p106, %p107
      %p110 = scmp.ne.s32.totalorder %s95, %s109
      %p111 = scmp.eq.s32.totalorder %s22, 0
      %p112 = por %p110, %p111
      %s114 = sadd.s32 %s113, 1
      %p117 = scmp.eq.s32.totalorder %s16, 1
      %p118 = scmp.ne.s32.totalorder %s113, %s115
      %p119 = scmp.eq.s32.totalorder %s16, 0
      %p120 = por %p118, %p119
      %p121 = scmp.ne.s32.totalorder %s113, %s115
      %p122 = scmp.eq.s32.totalorder %s21, 1
      %p123 = por %p121, %p122
      %p124 = scmp.ne.s32.totalorder %s115, %s116
      %p125 = scmp.eq.s32.totalorder %s21, 0
      %p126 = por %p124, %p125
      %p127 = scmp.ne.s32.totalorder %s115, %s116
      %p128 = scmp.eq.s32.totalorder %s22, 1
      %p129 = por %p127, %p128
      %p131 = scmp.ne.s32.totalorder %s116, %s130
      %p132 = scmp.eq.s32.totalorder %s22, 0
      %p133 = por %p131, %p132
      %s135 = sadd.s32 %s134, 1
      %p138 = scmp.eq.s32.totalorder %s16, 1
      %p139 = scmp.ne.s32.totalorder %s134, %s136
      %p140 = scmp.eq.s32.totalorder %s16, 0
      %p141 = por %p139, %p140
      %p142 = scmp.ne.s32.totalorder %s134, %s136
      %p143 = scmp.eq.s32.totalorder %s21, 1
      %p144 = por %p142, %p143
      %p145 = scmp.ne.s32.totalorder %s136, %s137
      %p146 = scmp.eq.s32.totalorder %s21, 0
      %p147 = por %p145, %p146
      %p148 = scmp.ne.s32.totalorder %s136, %s137
      %p149 = scmp.eq.s32.totalorder %s22, 1
      %p150 = por %p148, %p149
      %p152 = scmp.ne.s32.totalorder %s137, %s151
      %p153 = scmp.eq.s32.totalorder %s22, 0
      %p154 = por %p152, %p153
      %s156 = sadd.s32 %s155, 1
      %p159 = scmp.eq.s32.totalorder %s16, 1
      %p160 = scmp.ne.s32.totalorder %s155, %s157
      %p161 = scmp.eq.s32.totalorder %s16, 0
      %p162 = por %p160, %p161
      %p163 = scmp.ne.s32.totalorder %s155, %s157
      %p164 = scmp.eq.s32.totalorder %s21, 1
      %p165 = por %p163, %p164
      %p166 = scmp.ne.s32.totalorder %s157, %s158
      %p167 = scmp.eq.s32.totalorder %s21, 0
      %p168 = por %p166, %p167
      %p169 = scmp.ne.s32.totalorder %s157, %s158
      %p170 = scmp.eq.s32.totalorder %s22, 1
      %p171 = por %p169, %p170
      %p173 = scmp.ne.s32.totalorder %s158, %s172
      %p174 = scmp.eq.s32.totalorder %s22, 0
      %p175 = por %p173, %p174
      %s176 = ssub.s32 %s16, %s23
      %p177 = scmp.eq.s32.totalorder %s176, 0
      %s179 = sadd.s32 %s178, 1
      %s180 = scalar_select %p177, %s178, %s179
      %p183 = pneg %p177
      %p184 = scmp.eq.s32.totalorder %s16, 1
      %p185 = por %p183, %p184
      %p186 = scmp.ne.s32.totalorder %s178, %s181
      %p187 = scmp.eq.s32.totalorder %s16, 0
      %p188 = por %p186, %p187
      %p189 = scmp.ne.s32.totalorder %s178, %s181
      %p190 = scmp.eq.s32.totalorder %s21, 1
      %p191 = por %p189, %p190
      %p192 = scmp.ne.s32.totalorder %s181, %s182
      %p193 = scmp.eq.s32.totalorder %s21, 0
      %p194 = por %p192, %p193
      %p195 = scmp.ne.s32.totalorder %s181, %s182
      %p196 = scmp.eq.s32.totalorder %s22, 1
      %p197 = por %p195, %p196
      %p199 = scmp.ne.s32.totalorder %s182, %s198
      %p200 = scmp.eq.s32.totalorder %s22, 0
      %p201 = por %p199, %p200
      %p202 = scmp.le.s32.totalorder 1, %s16
      %p203 = scmp.lt.s32.totalorder %s16, 3
      %p204 = pnand %p202, %p203
      %p205 = pneg %p204
      // Predicated region
      $region9: #{tpu_custom_call.1} parent=5 // pred_check
        _
      $region10: #{tpu_custom_call.1} parent=5 // pred_check_branch
        %207 = sbr.rel (%p204) target = $region12
      $region11: #{tpu_custom_call.1} parent=5 // pred_region
        %s208 = ssub.s32 %s16, 1
        // Predicated region
        $region13: #{tpu_custom_call.1} parent=11 // pred_check
          %p209 = pneg %p63
        $region14: #{tpu_custom_call.1} parent=11 // pred_check_branch
          %211 = sbr.rel (%p209) target = $region16
        $region15: #{tpu_custom_call.1} parent=11 // pred_region
          _
        $region16: #{tpu_custom_call.1} parent=11 // pred_fallthru
          _
        // Predicated region
        $region17: #{tpu_custom_call.1} parent=11 // pred_check
          %p212 = pneg %p84
        $region18: #{tpu_custom_call.1} parent=11 // pred_check_branch
          %214 = sbr.rel (%p212) target = $region20
        $region19: #{tpu_custom_call.1} parent=11 // pred_region
          _
        $region20: #{tpu_custom_call.1} parent=11 // pred_fallthru
          _
        // Predicated region
        $region21: #{tpu_custom_call.1} parent=11 // pred_check
          %p215 = pneg %p105
        $region22: #{tpu_custom_call.1} parent=11 // pred_check_branch
          %217 = sbr.rel (%p215) target = $region24
        $region23: #{tpu_custom_call.1} parent=11 // pred_region
          _
        $region24: #{tpu_custom_call.1} parent=11 // pred_fallthru
          _
        // Predicated region
        $region25: #{tpu_custom_call.1} parent=11 // pred_check
          %p218 = pneg %p126
        $region26: #{tpu_custom_call.1} parent=11 // pred_check_branch
          %220 = sbr.rel (%p218) target = $region28
        $region27: #{tpu_custom_call.1} parent=11 // pred_region
          _
        $region28: #{tpu_custom_call.1} parent=11 // pred_fallthru
          _
        // Predicated region
        $region29: #{tpu_custom_call.1} parent=11 // pred_check
          %p221 = pneg %p147
        $region30: #{tpu_custom_call.1} parent=11 // pred_check_branch
          %223 = sbr.rel (%p221) target = $region32
        $region31: #{tpu_custom_call.1} parent=11 // pred_region
          _
        $region32: #{tpu_custom_call.1} parent=11 // pred_fallthru
          _
        // Predicated region
        $region33: #{tpu_custom_call.1} parent=11 // pred_check
          %p224 = pneg %p168
        $region34: #{tpu_custom_call.1} parent=11 // pred_check_branch
          %226 = sbr.rel (%p224) target = $region36
        $region35: #{tpu_custom_call.1} parent=11 // pred_region
          _
        $region36: #{tpu_custom_call.1} parent=11 // pred_fallthru
          _
      $region12: #{tpu_custom_call.1} parent=5 // pred_fallthru
        _
      %p227 = scmp.lt.s32.totalorder %s16, 2
      // Predicated region
      $region37: #{tpu_custom_call.1} parent=5 // pred_check
        %p228 = pneg %p227
      $region38: #{tpu_custom_call.1} parent=5 // pred_check_branch
        %230 = sbr.rel (%p228) target = $region40
      $region39: #{tpu_custom_call.1} parent=5 // pred_region
        // Predicated region
        $region41: #{tpu_custom_call.1} parent=39 // pred_check
          %p231 = pneg %p36
        $region42: #{tpu_custom_call.1} parent=39 // pred_check_branch
          %233 = sbr.rel (%p231) target = $region44
        $region43: #{tpu_custom_call.1} parent=39 // pred_region
          %p234 = scmp.lt.s32.totalorder %s16, 1
          %s235 = scalar_select %p234, %s16, 1
          %s236 = smul.addr %s235, 54
          %s237 = smul.addr %s236, 8
          %s238 = scalar_lea.vmem %s0, %s237
        $region44: #{tpu_custom_call.1} parent=39 // pred_fallthru
          _
      $region40: #{tpu_custom_call.1} parent=5 // pred_fallthru
        _
      %p239 = scmp.le.s32.totalorder 1, %s16
      %p240 = scmp.lt.s32.totalorder %s16, 3
      %p241 = pnand %p239, %p240
      %p242 = pneg %p241
      // Predicated region
      $region45: #{tpu_custom_call.1} parent=5 // pred_check
        _
      $region46: #{tpu_custom_call.1} parent=5 // pred_check_branch
        %244 = sbr.rel (%p241) target = $region48
      $region47: #{tpu_custom_call.1} parent=5 // pred_region
        %s245 = ssub.s32 %s16, 1
        %p246 = scmp.lt.s32.totalorder %s21, 1
        %s247 = scalar_select %p246, %s21, 1
        %s248 = smul.addr %s247, 54
        %s249 = smul.addr %s248, 8
        %s250 = scalar_lea.vmem %s0, %s249
        %p251 = pneg %p42
        %p252 = pneg %p39
        %p253 = pneg %p63
        %p254 = pneg %p60
        %p255 = pneg %p84
        %p256 = pneg %p81
        %p257 = pneg %p105
        %p258 = pneg %p102
        %p259 = pneg %p126
        %p260 = pneg %p123
        %p261 = pneg %p147
        %p262 = pneg %p144
        %p263 = pneg %p168
        %p264 = pneg %p165
        %p265 = pneg %p194
        %p266 = pneg %p191
        %s267 = sand.u32 %s181, 1
        %s268 = scalar_lea.sflag [#allocation4], %s267
        %s269 = sand.u32 %s181, 1
        %s270 = smul.addr %s269, 256
        %s271 = scalar_lea.vmem [#allocation3], %s270
        %p272 = scmp.lt.s32.totalorder %s21, 1
        %s273 = scalar_select %p272, %s21, 1
        %s274 = smul.addr %s273, 54
        %s275 = smul.addr %s274, 8
        %s276 = scalar_lea.vmem %s0, %s275
        %v278 = vld [vmem:[%s276] sm:$0xff]
        %v279 = vld [vmem:[%s276 + $0x8] sm:$0xff]
        %v280 = vld [vmem:[%s276 + $0x10] sm:$0x3]
        %v281 = vld [vmem:[%s276 + $0x18] sm:$0xff]
        %v282 = vld [vmem:[%s276 + $0x20] sm:$0xff]
        %v283 = vld [vmem:[%s276 + $0x28] sm:$0x3]
        %v284 = vld [vmem:[%s276 + $0x30] sm:$0xff]
        %v285 = vld [vmem:[%s276 + $0x38] sm:$0xff]
        %v286 = vld [vmem:[%s276 + $0x40] sm:$0x3]
        %v287 = vld [vmem:[%s276 + $0x48] sm:$0xff]
        %v288 = vld [vmem:[%s276 + $0x50] sm:$0xff]
        %v289 = vld [vmem:[%s276 + $0x58] sm:$0x3]
        %v290 = vld [vmem:[%s276 + $0x60] sm:$0xff]
        %v291 = vld [vmem:[%s276 + $0x68] sm:$0xff]
        %v292 = vld [vmem:[%s276 + $0x70] sm:$0x3]
        %v293 = vld [vmem:[%s276 + $0x78] sm:$0xff]
        %v294 = vld [vmem:[%s276 + $0x80] sm:$0xff]
        %v295 = vld [vmem:[%s276 + $0x88] sm:$0x3]
        %v296 = vld [vmem:[%s276 + $0x90] sm:$0xff]
        %v297 = vld [vmem:[%s276 + $0x98] sm:$0xff]
        %v298 = vld [vmem:[%s276 + $0xa0] sm:$0x3]
        %v299 = vld [vmem:[%s276 + $0xa8] sm:$0xff]
        %v300 = vld [vmem:[%s276 + $0xb0] sm:$0xff]
        %v301 = vld [vmem:[%s276 + $0xb8] sm:$0x3]
        %v302 = vld [vmem:[%s276 + $0xc0] sm:$0xff]
        %v303 = vld [vmem:[%s276 + $0xc8] sm:$0xff]
        %v304 = vld [vmem:[%s276 + $0xd0] sm:$0x3]
        %v305 = vld [vmem:[%s276 + $0xd8] sm:$0xff]
        %v306 = vld [vmem:[%s276 + $0xe0] sm:$0xff]
        %v307 = vld [vmem:[%s276 + $0xe8] sm:$0x3]
        %v308 = vld [vmem:[%s276 + $0xf0] sm:$0xff]
        %v309 = vld [vmem:[%s276 + $0xf8] sm:$0xff]
        %v310 = vld [vmem:[%s276 + $0x100] sm:$0x3]
        %v311 = vld [vmem:[%s276 + $0x108] sm:$0xff]
        %v312 = vld [vmem:[%s276 + $0x110] sm:$0xff]
        %v313 = vld [vmem:[%s276 + $0x118] sm:$0x3]
        %v314 = vld [vmem:[%s276 + $0x120] sm:$0xff]
        %v315 = vld [vmem:[%s276 + $0x128] sm:$0xff]
        %v316 = vld [vmem:[%s276 + $0x130] sm:$0x3]
        %v317 = vld [vmem:[%s276 + $0x138] sm:$0xff]
        %v318 = vld [vmem:[%s276 + $0x140] sm:$0xff]
        %v319 = vld [vmem:[%s276 + $0x148] sm:$0x3]
        %v320 = vld [vmem:[%s276 + $0x150] sm:$0xff]
        %v321 = vld [vmem:[%s276 + $0x158] sm:$0xff]
        %v322 = vld [vmem:[%s276 + $0x160] sm:$0x3]
        %v323 = vld [vmem:[%s276 + $0x168] sm:$0xff]
        %v324 = vld [vmem:[%s276 + $0x170] sm:$0xff]
        %v325 = vld [vmem:[%s276 + $0x178] sm:$0x3]
        %v326 = vld [vmem:[%s276 + $0x180] sm:$0xff]
        %v327 = vld [vmem:[%s276 + $0x188] sm:$0xff]
        %v328 = vld [vmem:[%s276 + $0x190] sm:$0x3]
        %v329 = vld [vmem:[%s276 + $0x198] sm:$0xff]
        %v330 = vld [vmem:[%s276 + $0x1a0] sm:$0xff]
        %v331 = vld [vmem:[%s276 + $0x1a8] sm:$0x3]
        %v332 = vpack.c.bf16 %v279, %v278
        %v333 = vpack.c.bf16 %v280, %v280
        %v334 = vpack.c.bf16 %v282, %v281
        %v335 = vpack.c.bf16 %v283, %v283
        %v336 = vpack.c.bf16 %v285, %v284
        %v337 = vpack.c.bf16 %v286, %v286
        %v338 = vpack.c.bf16 %v288, %v287
        %v339 = vpack.c.bf16 %v289, %v289
        %v340 = vpack.c.bf16 %v291, %v290
        %v341 = vpack.c.bf16 %v292, %v292
        %v342 = vpack.c.bf16 %v294, %v293
        %v343 = vpack.c.bf16 %v295, %v295
        %v344 = vpack.c.bf16 %v297, %v296
        %v345 = vpack.c.bf16 %v298, %v298
        %v346 = vpack.c.bf16 %v300, %v299
        %v347 = vpack.c.bf16 %v301, %v301
        %v348 = vpack.c.bf16 %v303, %v302
        %v349 = vpack.c.bf16 %v304, %v304
        %v350 = vpack.c.bf16 %v306, %v305
        %v351 = vpack.c.bf16 %v307, %v307
        %v352 = vpack.c.bf16 %v309, %v308
        %v353 = vpack.c.bf16 %v310, %v310
        %v354 = vpack.c.bf16 %v312, %v311
        %v355 = vpack.c.bf16 %v313, %v313
        %v356 = vpack.c.bf16 %v315, %v314
        %v357 = vpack.c.bf16 %v316, %v316
        %v358 = vpack.c.bf16 %v318, %v317
        %v359 = vpack.c.bf16 %v319, %v319
        %v360 = vpack.c.bf16 %v321, %v320
        %v361 = vpack.c.bf16 %v322, %v322
        %v362 = vpack.c.bf16 %v324, %v323
        %v363 = vpack.c.bf16 %v325, %v325
        %v364 = vpack.c.bf16 %v327, %v326
        %v365 = vpack.c.bf16 %v328, %v328
        %v366 = vpack.c.bf16 %v330, %v329
        %v367 = vpack.c.bf16 %v331, %v331
        %vm368 = vsmask.f32 7424
        %v370 = vshrl.u32 %v332, 16
        %v372 = vshll.u32 %v332, 16
        %v374 = vrot.slane %v372, 1
        %v375 = vor.u32 %v370, %v374
        %v377 = vshll.u32 %v333, 16
        %v379 = vrot.slane %v377, 1
        %v380 = vsel %vm368, %v375, %v379
        %v382 = vshrl.u32 %v334, 16
        %v384 = vshll.u32 %v334, 16
        %v386 = vrot.slane %v384, 1
        %v387 = vor.u32 %v382, %v386
        %v389 = vshll.u32 %v335, 16
        %v391 = vrot.slane %v389, 1
        %v392 = vsel %vm368, %v387, %v391
        %v394 = vshrl.u32 %v336, 16
        %v396 = vshll.u32 %v336, 16
        %v398 = vrot.slane %v396, 1
        %v399 = vor.u32 %v394, %v398
        %v401 = vshll.u32 %v337, 16
        %v403 = vrot.slane %v401, 1
        %v404 = vsel %vm368, %v399, %v403
        %v406 = vshrl.u32 %v338, 16
        %v408 = vshll.u32 %v338, 16
        %v410 = vrot.slane %v408, 1
        %v411 = vor.u32 %v406, %v410
        %v413 = vshll.u32 %v339, 16
        %v415 = vrot.slane %v413, 1
        %v416 = vsel %vm368, %v411, %v415
        %v418 = vshrl.u32 %v340, 16
        %v420 = vshll.u32 %v340, 16
        %v422 = vrot.slane %v420, 1
        %v423 = vor.u32 %v418, %v422
        %v425 = vshll.u32 %v341, 16
        %v427 = vrot.slane %v425, 1
        %v428 = vsel %vm368, %v423, %v427
        %v430 = vshrl.u32 %v342, 16
        %v432 = vshll.u32 %v342, 16
        %v434 = vrot.slane %v432, 1
        %v435 = vor.u32 %v430, %v434
        %v437 = vshll.u32 %v343, 16
        %v439 = vrot.slane %v437, 1
        %v440 = vsel %vm368, %v435, %v439
        %v442 = vshrl.u32 %v344, 16
        %v444 = vshll.u32 %v344, 16
        %v446 = vrot.slane %v444, 1
        %v447 = vor.u32 %v442, %v446
        %v449 = vshll.u32 %v345, 16
        %v451 = vrot.slane %v449, 1
        %v452 = vsel %vm368, %v447, %v451
        %v454 = vshrl.u32 %v346, 16
        %v456 = vshll.u32 %v346, 16
        %v458 = vrot.slane %v456, 1
        %v459 = vor.u32 %v454, %v458
        %v461 = vshll.u32 %v347, 16
        %v463 = vrot.slane %v461, 1
        %v464 = vsel %vm368, %v459, %v463
        %v466 = vshrl.u32 %v348, 16
        %v468 = vshll.u32 %v348, 16
        %v470 = vrot.slane %v468, 1
        %v471 = vor.u32 %v466, %v470
        %v473 = vshll.u32 %v349, 16
        %v475 = vrot.slane %v473, 1
        %v476 = vsel %vm368, %v471, %v475
        %v478 = vshrl.u32 %v350, 16
        %v480 = vshll.u32 %v350, 16
        %v482 = vrot.slane %v480, 1
        %v483 = vor.u32 %v478, %v482
        %v485 = vshll.u32 %v351, 16
        %v487 = vrot.slane %v485, 1
        %v488 = vsel %vm368, %v483, %v487
        %v490 = vshrl.u32 %v352, 16
        %v492 = vshll.u32 %v352, 16
        %v494 = vrot.slane %v492, 1
        %v495 = vor.u32 %v490, %v494
        %v497 = vshll.u32 %v353, 16
        %v499 = vrot.slane %v497, 1
        %v500 = vsel %vm368, %v495, %v499
        %v502 = vshrl.u32 %v354, 16
        %v504 = vshll.u32 %v354, 16
        %v506 = vrot.slane %v504, 1
        %v507 = vor.u32 %v502, %v506
        %v509 = vshll.u32 %v355, 16
        %v511 = vrot.slane %v509, 1
        %v512 = vsel %vm368, %v507, %v511
        %v514 = vshrl.u32 %v356, 16
        %v516 = vshll.u32 %v356, 16
        %v518 = vrot.slane %v516, 1
        %v519 = vor.u32 %v514, %v518
        %v521 = vshll.u32 %v357, 16
        %v523 = vrot.slane %v521, 1
        %v524 = vsel %vm368, %v519, %v523
        %v526 = vshrl.u32 %v358, 16
        %v528 = vshll.u32 %v358, 16
        %v530 = vrot.slane %v528, 1
        %v531 = vor.u32 %v526, %v530
        %v533 = vshll.u32 %v359, 16
        %v535 = vrot.slane %v533, 1
        %v536 = vsel %vm368, %v531, %v535
        %v538 = vshrl.u32 %v360, 16
        %v540 = vshll.u32 %v360, 16
        %v542 = vrot.slane %v540, 1
        %v543 = vor.u32 %v538, %v542
        %v545 = vshll.u32 %v361, 16
        %v547 = vrot.slane %v545, 1
        %v548 = vsel %vm368, %v543, %v547
        %v550 = vshrl.u32 %v362, 16
        %v552 = vshll.u32 %v362, 16
        %v554 = vrot.slane %v552, 1
        %v555 = vor.u32 %v550, %v554
        %v557 = vshll.u32 %v363, 16
        %v559 = vrot.slane %v557, 1
        %v560 = vsel %vm368, %v555, %v559
        %vm609 = vcmask 1046528
        %v610 = vrot.slane %v332, 1
        %v611 = vrot.slane %v333, 1
        %v612 = vsel %vm609, %v610, %v611
        %v613 = vrot.slane %v334, 1
        %v614 = vrot.slane %v335, 1
        %v615 = vsel %vm609, %v613, %v614
        %v616 = vrot.slane %v336, 1
        %v617 = vrot.slane %v337, 1
        %v618 = vsel %vm609, %v616, %v617
        %v619 = vrot.slane %v338, 1
        %v620 = vrot.slane %v339, 1
        %v621 = vsel %vm609, %v619, %v620
        %v622 = vrot.slane %v340, 1
        %v623 = vrot.slane %v341, 1
        %v624 = vsel %vm609, %v622, %v623
        %v625 = vrot.slane %v342, 1
        %v626 = vrot.slane %v343, 1
        %v627 = vsel %vm609, %v625, %v626
        %v628 = vrot.slane %v344, 1
        %v629 = vrot.slane %v345, 1
        %v630 = vsel %vm609, %v628, %v629
        %v631 = vrot.slane %v346, 1
        %v632 = vrot.slane %v347, 1
        %v633 = vsel %vm609, %v631, %v632
        %v634 = vrot.slane %v348, 1
        %v635 = vrot.slane %v349, 1
        %v636 = vsel %vm609, %v634, %v635
        %v637 = vrot.slane %v350, 1
        %v638 = vrot.slane %v351, 1
        %v639 = vsel %vm609, %v637, %v638
        %v640 = vrot.slane %v352, 1
        %v641 = vrot.slane %v353, 1
        %v642 = vsel %vm609, %v640, %v641
        %v643 = vrot.slane %v354, 1
        %v644 = vrot.slane %v355, 1
        %v645 = vsel %vm609, %v643, %v644
        %v646 = vrot.slane %v356, 1
        %v647 = vrot.slane %v357, 1
        %v648 = vsel %vm609, %v646, %v647
        %v649 = vrot.slane %v358, 1
        %v650 = vrot.slane %v359, 1
        %v651 = vsel %vm609, %v649, %v650
        %v652 = vrot.slane %v360, 1
        %v653 = vrot.slane %v361, 1
        %v654 = vsel %vm609, %v652, %v653
        %v655 = vrot.slane %v362, 1
        %v656 = vrot.slane %v363, 1
        %v657 = vsel %vm609, %v655, %v656
        %v675 = vshrl.u32 %v364, 16
        %v677 = vshll.u32 %v364, 16
        %v679 = vrot.slane %v677, 1
        %v680 = vor.u32 %v675, %v679
        %v682 = vshll.u32 %v365, 16
        %v684 = vrot.slane %v682, 1
        %v685 = vsel %vm368, %v680, %v684
        %v689 = vrot.slane %v364, 1
        %v690 = vrot.slane %v365, 1
        %v691 = vsel %vm609, %v689, %v690
        %v694 = vshrl.u32 %v366, 16
        %v696 = vshll.u32 %v366, 16
        %v698 = vrot.slane %v696, 1
        %v699 = vor.u32 %v694, %v698
        %v701 = vshll.u32 %v367, 16
        %v703 = vrot.slane %v701, 1
        %v704 = vsel %vm368, %v699, %v703
        %v708 = vrot.slane %v366, 1
        %v709 = vrot.slane %v367, 1
        %v710 = vsel %vm609, %v708, %v709
        %v712 = vld [vmem:[%s1] sm:$0xf]
        %v713 = vld [vmem:[%s1 + $0x4] sm:$0xf]
        %v714 = vld [vmem:[%s1 + $0x8] sm:$0xf]
        %v715 = vld [vmem:[%s1 + $0xc] sm:$0xf]
        %v716 = vld [vmem:[%s1 + $0x10] sm:$0xf]
        %v717 = vld [vmem:[%s1 + $0x14] sm:$0xf]
        %v718 = vld [vmem:[%s1 + $0x18] sm:$0xf]
        %v719 = vld [vmem:[%s1 + $0x1c] sm:$0xf]
        %v720 = vld [vmem:[%s1 + $0x20] sm:$0xf]
        %v721 = vld [vmem:[%s1 + $0x24] sm:$0xf]
        %v722 = vld [vmem:[%s1 + $0x28] sm:$0xf]
        %v723 = vld [vmem:[%s1 + $0x2c] sm:$0xf]
        %v724 = vld [vmem:[%s1 + $0x30] sm:$0xf]
        %v725 = vld [vmem:[%s1 + $0x34] sm:$0xf]
        %v726 = vld [vmem:[%s1 + $0x38] sm:$0xf]
        %v727 = vld [vmem:[%s1 + $0x3c] sm:$0xf]
        %v728 = vld [vmem:[%s1 + $0x40] sm:$0xf]
        %v729 = vld [vmem:[%s1 + $0x44] sm:$0xf]
        %v730 = vld [vmem:[%s1 + $0x48] sm:$0xf]
        %v731 = vld [vmem:[%s1 + $0x4c] sm:$0xf]
        %v732 = vld [vmem:[%s1 + $0x50] sm:$0xf]
        %v733 = vld [vmem:[%s1 + $0x54] sm:$0xf]
        %v734 = vld [vmem:[%s1 + $0x58] sm:$0xf]
        %v735 = vld [vmem:[%s1 + $0x5c] sm:$0xf]
        %v736 = vld [vmem:[%s1 + $0x60] sm:$0xf]
        %v737 = vld [vmem:[%s1 + $0x64] sm:$0xf]
        %v738 = vld [vmem:[%s1 + $0x68] sm:$0xf]
        %v739 = vld [vmem:[%s1 + $0x6c] sm:$0xf]
        %v740 = vld [vmem:[%s1 + $0x70] sm:$0xf]
        %v741 = vld [vmem:[%s1 + $0x74] sm:$0xf]
        %v742 = vld [vmem:[%s1 + $0x78] sm:$0xf]
        %v743 = vld [vmem:[%s1 + $0x7c] sm:$0xf]
        %v744 = vld [vmem:[%s1 + $0x80] sm:$0xf]
        %v745 = vld [vmem:[%s1 + $0x84] sm:$0xf]
        %v746 = vld [vmem:[%s1 + $0x88] sm:$0xf]
        %v747 = vld [vmem:[%s1 + $0x8c] sm:$0xf]
        %v748 = vld [vmem:[%s1 + $0x90] sm:$0xf]
        %v749 = vld [vmem:[%s1 + $0x94] sm:$0xf]
        %v750 = vld [vmem:[%s1 + $0x98] sm:$0xf]
        %v751 = vld [vmem:[%s1 + $0x9c] sm:$0xf]
        %v752 = vld [vmem:[%s1 + $0xa0] sm:$0xf]
        %v753 = vld [vmem:[%s1 + $0xa4] sm:$0xf]
        %v754 = vld [vmem:[%s1 + $0xa8] sm:$0xf]
        %v755 = vld [vmem:[%s1 + $0xac] sm:$0xf]
        %v756 = vld [vmem:[%s1 + $0xb0] sm:$0xf]
        %v757 = vld [vmem:[%s1 + $0xb4] sm:$0xf]
        %v758 = vld [vmem:[%s1 + $0xb8] sm:$0xf]
        %v759 = vld [vmem:[%s1 + $0xbc] sm:$0xf]
        %v760 = vld [vmem:[%s1 + $0xc0] sm:$0xf]
        %v761 = vld [vmem:[%s1 + $0xc4] sm:$0xf]
        %v762 = vld [vmem:[%s1 + $0xc8] sm:$0xf]
        %v763 = vld [vmem:[%s1 + $0xcc] sm:$0xf]
        %v764 = vld [vmem:[%s1 + $0xd0] sm:$0xf]
        %v765 = vld [vmem:[%s1 + $0xd4] sm:$0xf]
        %v766 = vld [vmem:[%s1 + $0xd8] sm:$0xf]
        %v767 = vld [vmem:[%s1 + $0xdc] sm:$0xf]
        %v768 = vld [vmem:[%s1 + $0xe0] sm:$0xf]
        %v769 = vld [vmem:[%s1 + $0xe4] sm:$0xf]
        %v770 = vld [vmem:[%s1 + $0xe8] sm:$0xf]
        %v771 = vld [vmem:[%s1 + $0xec] sm:$0xf]
        %v772 = vld [vmem:[%s1 + $0xf0] sm:$0xf]
        %v773 = vld [vmem:[%s1 + $0xf4] sm:$0xf]
        %v774 = vld [vmem:[%s1 + $0xf8] sm:$0xf]
        %v775 = vld [vmem:[%s1 + $0xfc] sm:$0xf]
        %v776 = vld [vmem:[%s1 + $0x100] sm:$0xf]
        %v777 = vld [vmem:[%s1 + $0x104] sm:$0xf]
        %v778 = vld [vmem:[%s1 + $0x108] sm:$0xf]
        %v779 = vld [vmem:[%s1 + $0x10c] sm:$0xf]
        %v780 = vld [vmem:[%s1 + $0x110] sm:$0xf]
        %v781 = vld [vmem:[%s1 + $0x114] sm:$0xf]
        %v782 = vld [vmem:[%s1 + $0x118] sm:$0xf]
        %v783 = vld [vmem:[%s1 + $0x11c] sm:$0xf]
        %v784 = vld [vmem:[%s1 + $0x120] sm:$0xf]
        %v785 = vld [vmem:[%s1 + $0x124] sm:$0xf]
        %v786 = vld [vmem:[%s1 + $0x128] sm:$0xf]
        %v787 = vld [vmem:[%s1 + $0x12c] sm:$0xf]
        %v788 = vld [vmem:[%s1 + $0x130] sm:$0xf]
        %v789 = vld [vmem:[%s1 + $0x134] sm:$0xf]
        %v790 = vld [vmem:[%s1 + $0x138] sm:$0xf]
        %v791 = vld [vmem:[%s1 + $0x13c] sm:$0xf]
        %v792 = vld [vmem:[%s1 + $0x140] sm:$0xf]
        %v793 = vld [vmem:[%s1 + $0x144] sm:$0xf]
        %v794 = vld [vmem:[%s1 + $0x148] sm:$0xf]
        %v795 = vld [vmem:[%s1 + $0x14c] sm:$0xf]
        %v796 = vld [vmem:[%s1 + $0x150] sm:$0xf]
        %v797 = vld [vmem:[%s1 + $0x154] sm:$0xf]
        %v798 = vld [vmem:[%s1 + $0x158] sm:$0xf]
        %v799 = vld [vmem:[%s1 + $0x15c] sm:$0xf]
        %v800 = vld [vmem:[%s1 + $0x160] sm:$0xf]
        %v801 = vld [vmem:[%s1 + $0x164] sm:$0xf]
        %v802 = vld [vmem:[%s1 + $0x168] sm:$0xf]
        %v803 = vld [vmem:[%s1 + $0x16c] sm:$0xf]
        %v804 = vld [vmem:[%s1 + $0x170] sm:$0xf]
        %v805 = vld [vmem:[%s1 + $0x174] sm:$0xf]
        %v806 = vld [vmem:[%s1 + $0x178] sm:$0xf]
        %v807 = vld [vmem:[%s1 + $0x17c] sm:$0xf]
        %v808 = vld [vmem:[%s1 + $0x180] sm:$0xf]
        %v809 = vld [vmem:[%s1 + $0x184] sm:$0xf]
        %v810 = vld [vmem:[%s1 + $0x188] sm:$0xf]
        %v811 = vld [vmem:[%s1 + $0x18c] sm:$0xf]
        %v812 = vld [vmem:[%s1 + $0x190] sm:$0xf]
        %v813 = vld [vmem:[%s1 + $0x194] sm:$0xf]
        %v814 = vld [vmem:[%s1 + $0x198] sm:$0xf]
        %v815 = vld [vmem:[%s1 + $0x19c] sm:$0xf]
        %v816 = vld [vmem:[%s1 + $0x1a0] sm:$0xf]
        %v817 = vld [vmem:[%s1 + $0x1a4] sm:$0xf]
        %v818 = vld [vmem:[%s1 + $0x1a8] sm:$0xf]
        %v819 = vld [vmem:[%s1 + $0x1ac] sm:$0xf]
        %v820 = vld [vmem:[%s1 + $0x1b0] sm:$0xf]
        %v821 = vld [vmem:[%s1 + $0x1b4] sm:$0xf]
        %v822 = vld [vmem:[%s1 + $0x1b8] sm:$0xf]
        %v823 = vld [vmem:[%s1 + $0x1bc] sm:$0xf]
        %v824 = vld [vmem:[%s1 + $0x1c0] sm:$0xf]
        %v825 = vld [vmem:[%s1 + $0x1c4] sm:$0xf]
        %v826 = vld [vmem:[%s1 + $0x1c8] sm:$0xf]
        %v827 = vld [vmem:[%s1 + $0x1cc] sm:$0xf]
        %v828 = vld [vmem:[%s1 + $0x1d0] sm:$0xf]
        %v829 = vld [vmem:[%s1 + $0x1d4] sm:$0xf]
        %v830 = vld [vmem:[%s1 + $0x1d8] sm:$0xf]
        %v831 = vld [vmem:[%s1 + $0x1dc] sm:$0xf]
        %v832 = vld [vmem:[%s1 + $0x1e0] sm:$0xf]
        %v833 = vld [vmem:[%s1 + $0x1e4] sm:$0xf]
        %v834 = vld [vmem:[%s1 + $0x1e8] sm:$0xf]
        %v835 = vld [vmem:[%s1 + $0x1ec] sm:$0xf]
        %v836 = vld [vmem:[%s1 + $0x1f0] sm:$0xf]
        %v837 = vld [vmem:[%s1 + $0x1f4] sm:$0xf]
        %v838 = vld [vmem:[%s1 + $0x1f8] sm:$0xf]
        %v839 = vld [vmem:[%s1 + $0x1fc] sm:$0xf]
        %v840 = vld [vmem:[%s1 + $0x200] sm:$0xf]
        %v841 = vld [vmem:[%s1 + $0x204] sm:$0xf]
        %v842 = vld [vmem:[%s1 + $0x208] sm:$0xf]
        %v843 = vld [vmem:[%s1 + $0x20c] sm:$0xf]
        %v844 = vld [vmem:[%s1 + $0x210] sm:$0xf]
        %v845 = vld [vmem:[%s1 + $0x214] sm:$0xf]
        %v846 = vld [vmem:[%s1 + $0x218] sm:$0xf]
        %v847 = vld [vmem:[%s1 + $0x21c] sm:$0xf]
        %v848 = vld [vmem:[%s1 + $0x220] sm:$0xf]
        %v849 = vld [vmem:[%s1 + $0x224] sm:$0xf]
        %v850 = vld [vmem:[%s1 + $0x228] sm:$0xf]
        %v851 = vld [vmem:[%s1 + $0x22c] sm:$0xf]
        %v852 = vld [vmem:[%s1 + $0x230] sm:$0xf]
        %v853 = vld [vmem:[%s1 + $0x234] sm:$0xf]
        %v854 = vld [vmem:[%s1 + $0x238] sm:$0xf]
        %v855 = vld [vmem:[%s1 + $0x23c] sm:$0xf]
        %v1000 = vunpack.c.l.b16 %v712
        %v1001 = vunpack.c.l.b16 %v713
        %v1002 = vunpack.c.l.b16 %v714
        %v1003 = vunpack.c.l.b16 %v715
        %v1004 = vunpack.c.l.b16 %v716
        %v1005 = vunpack.c.l.b16 %v717
        %v1006 = vunpack.c.l.b16 %v718
        %v1007 = vunpack.c.l.b16 %v719
        %v1008 = vunpack.c.l.b16 %v720
        %v1009 = vunpack.c.l.b16 %v721
        %v1010 = vunpack.c.l.b16 %v722
        %v1011 = vunpack.c.l.b16 %v723
        %v1012 = vunpack.c.l.b16 %v724
        %v1013 = vunpack.c.l.b16 %v725
        %v1014 = vunpack.c.l.b16 %v726
        %v1015 = vunpack.c.l.b16 %v727
        %v1016 = vunpack.c.l.b16 %v728
        %v1017 = vunpack.c.l.b16 %v729
        %v1018 = vunpack.c.l.b16 %v730
        %v1019 = vunpack.c.l.b16 %v731
        %v1020 = vunpack.c.l.b16 %v732
        %v1021 = vunpack.c.l.b16 %v733
        %v1022 = vunpack.c.l.b16 %v734
        %v1023 = vunpack.c.l.b16 %v735
        %v1024 = vunpack.c.l.b16 %v736
        %v1025 = vunpack.c.l.b16 %v737
        %v1026 = vunpack.c.l.b16 %v738
        %v1027 = vunpack.c.l.b16 %v739
        %v1028 = vunpack.c.l.b16 %v740
        %v1029 = vunpack.c.l.b16 %v741
        %v1030 = vunpack.c.l.b16 %v742
        %v1031 = vunpack.c.l.b16 %v743
        %v1032 = vunpack.c.l.b16 %v744
        %v1033 = vunpack.c.l.b16 %v745
        %v1034 = vunpack.c.l.b16 %v746
        %v1035 = vunpack.c.l.b16 %v747
        %v1036 = vunpack.c.l.b16 %v748
        %v1037 = vunpack.c.l.b16 %v749
        %v1038 = vunpack.c.l.b16 %v750
        %v1039 = vunpack.c.l.b16 %v751
        %v1040 = vunpack.c.l.b16 %v752
        %v1041 = vunpack.c.l.b16 %v753
        %v1042 = vunpack.c.l.b16 %v754
        %v1043 = vunpack.c.l.b16 %v755
        %v1044 = vunpack.c.l.b16 %v756
        %v1045 = vunpack.c.l.b16 %v757
        %v1046 = vunpack.c.l.b16 %v758
        %v1047 = vunpack.c.l.b16 %v759
        %v1048 = vunpack.c.l.b16 %v760
        %v1049 = vunpack.c.l.b16 %v761
        %v1050 = vunpack.c.l.b16 %v762
        %v1051 = vunpack.c.l.b16 %v763
        %v1052 = vunpack.c.l.b16 %v764
        %v1053 = vunpack.c.l.b16 %v765
        %v1054 = vunpack.c.l.b16 %v766
        %v1055 = vunpack.c.l.b16 %v767
        %v1056 = vunpack.c.l.b16 %v768
        %v1057 = vunpack.c.l.b16 %v769
        %v1058 = vunpack.c.l.b16 %v770
        %v1059 = vunpack.c.l.b16 %v771
        %v1060 = vunpack.c.l.b16 %v772
        %v1061 = vunpack.c.l.b16 %v773
        %v1062 = vunpack.c.l.b16 %v774
        %v1063 = vunpack.c.l.b16 %v775
        %v1064 = vunpack.c.l.b16 %v776
        %v1065 = vunpack.c.l.b16 %v777
        %v1066 = vunpack.c.l.b16 %v778
        %v1067 = vunpack.c.l.b16 %v779
        %v1068 = vunpack.c.l.b16 %v780
        %v1069 = vunpack.c.l.b16 %v781
        %v1070 = vunpack.c.l.b16 %v782
        %v1071 = vunpack.c.l.b16 %v783
        %v1072 = vunpack.c.l.b16 %v784
        %v1073 = vunpack.c.l.b16 %v785
        %v1074 = vunpack.c.l.b16 %v786
        %v1075 = vunpack.c.l.b16 %v787
        %v1076 = vunpack.c.l.b16 %v788
        %v1077 = vunpack.c.l.b16 %v789
        %v1078 = vunpack.c.l.b16 %v790
        %v1079 = vunpack.c.l.b16 %v791
        %v1080 = vunpack.c.l.b16 %v792
        %v1081 = vunpack.c.l.b16 %v793
        %v1082 = vunpack.c.l.b16 %v794
        %v1083 = vunpack.c.l.b16 %v795
        %v1084 = vunpack.c.l.b16 %v796
        %v1085 = vunpack.c.l.b16 %v797
        %v1086 = vunpack.c.l.b16 %v798
        %v1087 = vunpack.c.l.b16 %v799
        %v1088 = vunpack.c.l.b16 %v800
        %v1089 = vunpack.c.l.b16 %v801
        %v1090 = vunpack.c.l.b16 %v802
        %v1091 = vunpack.c.l.b16 %v803
        %v1092 = vunpack.c.l.b16 %v804
        %v1093 = vunpack.c.l.b16 %v805
        %v1094 = vunpack.c.l.b16 %v806
        %v1095 = vunpack.c.l.b16 %v807
        %v1096 = vunpack.c.l.b16 %v808
        %v1097 = vunpack.c.l.b16 %v809
        %v1098 = vunpack.c.l.b16 %v810
        %v1099 = vunpack.c.l.b16 %v811
        %v1100 = vunpack.c.l.b16 %v812
        %v1101 = vunpack.c.l.b16 %v813
        %v1102 = vunpack.c.l.b16 %v814
        %v1103 = vunpack.c.l.b16 %v815
        %v1104 = vunpack.c.l.b16 %v816
        %v1105 = vunpack.c.l.b16 %v817
        %v1106 = vunpack.c.l.b16 %v818
        %v1107 = vunpack.c.l.b16 %v819
        %v1108 = vunpack.c.l.b16 %v820
        %v1109 = vunpack.c.l.b16 %v821
        %v1110 = vunpack.c.l.b16 %v822
        %v1111 = vunpack.c.l.b16 %v823
        %v1112 = vunpack.c.l.b16 %v824
        %v1113 = vunpack.c.l.b16 %v825
        %v1114 = vunpack.c.l.b16 %v826
        %v1115 = vunpack.c.l.b16 %v827
        %v1116 = vunpack.c.l.b16 %v828
        %v1117 = vunpack.c.l.b16 %v829
        %v1118 = vunpack.c.l.b16 %v830
        %v1119 = vunpack.c.l.b16 %v831
        %v1120 = vunpack.c.l.b16 %v832
        %v1121 = vunpack.c.l.b16 %v833
        %v1122 = vunpack.c.l.b16 %v834
        %v1123 = vunpack.c.l.b16 %v835
        %v1124 = vunpack.c.l.b16 %v836
        %v1125 = vunpack.c.l.b16 %v837
        %v1126 = vunpack.c.l.b16 %v838
        %v1127 = vunpack.c.l.b16 %v839
        %v1128 = vunpack.c.l.b16 %v840
        %v1129 = vunpack.c.l.b16 %v841
        %v1130 = vunpack.c.l.b16 %v842
        %v1131 = vunpack.c.l.b16 %v843
        %v1132 = vunpack.c.l.b16 %v844
        %v1133 = vunpack.c.l.b16 %v845
        %v1134 = vunpack.c.l.b16 %v846
        %v1135 = vunpack.c.l.b16 %v847
        %v1136 = vunpack.c.l.b16 %v848
        %v1137 = vunpack.c.l.b16 %v849
        %v1138 = vunpack.c.l.b16 %v850
        %v1139 = vunpack.c.l.b16 %v851
        %v1140 = vunpack.c.l.b16 %v852
        %v1141 = vunpack.c.l.b16 %v853
        %v1142 = vunpack.c.l.b16 %v854
        %v1143 = vunpack.c.l.b16 %v855
        %v1144 = vpack.c.b16 %v1001, %v1000
        %v1145 = vpack.c.b16 %v1003, %v1002
        %v1146 = vpack.c.b16 %v1005, %v1004
        %v1147 = vpack.c.b16 %v1007, %v1006
        %v1148 = vpack.c.b16 %v1009, %v1008
        %v1149 = vpack.c.b16 %v1011, %v1010
        %v1150 = vpack.c.b16 %v1013, %v1012
        %v1151 = vpack.c.b16 %v1015, %v1014
        %v1152 = vpack.c.b16 %v1017, %v1016
        %v1153 = vpack.c.b16 %v1019, %v1018
        %v1154 = vpack.c.b16 %v1021, %v1020
        %v1155 = vpack.c.b16 %v1023, %v1022
        %v1156 = vpack.c.b16 %v1025, %v1024
        %v1157 = vpack.c.b16 %v1027, %v1026
        %v1158 = vpack.c.b16 %v1029, %v1028
        %v1159 = vpack.c.b16 %v1031, %v1030
        %v1160 = vpack.c.b16 %v1033, %v1032
        %v1161 = vpack.c.b16 %v1035, %v1034
        %v1162 = vpack.c.b16 %v1037, %v1036
        %v1163 = vpack.c.b16 %v1039, %v1038
        %v1164 = vpack.c.b16 %v1041, %v1040
        %v1165 = vpack.c.b16 %v1043, %v1042
        %v1166 = vpack.c.b16 %v1045, %v1044
        %v1167 = vpack.c.b16 %v1047, %v1046
        %v1168 = vpack.c.b16 %v1049, %v1048
        %v1169 = vpack.c.b16 %v1051, %v1050
        %v1170 = vpack.c.b16 %v1053, %v1052
        %v1171 = vpack.c.b16 %v1055, %v1054
        %v1172 = vpack.c.b16 %v1057, %v1056
        %v1173 = vpack.c.b16 %v1059, %v1058
        %v1174 = vpack.c.b16 %v1061, %v1060
        %v1175 = vpack.c.b16 %v1063, %v1062
        %v1176 = vpack.c.b16 %v1065, %v1064
        %v1177 = vpack.c.b16 %v1067, %v1066
        %v1178 = vpack.c.b16 %v1069, %v1068
        %v1179 = vpack.c.b16 %v1071, %v1070
        %v1180 = vpack.c.b16 %v1073, %v1072
        %v1181 = vpack.c.b16 %v1075, %v1074
        %v1182 = vpack.c.b16 %v1077, %v1076
        %v1183 = vpack.c.b16 %v1079, %v1078
        %v1184 = vpack.c.b16 %v1081, %v1080
        %v1185 = vpack.c.b16 %v1083, %v1082
        %v1186 = vpack.c.b16 %v1085, %v1084
        %v1187 = vpack.c.b16 %v1087, %v1086
        %v1188 = vpack.c.b16 %v1089, %v1088
        %v1189 = vpack.c.b16 %v1091, %v1090
        %v1190 = vpack.c.b16 %v1093, %v1092
        %v1191 = vpack.c.b16 %v1095, %v1094
        %v1192 = vpack.c.b16 %v1097, %v1096
        %v1193 = vpack.c.b16 %v1099, %v1098
        %v1194 = vpack.c.b16 %v1101, %v1100
        %v1195 = vpack.c.b16 %v1103, %v1102
        %v1196 = vpack.c.b16 %v1105, %v1104
        %v1197 = vpack.c.b16 %v1107, %v1106
        %v1198 = vpack.c.b16 %v1109, %v1108
        %v1199 = vpack.c.b16 %v1111, %v1110
        %v1200 = vpack.c.b16 %v1113, %v1112
        %v1201 = vpack.c.b16 %v1115, %v1114
        %v1202 = vpack.c.b16 %v1117, %v1116
        %v1203 = vpack.c.b16 %v1119, %v1118
        %v1204 = vpack.c.b16 %v1121, %v1120
        %v1205 = vpack.c.b16 %v1123, %v1122
        %v1206 = vpack.c.b16 %v1125, %v1124
        %v1207 = vpack.c.b16 %v1127, %v1126
        %v1208 = vpack.c.b16 %v1129, %v1128
        %v1209 = vpack.c.b16 %v1131, %v1130
        %v1210 = vpack.c.b16 %v1133, %v1132
        %v1211 = vpack.c.b16 %v1135, %v1134
        %v1212 = vpack.c.b16 %v1137, %v1136
        %v1213 = vpack.c.b16 %v1139, %v1138
        %v1214 = vpack.c.b16 %v1141, %v1140
        %v1215 = vpack.c.b16 %v1143, %v1142
        %1288 = vmatprep.subr.bf16.mxu0 0
        %1289 = vmatpush1.bf16.msra.mxu0 %v1151
        %1290 = vmatprep.subr.bf16.mxu0 0
        %1291 = vmatpush1.bf16.msra.mxu0 %v1150
        %1292 = vmatprep.subr.bf16.mxu0 0
        %1293 = vmatpush1.bf16.msra.mxu0 %v1149
        %1294 = vmatprep.subr.bf16.mxu0 0
        %1295 = vmatpush1.bf16.msra.mxu0 %v1148
        %1296 = vmatprep.subr.bf16.mxu0 0
        %1297 = vmatpush1.bf16.msra.mxu0 %v1147
        %1298 = vmatprep.subr.bf16.mxu0 0
        %1299 = vmatpush1.bf16.msra.mxu0 %v1146
        %1300 = vmatprep.subr.bf16.mxu0 0
        %1301 = vmatpush1.bf16.msra.mxu0 %v1145
        %1302 = vmatprep.subr.bf16.mxu0 0
        %1303 = vmatpush1.bf16.msra.mxu0 %v1144
        %1304 = vmatprep.subr.bf16.mxu0 0
        %1305 = vmatpush2.bf16.msra.mxu0 %v1159
        %1306 = vmatprep.subr.bf16.mxu0 0
        %1307 = vmatpush2.bf16.msra.mxu0 %v1158
        %1308 = vmatprep.subr.bf16.mxu0 0
        %1309 = vmatpush2.bf16.msra.mxu0 %v1157
        %1310 = vmatprep.subr.bf16.mxu0 0
        %1311 = vmatpush2.bf16.msra.mxu0 %v1156
        %1312 = vmatprep.subr.bf16.mxu0 0
        %1313 = vmatpush2.bf16.msra.mxu0 %v1155
        %1314 = vmatprep.subr.bf16.mxu0 0
        %1315 = vmatpush2.bf16.msra.mxu0 %v1154
        %1316 = vmatprep.subr.bf16.mxu0 0
        %1317 = vmatpush2.bf16.msra.mxu0 %v1153
        %1318 = vmatprep.subr.bf16.mxu0 0
        %1319 = vmatpush2.bf16.msra.mxu0 %v1152
        %1320 = vmatprep.mubr.bf16.mxu0 %v380
        %1321 = vmatmul.mubr.bf16.gmra.mxu0 %v332
        %v1322 = vpop.f32.mrf.mxu0
        %v1323 = vadd.f32 0.0, %v1322
        %v1324 = vpop.f32.mrf.mxu0
        %v1325 = vpop.f32.mrf.mxu0
        %v1326 = vadd.f32 0.0, %v1325
        %v1327 = vpop.f32.mrf.mxu0
        %1328 = vmatprep.mubr.bf16.mxu0 %v392
        %1329 = vmatmul.mubr.bf16.gmra.mxu0 %v334
        %v1330 = vpop.f32.mrf.mxu0
        %v1331 = vadd.f32 0.0, %v1330
        %v1332 = vpop.f32.mrf.mxu0
        %v1333 = vpop.f32.mrf.mxu0
        %v1334 = vadd.f32 0.0, %v1333
        %v1335 = vpop.f32.mrf.mxu0
        %1336 = vmatprep.mubr.bf16.mxu0 %v404
        %1337 = vmatmul.mubr.bf16.gmra.mxu0 %v336
        %v1338 = vpop.f32.mrf.mxu0
        %v1339 = vadd.f32 0.0, %v1338
        %v1340 = vpop.f32.mrf.mxu0
        %v1341 = vpop.f32.mrf.mxu0
        %v1342 = vadd.f32 0.0, %v1341
        %v1343 = vpop.f32.mrf.mxu0
        %1344 = vmatprep.mubr.bf16.mxu0 %v416
        %1345 = vmatmul.mubr.bf16.gmra.mxu0 %v338
        %v1346 = vpop.f32.mrf.mxu0
        %v1347 = vadd.f32 0.0, %v1346
        %v1348 = vpop.f32.mrf.mxu0
        %v1349 = vpop.f32.mrf.mxu0
        %v1350 = vadd.f32 0.0, %v1349
        %v1351 = vpop.f32.mrf.mxu0
        %1352 = vmatprep.mubr.bf16.mxu0 %v428
        %1353 = vmatmul.mubr.bf16.gmra.mxu0 %v340
        %v1354 = vpop.f32.mrf.mxu0
        %v1355 = vadd.f32 0.0, %v1354
        %v1356 = vpop.f32.mrf.mxu0
        %v1357 = vpop.f32.mrf.mxu0
        %v1358 = vadd.f32 0.0, %v1357
        %v1359 = vpop.f32.mrf.mxu0
        %1360 = vmatprep.mubr.bf16.mxu0 %v440
        %1361 = vmatmul.mubr.bf16.gmra.mxu0 %v342
        %v1362 = vpop.f32.mrf.mxu0
        %v1363 = vadd.f32 0.0, %v1362
        %v1364 = vpop.f32.mrf.mxu0
        %v1365 = vpop.f32.mrf.mxu0
        %v1366 = vadd.f32 0.0, %v1365
        %v1367 = vpop.f32.mrf.mxu0
        %1368 = vmatprep.mubr.bf16.mxu0 %v452
        %1369 = vmatmul.mubr.bf16.gmra.mxu0 %v344
        %v1370 = vpop.f32.mrf.mxu0
        %v1371 = vadd.f32 0.0, %v1370
        %v1372 = vpop.f32.mrf.mxu0
        %v1373 = vpop.f32.mrf.mxu0
        %v1374 = vadd.f32 0.0, %v1373
        %v1375 = vpop.f32.mrf.mxu0
        %1376 = vmatprep.mubr.bf16.mxu0 %v464
        %1377 = vmatmul.mubr.bf16.gmra.mxu0 %v346
        %v1378 = vpop.f32.mrf.mxu0
        %v1379 = vadd.f32 0.0, %v1378
        %v1380 = vpop.f32.mrf.mxu0
        %v1381 = vpop.f32.mrf.mxu0
        %v1382 = vadd.f32 0.0, %v1381
        %v1383 = vpop.f32.mrf.mxu0
        %1384 = vmatprep.mubr.bf16.mxu0 %v476
        %1385 = vmatmul.mubr.bf16.gmra.mxu0 %v348
        %v1386 = vpop.f32.mrf.mxu0
        %v1387 = vadd.f32 0.0, %v1386
        %v1388 = vpop.f32.mrf.mxu0
        %v1389 = vpop.f32.mrf.mxu0
        %v1390 = vadd.f32 0.0, %v1389
        %v1391 = vpop.f32.mrf.mxu0
        %1392 = vmatprep.mubr.bf16.mxu0 %v488
        %1393 = vmatmul.mubr.bf16.gmra.mxu0 %v350
        %v1394 = vpop.f32.mrf.mxu0
        %v1395 = vadd.f32 0.0, %v1394
        %v1396 = vpop.f32.mrf.mxu0
        %v1397 = vpop.f32.mrf.mxu0
        %v1398 = vadd.f32 0.0, %v1397
        %v1399 = vpop.f32.mrf.mxu0
        %1400 = vmatprep.mubr.bf16.mxu0 %v500
        %1401 = vmatmul.mubr.bf16.gmra.mxu0 %v352
        %v1402 = vpop.f32.mrf.mxu0
        %v1403 = vadd.f32 0.0, %v1402
        %v1404 = vpop.f32.mrf.mxu0
        %v1405 = vpop.f32.mrf.mxu0
        %v1406 = vadd.f32 0.0, %v1405
        %v1407 = vpop.f32.mrf.mxu0
        %1408 = vmatprep.mubr.bf16.mxu0 %v512
        %1409 = vmatmul.mubr.bf16.gmra.mxu0 %v354
        %v1410 = vpop.f32.mrf.mxu0
        %v1411 = vadd.f32 0.0, %v1410
        %v1412 = vpop.f32.mrf.mxu0
        %v1413 = vpop.f32.mrf.mxu0
        %v1414 = vadd.f32 0.0, %v1413
        %v1415 = vpop.f32.mrf.mxu0
        %1416 = vmatprep.mubr.bf16.mxu0 %v524
        %1417 = vmatmul.mubr.bf16.gmra.mxu0 %v356
        %v1418 = vpop.f32.mrf.mxu0
        %v1419 = vadd.f32 0.0, %v1418
        %v1420 = vpop.f32.mrf.mxu0
        %v1421 = vpop.f32.mrf.mxu0
        %v1422 = vadd.f32 0.0, %v1421
        %v1423 = vpop.f32.mrf.mxu0
        %1424 = vmatprep.mubr.bf16.mxu0 %v536
        %1425 = vmatmul.mubr.bf16.gmra.mxu0 %v358
        %v1426 = vpop.f32.mrf.mxu0
        %v1427 = vadd.f32 0.0, %v1426
        %v1428 = vpop.f32.mrf.mxu0
        %v1429 = vpop.f32.mrf.mxu0
        %v1430 = vadd.f32 0.0, %v1429
        %v1431 = vpop.f32.mrf.mxu0
        %1432 = vmatprep.mubr.bf16.mxu0 %v548
        %1433 = vmatmul.mubr.bf16.gmra.mxu0 %v360
        %v1434 = vpop.f32.mrf.mxu0
        %v1435 = vadd.f32 0.0, %v1434
        %v1436 = vpop.f32.mrf.mxu0
        %v1437 = vpop.f32.mrf.mxu0
        %v1438 = vadd.f32 0.0, %v1437
        %v1439 = vpop.f32.mrf.mxu0
        %1440 = vmatprep.mubr.bf16.mxu0 %v560
        %1441 = vmatmul.mubr.bf16.gmra.mxu0 %v362
        %v1442 = vpop.f32.mrf.mxu0
        %v1443 = vadd.f32 0.0, %v1442
        %v1444 = vpop.f32.mrf.mxu0
        %v1445 = vpop.f32.mrf.mxu0
        %v1446 = vadd.f32 0.0, %v1445
        %v1447 = vpop.f32.mrf.mxu0
        %1448 = vdwg.mxu0
        %1449 = vmatprep.subr.bf16.mxu0 0
        %1450 = vmatpush1.bf16.msra.mxu0 %v1167
        %1451 = vmatprep.subr.bf16.mxu0 0
        %1452 = vmatpush1.bf16.msra.mxu0 %v1166
        %1453 = vmatprep.subr.bf16.mxu0 0
        %1454 = vmatpush1.bf16.msra.mxu0 %v1165
        %1455 = vmatprep.subr.bf16.mxu0 0
        %1456 = vmatpush1.bf16.msra.mxu0 %v1164
        %1457 = vmatprep.subr.bf16.mxu0 0
        %1458 = vmatpush1.bf16.msra.mxu0 %v1163
        %1459 = vmatprep.subr.bf16.mxu0 0
        %1460 = vmatpush1.bf16.msra.mxu0 %v1162
        %1461 = vmatprep.subr.bf16.mxu0 0
        %1462 = vmatpush1.bf16.msra.mxu0 %v1161
        %1463 = vmatprep.subr.bf16.mxu0 0
        %1464 = vmatpush1.bf16.msra.mxu0 %v1160
        %1465 = vmatprep.subr.bf16.mxu0 0
        %1466 = vmatpush2.bf16.msra.mxu0 %v1175
        %1467 = vmatprep.subr.bf16.mxu0 0
        %1468 = vmatpush2.bf16.msra.mxu0 %v1174
        %1469 = vmatprep.subr.bf16.mxu0 0
        %1470 = vmatpush2.bf16.msra.mxu0 %v1173
        %1471 = vmatprep.subr.bf16.mxu0 0
        %1472 = vmatpush2.bf16.msra.mxu0 %v1172
        %1473 = vmatprep.subr.bf16.mxu0 0
        %1474 = vmatpush2.bf16.msra.mxu0 %v1171
        %1475 = vmatprep.subr.bf16.mxu0 0
        %1476 = vmatpush2.bf16.msra.mxu0 %v1170
        %1477 = vmatprep.subr.bf16.mxu0 0
        %1478 = vmatpush2.bf16.msra.mxu0 %v1169
        %1479 = vmatprep.subr.bf16.mxu0 0
        %1480 = vmatpush2.bf16.msra.mxu0 %v1168
        %1481 = vmatprep.mubr.bf16.mxu0 %v334
        %1482 = vmatmul.mubr.bf16.gmra.mxu0 %v612
        %v1483 = vpop.f32.mrf.mxu0
        %v1484 = vadd.f32 %v1323, %v1483
        %v1485 = vpop.f32.mrf.mxu0
        %v1486 = vpop.f32.mrf.mxu0
        %v1487 = vadd.f32 %v1326, %v1486
        %v1488 = vpop.f32.mrf.mxu0
        %1489 = vmatprep.mubr.bf16.mxu0 %v336
        %1490 = vmatmul.mubr.bf16.gmra.mxu0 %v615
        %v1491 = vpop.f32.mrf.mxu0
        %v1492 = vadd.f32 %v1331, %v1491
        %v1493 = vpop.f32.mrf.mxu0
        %v1494 = vpop.f32.mrf.mxu0
        %v1495 = vadd.f32 %v1334, %v1494
        %v1496 = vpop.f32.mrf.mxu0
        %1497 = vmatprep.mubr.bf16.mxu0 %v338
        %1498 = vmatmul.mubr.bf16.gmra.mxu0 %v618
        %v1499 = vpop.f32.mrf.mxu0
        %v1500 = vadd.f32 %v1339, %v1499
        %v1501 = vpop.f32.mrf.mxu0
        %v1502 = vpop.f32.mrf.mxu0
        %v1503 = vadd.f32 %v1342, %v1502
        %v1504 = vpop.f32.mrf.mxu0
        %1505 = vmatprep.mubr.bf16.mxu0 %v340
        %1506 = vmatmul.mubr.bf16.gmra.mxu0 %v621
        %v1507 = vpop.f32.mrf.mxu0
        %v1508 = vadd.f32 %v1347, %v1507
        %v1509 = vpop.f32.mrf.mxu0
        %v1510 = vpop.f32.mrf.mxu0
        %v1511 = vadd.f32 %v1350, %v1510
        %v1512 = vpop.f32.mrf.mxu0
        %1513 = vmatprep.mubr.bf16.mxu0 %v342
        %1514 = vmatmul.mubr.bf16.gmra.mxu0 %v624
        %v1515 = vpop.f32.mrf.mxu0
        %v1516 = vadd.f32 %v1355, %v1515
        %v1517 = vpop.f32.mrf.mxu0
        %v1518 = vpop.f32.mrf.mxu0
        %v1519 = vadd.f32 %v1358, %v1518
        %v1520 = vpop.f32.mrf.mxu0
        %1521 = vmatprep.mubr.bf16.mxu0 %v344
        %1522 = vmatmul.mubr.bf16.gmra.mxu0 %v627
        %v1523 = vpop.f32.mrf.mxu0
        %v1524 = vadd.f32 %v1363, %v1523
        %v1525 = vpop.f32.mrf.mxu0
        %v1526 = vpop.f32.mrf.mxu0
        %v1527 = vadd.f32 %v1366, %v1526
        %v1528 = vpop.f32.mrf.mxu0
        %1529 = vmatprep.mubr.bf16.mxu0 %v346
        %1530 = vmatmul.mubr.bf16.gmra.mxu0 %v630
        %v1531 = vpop.f32.mrf.mxu0
        %v1532 = vadd.f32 %v1371, %v1531
        %v1533 = vpop.f32.mrf.mxu0
        %v1534 = vpop.f32.mrf.mxu0
        %v1535 = vadd.f32 %v1374, %v1534
        %v1536 = vpop.f32.mrf.mxu0
        %1537 = vmatprep.mubr.bf16.mxu0 %v348
        %1538 = vmatmul.mubr.bf16.gmra.mxu0 %v633
        %v1539 = vpop.f32.mrf.mxu0
        %v1540 = vadd.f32 %v1379, %v1539
        %v1541 = vpop.f32.mrf.mxu0
        %v1542 = vpop.f32.mrf.mxu0
        %v1543 = vadd.f32 %v1382, %v1542
        %v1544 = vpop.f32.mrf.mxu0
        %1545 = vmatprep.mubr.bf16.mxu0 %v350
        %1546 = vmatmul.mubr.bf16.gmra.mxu0 %v636
        %v1547 = vpop.f32.mrf.mxu0
        %v1548 = vadd.f32 %v1387, %v1547
        %v1549 = vpop.f32.mrf.mxu0
        %v1550 = vpop.f32.mrf.mxu0
        %v1551 = vadd.f32 %v1390, %v1550
        %v1552 = vpop.f32.mrf.mxu0
        %1553 = vmatprep.mubr.bf16.mxu0 %v352
        %1554 = vmatmul.mubr.bf16.gmra.mxu0 %v639
        %v1555 = vpop.f32.mrf.mxu0
        %v1556 = vadd.f32 %v1395, %v1555
        %v1557 = vpop.f32.mrf.mxu0
        %v1558 = vpop.f32.mrf.mxu0
        %v1559 = vadd.f32 %v1398, %v1558
        %v1560 = vpop.f32.mrf.mxu0
        %1561 = vmatprep.mubr.bf16.mxu0 %v354
        %1562 = vmatmul.mubr.bf16.gmra.mxu0 %v642
        %v1563 = vpop.f32.mrf.mxu0
        %v1564 = vadd.f32 %v1403, %v1563
        %v1565 = vpop.f32.mrf.mxu0
        %v1566 = vpop.f32.mrf.mxu0
        %v1567 = vadd.f32 %v1406, %v1566
        %v1568 = vpop.f32.mrf.mxu0
        %1569 = vmatprep.mubr.bf16.mxu0 %v356
        %1570 = vmatmul.mubr.bf16.gmra.mxu0 %v645
        %v1571 = vpop.f32.mrf.mxu0
        %v1572 = vadd.f32 %v1411, %v1571
        %v1573 = vpop.f32.mrf.mxu0
        %v1574 = vpop.f32.mrf.mxu0
        %v1575 = vadd.f32 %v1414, %v1574
        %v1576 = vpop.f32.mrf.mxu0
        %1577 = vmatprep.mubr.bf16.mxu0 %v358
        %1578 = vmatmul.mubr.bf16.gmra.mxu0 %v648
        %v1579 = vpop.f32.mrf.mxu0
        %v1580 = vadd.f32 %v1419, %v1579
        %v1581 = vpop.f32.mrf.mxu0
        %v1582 = vpop.f32.mrf.mxu0
        %v1583 = vadd.f32 %v1422, %v1582
        %v1584 = vpop.f32.mrf.mxu0
        %1585 = vmatprep.mubr.bf16.mxu0 %v360
        %1586 = vmatmul.mubr.bf16.gmra.mxu0 %v651
        %v1587 = vpop.f32.mrf.mxu0
        %v1588 = vadd.f32 %v1427, %v1587
        %v1589 = vpop.f32.mrf.mxu0
        %v1590 = vpop.f32.mrf.mxu0
        %v1591 = vadd.f32 %v1430, %v1590
        %v1592 = vpop.f32.mrf.mxu0
        %1593 = vmatprep.mubr.bf16.mxu0 %v362
        %1594 = vmatmul.mubr.bf16.gmra.mxu0 %v654
        %v1595 = vpop.f32.mrf.mxu0
        %v1596 = vadd.f32 %v1435, %v1595
        %v1597 = vpop.f32.mrf.mxu0
        %v1598 = vpop.f32.mrf.mxu0
        %v1599 = vadd.f32 %v1438, %v1598
        %v1600 = vpop.f32.mrf.mxu0
        %1601 = vmatprep.mubr.bf16.mxu0 %v364
        %1602 = vmatmul.mubr.bf16.gmra.mxu0 %v657
        %v1603 = vpop.f32.mrf.mxu0
        %v1604 = vadd.f32 %v1443, %v1603
        %v1605 = vpop.f32.mrf.mxu0
        %v1606 = vpop.f32.mrf.mxu0
        %v1607 = vadd.f32 %v1446, %v1606
        %v1608 = vpop.f32.mrf.mxu0
        %1609 = vdwg.mxu0
        %1610 = vmatprep.subr.bf16.mxu0 0
        %1611 = vmatpush1.bf16.msra.mxu0 %v1183
        %1612 = vmatprep.subr.bf16.mxu0 0
        %1613 = vmatpush1.bf16.msra.mxu0 %v1182
        %1614 = vmatprep.subr.bf16.mxu0 0
        %1615 = vmatpush1.bf16.msra.mxu0 %v1181
        %1616 = vmatprep.subr.bf16.mxu0 0
        %1617 = vmatpush1.bf16.msra.mxu0 %v1180
        %1618 = vmatprep.subr.bf16.mxu0 0
        %1619 = vmatpush1.bf16.msra.mxu0 %v1179
        %1620 = vmatprep.subr.bf16.mxu0 0
        %1621 = vmatpush1.bf16.msra.mxu0 %v1178
        %1622 = vmatprep.subr.bf16.mxu0 0
        %1623 = vmatpush1.bf16.msra.mxu0 %v1177
        %1624 = vmatprep.subr.bf16.mxu0 0
        %1625 = vmatpush1.bf16.msra.mxu0 %v1176
        %1626 = vmatprep.subr.bf16.mxu0 0
        %1627 = vmatpush2.bf16.msra.mxu0 %v1191
        %1628 = vmatprep.subr.bf16.mxu0 0
        %1629 = vmatpush2.bf16.msra.mxu0 %v1190
        %1630 = vmatprep.subr.bf16.mxu0 0
        %1631 = vmatpush2.bf16.msra.mxu0 %v1189
        %1632 = vmatprep.subr.bf16.mxu0 0
        %1633 = vmatpush2.bf16.msra.mxu0 %v1188
        %1634 = vmatprep.subr.bf16.mxu0 0
        %1635 = vmatpush2.bf16.msra.mxu0 %v1187
        %1636 = vmatprep.subr.bf16.mxu0 0
        %1637 = vmatpush2.bf16.msra.mxu0 %v1186
        %1638 = vmatprep.subr.bf16.mxu0 0
        %1639 = vmatpush2.bf16.msra.mxu0 %v1185
        %1640 = vmatprep.subr.bf16.mxu0 0
        %1641 = vmatpush2.bf16.msra.mxu0 %v1184
        %1642 = vmatprep.mubr.bf16.mxu0 %v615
        %1643 = vmatmul.mubr.bf16.gmra.mxu0 %v392
        %v1644 = vpop.f32.mrf.mxu0
        %v1645 = vadd.f32 %v1484, %v1644
        %v1646 = vpop.f32.mrf.mxu0
        %v1647 = vpop.f32.mrf.mxu0
        %v1648 = vadd.f32 %v1487, %v1647
        %v1649 = vpop.f32.mrf.mxu0
        %1650 = vmatprep.mubr.bf16.mxu0 %v618
        %1651 = vmatmul.mubr.bf16.gmra.mxu0 %v404
        %v1652 = vpop.f32.mrf.mxu0
        %v1653 = vadd.f32 %v1492, %v1652
        %v1654 = vpop.f32.mrf.mxu0
        %v1655 = vpop.f32.mrf.mxu0
        %v1656 = vadd.f32 %v1495, %v1655
        %v1657 = vpop.f32.mrf.mxu0
        %1658 = vmatprep.mubr.bf16.mxu0 %v621
        %1659 = vmatmul.mubr.bf16.gmra.mxu0 %v416
        %v1660 = vpop.f32.mrf.mxu0
        %v1661 = vadd.f32 %v1500, %v1660
        %v1662 = vpop.f32.mrf.mxu0
        %v1663 = vpop.f32.mrf.mxu0
        %v1664 = vadd.f32 %v1503, %v1663
        %v1665 = vpop.f32.mrf.mxu0
        %1666 = vmatprep.mubr.bf16.mxu0 %v624
        %1667 = vmatmul.mubr.bf16.gmra.mxu0 %v428
        %v1668 = vpop.f32.mrf.mxu0
        %v1669 = vadd.f32 %v1508, %v1668
        %v1670 = vpop.f32.mrf.mxu0
        %v1671 = vpop.f32.mrf.mxu0
        %v1672 = vadd.f32 %v1511, %v1671
        %v1673 = vpop.f32.mrf.mxu0
        %1674 = vmatprep.mubr.bf16.mxu0 %v627
        %1675 = vmatmul.mubr.bf16.gmra.mxu0 %v440
        %v1676 = vpop.f32.mrf.mxu0
        %v1677 = vadd.f32 %v1516, %v1676
        %v1678 = vpop.f32.mrf.mxu0
        %v1679 = vpop.f32.mrf.mxu0
        %v1680 = vadd.f32 %v1519, %v1679
        %v1681 = vpop.f32.mrf.mxu0
        %1682 = vmatprep.mubr.bf16.mxu0 %v630
        %1683 = vmatmul.mubr.bf16.gmra.mxu0 %v452
        %v1684 = vpop.f32.mrf.mxu0
        %v1685 = vadd.f32 %v1524, %v1684
        %v1686 = vpop.f32.mrf.mxu0
        %v1687 = vpop.f32.mrf.mxu0
        %v1688 = vadd.f32 %v1527, %v1687
        %v1689 = vpop.f32.mrf.mxu0
        %1690 = vmatprep.mubr.bf16.mxu0 %v633
        %1691 = vmatmul.mubr.bf16.gmra.mxu0 %v464
        %v1692 = vpop.f32.mrf.mxu0
        %v1693 = vadd.f32 %v1532, %v1692
        %v1694 = vpop.f32.mrf.mxu0
        %v1695 = vpop.f32.mrf.mxu0
        %v1696 = vadd.f32 %v1535, %v1695
        %v1697 = vpop.f32.mrf.mxu0
        %1698 = vmatprep.mubr.bf16.mxu0 %v636
        %1699 = vmatmul.mubr.bf16.gmra.mxu0 %v476
        %v1700 = vpop.f32.mrf.mxu0
        %v1701 = vadd.f32 %v1540, %v1700
        %v1702 = vpop.f32.mrf.mxu0
        %v1703 = vpop.f32.mrf.mxu0
        %v1704 = vadd.f32 %v1543, %v1703
        %v1705 = vpop.f32.mrf.mxu0
        %1706 = vmatprep.mubr.bf16.mxu0 %v639
        %1707 = vmatmul.mubr.bf16.gmra.mxu0 %v488
        %v1708 = vpop.f32.mrf.mxu0
        %v1709 = vadd.f32 %v1548, %v1708
        %v1710 = vpop.f32.mrf.mxu0
        %v1711 = vpop.f32.mrf.mxu0
        %v1712 = vadd.f32 %v1551, %v1711
        %v1713 = vpop.f32.mrf.mxu0
        %1714 = vmatprep.mubr.bf16.mxu0 %v642
        %1715 = vmatmul.mubr.bf16.gmra.mxu0 %v500
        %v1716 = vpop.f32.mrf.mxu0
        %v1717 = vadd.f32 %v1556, %v1716
        %v1718 = vpop.f32.mrf.mxu0
        %v1719 = vpop.f32.mrf.mxu0
        %v1720 = vadd.f32 %v1559, %v1719
        %v1721 = vpop.f32.mrf.mxu0
        %1722 = vmatprep.mubr.bf16.mxu0 %v645
        %1723 = vmatmul.mubr.bf16.gmra.mxu0 %v512
        %v1724 = vpop.f32.mrf.mxu0
        %v1725 = vadd.f32 %v1564, %v1724
        %v1726 = vpop.f32.mrf.mxu0
        %v1727 = vpop.f32.mrf.mxu0
        %v1728 = vadd.f32 %v1567, %v1727
        %v1729 = vpop.f32.mrf.mxu0
        %1730 = vmatprep.mubr.bf16.mxu0 %v648
        %1731 = vmatmul.mubr.bf16.gmra.mxu0 %v524
        %v1732 = vpop.f32.mrf.mxu0
        %v1733 = vadd.f32 %v1572, %v1732
        %v1734 = vpop.f32.mrf.mxu0
        %v1735 = vpop.f32.mrf.mxu0
        %v1736 = vadd.f32 %v1575, %v1735
        %v1737 = vpop.f32.mrf.mxu0
        %1738 = vmatprep.mubr.bf16.mxu0 %v651
        %1739 = vmatmul.mubr.bf16.gmra.mxu0 %v536
        %v1740 = vpop.f32.mrf.mxu0
        %v1741 = vadd.f32 %v1580, %v1740
        %v1742 = vpop.f32.mrf.mxu0
        %v1743 = vpop.f32.mrf.mxu0
        %v1744 = vadd.f32 %v1583, %v1743
        %v1745 = vpop.f32.mrf.mxu0
        %1746 = vmatprep.mubr.bf16.mxu0 %v654
        %1747 = vmatmul.mubr.bf16.gmra.mxu0 %v548
        %v1748 = vpop.f32.mrf.mxu0
        %v1749 = vadd.f32 %v1588, %v1748
        %v1750 = vpop.f32.mrf.mxu0
        %v1751 = vpop.f32.mrf.mxu0
        %v1752 = vadd.f32 %v1591, %v1751
        %v1753 = vpop.f32.mrf.mxu0
        %1754 = vmatprep.mubr.bf16.mxu0 %v657
        %1755 = vmatmul.mubr.bf16.gmra.mxu0 %v560
        %v1756 = vpop.f32.mrf.mxu0
        %v1757 = vadd.f32 %v1596, %v1756
        %v1758 = vpop.f32.mrf.mxu0
        %v1759 = vpop.f32.mrf.mxu0
        %v1760 = vadd.f32 %v1599, %v1759
        %v1761 = vpop.f32.mrf.mxu0
        %1762 = vmatprep.mubr.bf16.mxu0 %v691
        %1763 = vmatmul.mubr.bf16.gmra.mxu0 %v685
        %v1764 = vpop.f32.mrf.mxu0
        %v1765 = vadd.f32 %v1604, %v1764
        %v1766 = vpop.f32.mrf.mxu0
        %v1767 = vpop.f32.mrf.mxu0
        %v1768 = vadd.f32 %v1607, %v1767
        %v1769 = vpop.f32.mrf.mxu0
        %1770 = vdwg.mxu0
        %1771 = vmatprep.subr.bf16.mxu0 0
        %1772 = vmatpush1.bf16.msra.mxu0 %v1199
        %1773 = vmatprep.subr.bf16.mxu0 0
        %1774 = vmatpush1.bf16.msra.mxu0 %v1198
        %1775 = vmatprep.subr.bf16.mxu0 0
        %1776 = vmatpush1.bf16.msra.mxu0 %v1197
        %1777 = vmatprep.subr.bf16.mxu0 0
        %1778 = vmatpush1.bf16.msra.mxu0 %v1196
        %1779 = vmatprep.subr.bf16.mxu0 0
        %1780 = vmatpush1.bf16.msra.mxu0 %v1195
        %1781 = vmatprep.subr.bf16.mxu0 0
        %1782 = vmatpush1.bf16.msra.mxu0 %v1194
        %1783 = vmatprep.subr.bf16.mxu0 0
        %1784 = vmatpush1.bf16.msra.mxu0 %v1193
        %1785 = vmatprep.subr.bf16.mxu0 0
        %1786 = vmatpush1.bf16.msra.mxu0 %v1192
        %1787 = vmatprep.subr.bf16.mxu0 0
        %1788 = vmatpush2.bf16.msra.mxu0 %v1207
        %1789 = vmatprep.subr.bf16.mxu0 0
        %1790 = vmatpush2.bf16.msra.mxu0 %v1206
        %1791 = vmatprep.subr.bf16.mxu0 0
        %1792 = vmatpush2.bf16.msra.mxu0 %v1205
        %1793 = vmatprep.subr.bf16.mxu0 0
        %1794 = vmatpush2.bf16.msra.mxu0 %v1204
        %1795 = vmatprep.subr.bf16.mxu0 0
        %1796 = vmatpush2.bf16.msra.mxu0 %v1203
        %1797 = vmatprep.subr.bf16.mxu0 0
        %1798 = vmatpush2.bf16.msra.mxu0 %v1202
        %1799 = vmatprep.subr.bf16.mxu0 0
        %1800 = vmatpush2.bf16.msra.mxu0 %v1201
        %1801 = vmatprep.subr.bf16.mxu0 0
        %1802 = vmatpush2.bf16.msra.mxu0 %v1200
        %1803 = vmatprep.mubr.bf16.mxu0 %v404
        %1804 = vmatmul.mubr.bf16.gmra.mxu0 %v336
        %v1805 = vpop.f32.mrf.mxu0
        %v1806 = vadd.f32 %v1645, %v1805
        %v1807 = vpop.f32.mrf.mxu0
        %v1808 = vpop.f32.mrf.mxu0
        %v1809 = vadd.f32 %v1648, %v1808
        %v1810 = vpop.f32.mrf.mxu0
        %1811 = vmatprep.mubr.bf16.mxu0 %v416
        %1812 = vmatmul.mubr.bf16.gmra.mxu0 %v338
        %v1813 = vpop.f32.mrf.mxu0
        %v1814 = vadd.f32 %v1653, %v1813
        %v1815 = vpop.f32.mrf.mxu0
        %v1816 = vpop.f32.mrf.mxu0
        %v1817 = vadd.f32 %v1656, %v1816
        %v1818 = vpop.f32.mrf.mxu0
        %1819 = vmatprep.mubr.bf16.mxu0 %v428
        %1820 = vmatmul.mubr.bf16.gmra.mxu0 %v340
        %v1821 = vpop.f32.mrf.mxu0
        %v1822 = vadd.f32 %v1661, %v1821
        %v1823 = vpop.f32.mrf.mxu0
        %v1824 = vpop.f32.mrf.mxu0
        %v1825 = vadd.f32 %v1664, %v1824
        %v1826 = vpop.f32.mrf.mxu0
        %1827 = vmatprep.mubr.bf16.mxu0 %v440
        %1828 = vmatmul.mubr.bf16.gmra.mxu0 %v342
        %v1829 = vpop.f32.mrf.mxu0
        %v1830 = vadd.f32 %v1669, %v1829
        %v1831 = vpop.f32.mrf.mxu0
        %v1832 = vpop.f32.mrf.mxu0
        %v1833 = vadd.f32 %v1672, %v1832
        %v1834 = vpop.f32.mrf.mxu0
        %1835 = vmatprep.mubr.bf16.mxu0 %v452
        %1836 = vmatmul.mubr.bf16.gmra.mxu0 %v344
        %v1837 = vpop.f32.mrf.mxu0
        %v1838 = vadd.f32 %v1677, %v1837
        %v1839 = vpop.f32.mrf.mxu0
        %v1840 = vpop.f32.mrf.mxu0
        %v1841 = vadd.f32 %v1680, %v1840
        %v1842 = vpop.f32.mrf.mxu0
        %1843 = vmatprep.mubr.bf16.mxu0 %v464
        %1844 = vmatmul.mubr.bf16.gmra.mxu0 %v346
        %v1845 = vpop.f32.mrf.mxu0
        %v1846 = vadd.f32 %v1685, %v1845
        %v1847 = vpop.f32.mrf.mxu0
        %v1848 = vpop.f32.mrf.mxu0
        %v1849 = vadd.f32 %v1688, %v1848
        %v1850 = vpop.f32.mrf.mxu0
        %1851 = vmatprep.mubr.bf16.mxu0 %v476
        %1852 = vmatmul.mubr.bf16.gmra.mxu0 %v348
        %v1853 = vpop.f32.mrf.mxu0
        %v1854 = vadd.f32 %v1693, %v1853
        %v1855 = vpop.f32.mrf.mxu0
        %v1856 = vpop.f32.mrf.mxu0
        %v1857 = vadd.f32 %v1696, %v1856
        %v1858 = vpop.f32.mrf.mxu0
        %1859 = vmatprep.mubr.bf16.mxu0 %v488
        %1860 = vmatmul.mubr.bf16.gmra.mxu0 %v350
        %v1861 = vpop.f32.mrf.mxu0
        %v1862 = vadd.f32 %v1701, %v1861
        %v1863 = vpop.f32.mrf.mxu0
        %v1864 = vpop.f32.mrf.mxu0
        %v1865 = vadd.f32 %v1704, %v1864
        %v1866 = vpop.f32.mrf.mxu0
        %1867 = vmatprep.mubr.bf16.mxu0 %v500
        %1868 = vmatmul.mubr.bf16.gmra.mxu0 %v352
        %v1869 = vpop.f32.mrf.mxu0
        %v1870 = vadd.f32 %v1709, %v1869
        %v1871 = vpop.f32.mrf.mxu0
        %v1872 = vpop.f32.mrf.mxu0
        %v1873 = vadd.f32 %v1712, %v1872
        %v1874 = vpop.f32.mrf.mxu0
        %1875 = vmatprep.mubr.bf16.mxu0 %v512
        %1876 = vmatmul.mubr.bf16.gmra.mxu0 %v354
        %v1877 = vpop.f32.mrf.mxu0
        %v1878 = vadd.f32 %v1717, %v1877
        %v1879 = vpop.f32.mrf.mxu0
        %v1880 = vpop.f32.mrf.mxu0
        %v1881 = vadd.f32 %v1720, %v1880
        %v1882 = vpop.f32.mrf.mxu0
        %1883 = vmatprep.mubr.bf16.mxu0 %v524
        %1884 = vmatmul.mubr.bf16.gmra.mxu0 %v356
        %v1885 = vpop.f32.mrf.mxu0
        %v1886 = vadd.f32 %v1725, %v1885
        %v1887 = vpop.f32.mrf.mxu0
        %v1888 = vpop.f32.mrf.mxu0
        %v1889 = vadd.f32 %v1728, %v1888
        %v1890 = vpop.f32.mrf.mxu0
        %1891 = vmatprep.mubr.bf16.mxu0 %v536
        %1892 = vmatmul.mubr.bf16.gmra.mxu0 %v358
        %v1893 = vpop.f32.mrf.mxu0
        %v1894 = vadd.f32 %v1733, %v1893
        %v1895 = vpop.f32.mrf.mxu0
        %v1896 = vpop.f32.mrf.mxu0
        %v1897 = vadd.f32 %v1736, %v1896
        %v1898 = vpop.f32.mrf.mxu0
        %1899 = vmatprep.mubr.bf16.mxu0 %v548
        %1900 = vmatmul.mubr.bf16.gmra.mxu0 %v360
        %v1901 = vpop.f32.mrf.mxu0
        %v1902 = vadd.f32 %v1741, %v1901
        %v1903 = vpop.f32.mrf.mxu0
        %v1904 = vpop.f32.mrf.mxu0
        %v1905 = vadd.f32 %v1744, %v1904
        %v1906 = vpop.f32.mrf.mxu0
        %1907 = vmatprep.mubr.bf16.mxu0 %v560
        %1908 = vmatmul.mubr.bf16.gmra.mxu0 %v362
        %v1909 = vpop.f32.mrf.mxu0
        %v1910 = vadd.f32 %v1749, %v1909
        %v1911 = vpop.f32.mrf.mxu0
        %v1912 = vpop.f32.mrf.mxu0
        %v1913 = vadd.f32 %v1752, %v1912
        %v1914 = vpop.f32.mrf.mxu0
        %1915 = vmatprep.mubr.bf16.mxu0 %v685
        %1916 = vmatmul.mubr.bf16.gmra.mxu0 %v364
        %v1917 = vpop.f32.mrf.mxu0
        %v1918 = vadd.f32 %v1757, %v1917
        %v1919 = vpop.f32.mrf.mxu0
        %v1920 = vpop.f32.mrf.mxu0
        %v1921 = vadd.f32 %v1760, %v1920
        %v1922 = vpop.f32.mrf.mxu0
        %1923 = vmatprep.mubr.bf16.mxu0 %v704
        %1924 = vmatmul.mubr.bf16.gmra.mxu0 %v366
        %v1925 = vpop.f32.mrf.mxu0
        %v1926 = vadd.f32 %v1765, %v1925
        %v1927 = vpop.f32.mrf.mxu0
        %v1928 = vpop.f32.mrf.mxu0
        %v1929 = vadd.f32 %v1768, %v1928
        %v1930 = vpop.f32.mrf.mxu0
        %1931 = vdwg.mxu0
        %1932 = vmatprep.subr.bf16.mxu0 0
        %1933 = vmatpush1.bf16.msra.mxu0 %v1215
        %1934 = vmatprep.subr.bf16.mxu0 0
        %1935 = vmatpush1.bf16.msra.mxu0 %v1214
        %1936 = vmatprep.subr.bf16.mxu0 0
        %1937 = vmatpush1.bf16.msra.mxu0 %v1213
        %1938 = vmatprep.subr.bf16.mxu0 0
        %1939 = vmatpush1.bf16.msra.mxu0 %v1212
        %1940 = vmatprep.subr.bf16.mxu0 0
        %1941 = vmatpush1.bf16.msra.mxu0 %v1211
        %1942 = vmatprep.subr.bf16.mxu0 0
        %1943 = vmatpush1.bf16.msra.mxu0 %v1210
        %1944 = vmatprep.subr.bf16.mxu0 0
        %1945 = vmatpush1.bf16.msra.mxu0 %v1209
        %1946 = vmatprep.subr.bf16.mxu0 0
        %1947 = vmatpush1.bf16.msra.mxu0 %v1208
        %1948 = vmatprep.subr.bf16.mxu0 0
        %1949 = vmatpush2.bf16.msra.mxu0 0
        %1950 = vmatprep.subr.bf16.mxu0 0
        %1951 = vmatpush2.bf16.msra.mxu0 0
        %1952 = vmatprep.subr.bf16.mxu0 0
        %1953 = vmatpush2.bf16.msra.mxu0 0
        %1954 = vmatprep.subr.bf16.mxu0 0
        %1955 = vmatpush2.bf16.msra.mxu0 0
        %1956 = vmatprep.subr.bf16.mxu0 0
        %1957 = vmatpush2.bf16.msra.mxu0 0
        %1958 = vmatprep.subr.bf16.mxu0 0
        %1959 = vmatpush2.bf16.msra.mxu0 0
        %1960 = vmatprep.subr.bf16.mxu0 0
        %1961 = vmatpush2.bf16.msra.mxu0 0
        %1962 = vmatprep.subr.bf16.mxu0 0
        %1963 = vmatpush2.bf16.msra.mxu0 0
        %1964 = vmatprep.mubr.bf16.mxu0 0
        %1965 = vmatmul.mubr.bf16.gmra.mxu0 %v618
        %v1966 = vpop.f32.mrf.mxu0
        %v1967 = vadd.f32 %v1806, %v1966
        %v1968 = vpop.f32.mrf.mxu0
        %v1969 = vpop.f32.mrf.mxu0
        %v1970 = vadd.f32 %v1809, %v1969
        %v1971 = vpop.f32.mrf.mxu0
        %1972 = vmatprep.mubr.bf16.mxu0 0
        %1973 = vmatmul.mubr.bf16.gmra.mxu0 %v621
        %v1974 = vpop.f32.mrf.mxu0
        %v1975 = vadd.f32 %v1814, %v1974
        %v1976 = vpop.f32.mrf.mxu0
        %v1977 = vpop.f32.mrf.mxu0
        %v1978 = vadd.f32 %v1817, %v1977
        %v1979 = vpop.f32.mrf.mxu0
        %1980 = vmatprep.mubr.bf16.mxu0 0
        %1981 = vmatmul.mubr.bf16.gmra.mxu0 %v624
        %v1982 = vpop.f32.mrf.mxu0
        %v1983 = vadd.f32 %v1822, %v1982
        %v1984 = vpop.f32.mrf.mxu0
        %v1985 = vpop.f32.mrf.mxu0
        %v1986 = vadd.f32 %v1825, %v1985
        %v1987 = vpop.f32.mrf.mxu0
        %1988 = vmatprep.mubr.bf16.mxu0 0
        %1989 = vmatmul.mubr.bf16.gmra.mxu0 %v627
        %v1990 = vpop.f32.mrf.mxu0
        %v1991 = vadd.f32 %v1830, %v1990
        %v1992 = vpop.f32.mrf.mxu0
        %v1993 = vpop.f32.mrf.mxu0
        %v1994 = vadd.f32 %v1833, %v1993
        %v1995 = vpop.f32.mrf.mxu0
        %1996 = vmatprep.mubr.bf16.mxu0 0
        %1997 = vmatmul.mubr.bf16.gmra.mxu0 %v630
        %v1998 = vpop.f32.mrf.mxu0
        %v1999 = vadd.f32 %v1838, %v1998
        %v2000 = vpop.f32.mrf.mxu0
        %v2001 = vpop.f32.mrf.mxu0
        %v2002 = vadd.f32 %v1841, %v2001
        %v2003 = vpop.f32.mrf.mxu0
        %2004 = vmatprep.mubr.bf16.mxu0 0
        %2005 = vmatmul.mubr.bf16.gmra.mxu0 %v633
        %v2006 = vpop.f32.mrf.mxu0
        %v2007 = vadd.f32 %v1846, %v2006
        %v2008 = vpop.f32.mrf.mxu0
        %v2009 = vpop.f32.mrf.mxu0
        %v2010 = vadd.f32 %v1849, %v2009
        %v2011 = vpop.f32.mrf.mxu0
        %2012 = vmatprep.mubr.bf16.mxu0 0
        %2013 = vmatmul.mubr.bf16.gmra.mxu0 %v636
        %v2014 = vpop.f32.mrf.mxu0
        %v2015 = vadd.f32 %v1854, %v2014
        %v2016 = vpop.f32.mrf.mxu0
        %v2017 = vpop.f32.mrf.mxu0
        %v2018 = vadd.f32 %v1857, %v2017
        %v2019 = vpop.f32.mrf.mxu0
        %2020 = vmatprep.mubr.bf16.mxu0 0
        %2021 = vmatmul.mubr.bf16.gmra.mxu0 %v639
        %v2022 = vpop.f32.mrf.mxu0
        %v2023 = vadd.f32 %v1862, %v2022
        %v2024 = vpop.f32.mrf.mxu0
        %v2025 = vpop.f32.mrf.mxu0
        %v2026 = vadd.f32 %v1865, %v2025
        %v2027 = vpop.f32.mrf.mxu0
        %2028 = vmatprep.mubr.bf16.mxu0 0
        %2029 = vmatmul.mubr.bf16.gmra.mxu0 %v642
        %v2030 = vpop.f32.mrf.mxu0
        %v2031 = vadd.f32 %v1870, %v2030
        %v2032 = vpop.f32.mrf.mxu0
        %v2033 = vpop.f32.mrf.mxu0
        %v2034 = vadd.f32 %v1873, %v2033
        %v2035 = vpop.f32.mrf.mxu0
        %2036 = vmatprep.mubr.bf16.mxu0 0
        %2037 = vmatmul.mubr.bf16.gmra.mxu0 %v645
        %v2038 = vpop.f32.mrf.mxu0
        %v2039 = vadd.f32 %v1878, %v2038
        %v2040 = vpop.f32.mrf.mxu0
        %v2041 = vpop.f32.mrf.mxu0
        %v2042 = vadd.f32 %v1881, %v2041
        %v2043 = vpop.f32.mrf.mxu0
        %2044 = vmatprep.mubr.bf16.mxu0 0
        %2045 = vmatmul.mubr.bf16.gmra.mxu0 %v648
        %v2046 = vpop.f32.mrf.mxu0
        %v2047 = vadd.f32 %v1886, %v2046
        %v2048 = vpop.f32.mrf.mxu0
        %v2049 = vpop.f32.mrf.mxu0
        %v2050 = vadd.f32 %v1889, %v2049
        %v2051 = vpop.f32.mrf.mxu0
        %2052 = vmatprep.mubr.bf16.mxu0 0
        %2053 = vmatmul.mubr.bf16.gmra.mxu0 %v651
        %v2054 = vpop.f32.mrf.mxu0
        %v2055 = vadd.f32 %v1894, %v2054
        %v2056 = vpop.f32.mrf.mxu0
        %v2057 = vpop.f32.mrf.mxu0
        %v2058 = vadd.f32 %v1897, %v2057
        %v2059 = vpop.f32.mrf.mxu0
        %2060 = vmatprep.mubr.bf16.mxu0 0
        %2061 = vmatmul.mubr.bf16.gmra.mxu0 %v654
        %v2062 = vpop.f32.mrf.mxu0
        %v2063 = vadd.f32 %v1902, %v2062
        %v2064 = vpop.f32.mrf.mxu0
        %v2065 = vpop.f32.mrf.mxu0
        %v2066 = vadd.f32 %v1905, %v2065
        %v2067 = vpop.f32.mrf.mxu0
        %2068 = vmatprep.mubr.bf16.mxu0 0
        %2069 = vmatmul.mubr.bf16.gmra.mxu0 %v657
        %v2070 = vpop.f32.mrf.mxu0
        %v2071 = vadd.f32 %v1910, %v2070
        %v2072 = vpop.f32.mrf.mxu0
        %v2073 = vpop.f32.mrf.mxu0
        %v2074 = vadd.f32 %v1913, %v2073
        %v2075 = vpop.f32.mrf.mxu0
        %2076 = vmatprep.mubr.bf16.mxu0 0
        %2077 = vmatmul.mubr.bf16.gmra.mxu0 %v691
        %v2078 = vpop.f32.mrf.mxu0
        %v2079 = vadd.f32 %v1918, %v2078
        %v2080 = vpop.f32.mrf.mxu0
        %v2081 = vpop.f32.mrf.mxu0
        %v2082 = vadd.f32 %v1921, %v2081
        %v2083 = vpop.f32.mrf.mxu0
        %2084 = vmatprep.mubr.bf16.mxu0 0
        %2085 = vmatmul.mubr.bf16.gmra.mxu0 %v710
        %v2086 = vpop.f32.mrf.mxu0
        %v2087 = vadd.f32 %v1926, %v2086
        %v2088 = vpop.f32.mrf.mxu0
        %v2089 = vpop.f32.mrf.mxu0
        %v2090 = vadd.f32 %v1929, %v2089
        %v2091 = vpop.f32.mrf.mxu0
        %2092 = vdwg.mxu0
        %2093 = vst [vmem:[#allocation2] sm:$0xff] 0.0
        %2094 = vst [vmem:[#allocation2 + $0x8] sm:$0xff] 0.0
        %2095 = vst [vmem:[#allocation2 + $0x10] sm:$0x3] 0.0
        %2096 = vst [vmem:[#allocation2 + $0x18] sm:$0xff] 0.0
        %2097 = vst [vmem:[#allocation2 + $0x20] sm:$0xff] 0.0
        %2098 = vst [vmem:[#allocation2 + $0x28] sm:$0x3] 0.0
        %2099 = vst [vmem:[#allocation2 + $0x30] sm:$0xff] 0.0
        %2100 = vst [vmem:[#allocation2 + $0x38] sm:$0xff] 0.0
        %2101 = vst [vmem:[#allocation2 + $0x40] sm:$0x3] 0.0
        %2102 = vst [vmem:[#allocation2 + $0x48] sm:$0xff] 0.0
        %2103 = vst [vmem:[#allocation2 + $0x50] sm:$0xff] 0.0
        %2104 = vst [vmem:[#allocation2 + $0x58] sm:$0x3] 0.0
        %2105 = vst [vmem:[#allocation2 + $0x60] sm:$0xff] 0.0
        %2106 = vst [vmem:[#allocation2 + $0x68] sm:$0xff] 0.0
        %2107 = vst [vmem:[#allocation2 + $0x70] sm:$0x3] 0.0
        %2108 = vst [vmem:[#allocation2 + $0x78] sm:$0xff] 0.0
        %2109 = vst [vmem:[#allocation2 + $0x80] sm:$0xff] 0.0
        %2110 = vst [vmem:[#allocation2 + $0x88] sm:$0x3] 0.0
        %2111 = vst [vmem:[#allocation2 + $0x90] sm:$0xff] 0.0
        %2112 = vst [vmem:[#allocation2 + $0x98] sm:$0xff] 0.0
        %2113 = vst [vmem:[#allocation2 + $0xa0] sm:$0x3] 0.0
        %2114 = vst [vmem:[#allocation2 + $0xa8] sm:$0xff] 0.0
        %2115 = vst [vmem:[#allocation2 + $0xb0] sm:$0xff] 0.0
        %2116 = vst [vmem:[#allocation2 + $0xb8] sm:$0x3] 0.0
        %2117 = vst [vmem:[#allocation2 + $0xc0] sm:$0xff] 0.0
        %2118 = vst [vmem:[#allocation2 + $0xc8] sm:$0xff] 0.0
        %2119 = vst [vmem:[#allocation2 + $0xd0] sm:$0x3] 0.0
        %2120 = vst [vmem:[#allocation2 + $0xd8] sm:$0xff] 0.0
        %2121 = vst [vmem:[#allocation2 + $0xe0] sm:$0xff] 0.0
        %2122 = vst [vmem:[#allocation2 + $0xe8] sm:$0x3] 0.0
        %2123 = vst [vmem:[#allocation2 + $0xf0] sm:$0xff] 0.0
        %2124 = vst [vmem:[#allocation2 + $0xf8] sm:$0xff] 0.0
        %2125 = vst [vmem:[#allocation2 + $0x100] sm:$0x3] 0.0
        %2126 = vst [vmem:[#allocation2 + $0x108] sm:$0xff] 0.0
        %2127 = vst [vmem:[#allocation2 + $0x110] sm:$0xff] 0.0
        %2128 = vst [vmem:[#allocation2 + $0x118] sm:$0x3] 0.0
        %2129 = vst [vmem:[#allocation2 + $0x120] sm:$0xff] 0.0
        %2130 = vst [vmem:[#allocation2 + $0x128] sm:$0xff] 0.0
        %2131 = vst [vmem:[#allocation2 + $0x130] sm:$0x3] 0.0
        %2132 = vst [vmem:[#allocation2 + $0x138] sm:$0xff] 0.0
        %2133 = vst [vmem:[#allocation2 + $0x140] sm:$0xff] 0.0
        %2134 = vst [vmem:[#allocation2 + $0x148] sm:$0x3] 0.0
        %2135 = vst [vmem:[#allocation2 + $0x150] sm:$0xff] 0.0
        %2136 = vst [vmem:[#allocation2 + $0x158] sm:$0xff] 0.0
        %2137 = vst [vmem:[#allocation2 + $0x160] sm:$0x3] 0.0
        %2138 = vst [vmem:[#allocation2 + $0x168] sm:$0xff] 0.0
        %2139 = vst [vmem:[#allocation2 + $0x170] sm:$0xff] 0.0
        %2140 = vst [vmem:[#allocation2 + $0x178] sm:$0x3] 0.0
        %2141 = vst [vmem:[#allocation2 + $0x180] sm:$0xff] 0.0
        %2142 = vst [vmem:[#allocation2 + $0x188] sm:$0xff] 0.0
        %2143 = vst [vmem:[#allocation2 + $0x190] sm:$0x3] 0.0
        %2144 = vst [vmem:[#allocation2 + $0x198] sm:$0xff] 0.0
        %2145 = vst [vmem:[#allocation2 + $0x1a0] sm:$0xff] 0.0
        %2146 = vst [vmem:[#allocation2 + $0x1a8] sm:$0x3] 0.0
        %v2147 = vld [vmem:[%s2] sm:$0x1]
        %v2149 = vlaneseq
        %v2150 = vshrl.u32 %v2149, 7
        %v2151 = vsub.s32 0, %v2150
        %v2152 = vrot.slane %v2147, %v2151
        %v2154 = vmul.f32 %v1967, %v2152
        %v2155 = vmul.f32 %v1970, %v2152
        %v2156 = vmul.f32 %v1975, %v2152
        %v2157 = vmul.f32 %v1978, %v2152
        %v2158 = vmul.f32 %v1983, %v2152
        %v2159 = vmul.f32 %v1986, %v2152
        %v2160 = vmul.f32 %v1991, %v2152
        %v2161 = vmul.f32 %v1994, %v2152
        %v2162 = vmul.f32 %v1999, %v2152
        %v2163 = vmul.f32 %v2002, %v2152
        %v2164 = vmul.f32 %v2007, %v2152
        %v2165 = vmul.f32 %v2010, %v2152
        %v2166 = vmul.f32 %v2015, %v2152
        %v2167 = vmul.f32 %v2018, %v2152
        %v2168 = vmul.f32 %v2023, %v2152
        %v2169 = vmul.f32 %v2026, %v2152
        %v2170 = vmul.f32 %v2031, %v2152
        %v2171 = vmul.f32 %v2034, %v2152
        %v2172 = vmul.f32 %v2039, %v2152
        %v2173 = vmul.f32 %v2042, %v2152
        %v2174 = vmul.f32 %v2047, %v2152
        %v2175 = vmul.f32 %v2050, %v2152
        %v2176 = vmul.f32 %v2055, %v2152
        %v2177 = vmul.f32 %v2058, %v2152
        %v2178 = vmul.f32 %v2063, %v2152
        %v2179 = vmul.f32 %v2066, %v2152
        %v2180 = vmul.f32 %v2071, %v2152
        %v2181 = vmul.f32 %v2074, %v2152
        %v2182 = vmul.f32 %v2079, %v2152
        %v2183 = vmul.f32 %v2082, %v2152
        %v2184 = vmul.f32 %v2087, %v2152
        %v2185 = vmul.f32 %v2090, %v2152
        %v2186 = vld [vmem:[%s3] sm:$0x1]
        %v2188 = vlaneseq
        %v2189 = vshrl.u32 %v2188, 7
        %v2190 = vsub.s32 0, %v2189
        %v2191 = vrot.slane %v2186, %v2190
        %v2193 = vadd.f32 %v2154, %v2191
        %v2194 = vadd.f32 %v2155, %v2191
        %v2195 = vadd.f32 %v2156, %v2191
        %v2196 = vadd.f32 %v2157, %v2191
        %v2197 = vadd.f32 %v2158, %v2191
        %v2198 = vadd.f32 %v2159, %v2191
        %v2199 = vadd.f32 %v2160, %v2191
        %v2200 = vadd.f32 %v2161, %v2191
        %v2201 = vadd.f32 %v2162, %v2191
        %v2202 = vadd.f32 %v2163, %v2191
        %v2203 = vadd.f32 %v2164, %v2191
        %v2204 = vadd.f32 %v2165, %v2191
        %v2205 = vadd.f32 %v2166, %v2191
        %v2206 = vadd.f32 %v2167, %v2191
        %v2207 = vadd.f32 %v2168, %v2191
        %v2208 = vadd.f32 %v2169, %v2191
        %v2209 = vadd.f32 %v2170, %v2191
        %v2210 = vadd.f32 %v2171, %v2191
        %v2211 = vadd.f32 %v2172, %v2191
        %v2212 = vadd.f32 %v2173, %v2191
        %v2213 = vadd.f32 %v2174, %v2191
        %v2214 = vadd.f32 %v2175, %v2191
        %v2215 = vadd.f32 %v2176, %v2191
        %v2216 = vadd.f32 %v2177, %v2191
        %v2217 = vadd.f32 %v2178, %v2191
        %v2218 = vadd.f32 %v2179, %v2191
        %v2219 = vadd.f32 %v2180, %v2191
        %v2220 = vadd.f32 %v2181, %v2191
        %v2221 = vadd.f32 %v2182, %v2191
        %v2222 = vadd.f32 %v2183, %v2191
        %v2223 = vadd.f32 %v2184, %v2191
        %v2224 = vadd.f32 %v2185, %v2191
        %v2225 = vmax.f32 %v2193, 0.0
        %v2226 = vmax.f32 %v2194, 0.0
        %v2227 = vmax.f32 %v2195, 0.0
        %v2228 = vmax.f32 %v2196, 0.0
        %v2229 = vmax.f32 %v2197, 0.0
        %v2230 = vmax.f32 %v2198, 0.0
        %v2231 = vmax.f32 %v2199, 0.0
        %v2232 = vmax.f32 %v2200, 0.0
        %v2233 = vmax.f32 %v2201, 0.0
        %v2234 = vmax.f32 %v2202, 0.0
        %v2235 = vmax.f32 %v2203, 0.0
        %v2236 = vmax.f32 %v2204, 0.0
        %v2237 = vmax.f32 %v2205, 0.0
        %v2238 = vmax.f32 %v2206, 0.0
        %v2239 = vmax.f32 %v2207, 0.0
        %v2240 = vmax.f32 %v2208, 0.0
        %v2241 = vmax.f32 %v2209, 0.0
        %v2242 = vmax.f32 %v2210, 0.0
        %v2243 = vmax.f32 %v2211, 0.0
        %v2244 = vmax.f32 %v2212, 0.0
        %v2245 = vmax.f32 %v2213, 0.0
        %v2246 = vmax.f32 %v2214, 0.0
        %v2247 = vmax.f32 %v2215, 0.0
        %v2248 = vmax.f32 %v2216, 0.0
        %v2249 = vmax.f32 %v2217, 0.0
        %v2250 = vmax.f32 %v2218, 0.0
        %v2251 = vmax.f32 %v2219, 0.0
        %v2252 = vmax.f32 %v2220, 0.0
        %v2253 = vmax.f32 %v2221, 0.0
        %v2254 = vmax.f32 %v2222, 0.0
        %v2255 = vmax.f32 %v2223, 0.0
        %v2256 = vmax.f32 %v2224, 0.0
        %s2257 = scalar_lea.vmem [#allocation2], 24
        %2258 = vst [vmem:[%s2257 + $0x1] sm:$0xff] %v2225
        %2259 = vst [vmem:[%s2257 + $0x9] sm:$0xff] %v2226
        %2260 = vst [vmem:[%s2257 + $0x19] sm:$0xff] %v2227
        %2261 = vst [vmem:[%s2257 + $0x21] sm:$0xff] %v2228
        %2262 = vst [vmem:[%s2257 + $0x31] sm:$0xff] %v2229
        %2263 = vst [vmem:[%s2257 + $0x39] sm:$0xff] %v2230
        %2264 = vst [vmem:[%s2257 + $0x49] sm:$0xff] %v2231
        %2265 = vst [vmem:[%s2257 + $0x51] sm:$0xff] %v2232
        %2266 = vst [vmem:[%s2257 + $0x61] sm:$0xff] %v2233
        %2267 = vst [vmem:[%s2257 + $0x69] sm:$0xff] %v2234
        %2268 = vst [vmem:[%s2257 + $0x79] sm:$0xff] %v2235
        %2269 = vst [vmem:[%s2257 + $0x81] sm:$0xff] %v2236
        %2270 = vst [vmem:[%s2257 + $0x91] sm:$0xff] %v2237
        %2271 = vst [vmem:[%s2257 + $0x99] sm:$0xff] %v2238
        %2272 = vst [vmem:[%s2257 + $0xa9] sm:$0xff] %v2239
        %2273 = vst [vmem:[%s2257 + $0xb1] sm:$0xff] %v2240
        %2274 = vst [vmem:[%s2257 + $0xc1] sm:$0xff] %v2241
        %2275 = vst [vmem:[%s2257 + $0xc9] sm:$0xff] %v2242
        %2276 = vst [vmem:[%s2257 + $0xd9] sm:$0xff] %v2243
        %2277 = vst [vmem:[%s2257 + $0xe1] sm:$0xff] %v2244
        %2278 = vst [vmem:[%s2257 + $0xf1] sm:$0xff] %v2245
        %2279 = vst [vmem:[%s2257 + $0xf9] sm:$0xff] %v2246
        %2280 = vst [vmem:[%s2257 + $0x109] sm:$0xff] %v2247
        %2281 = vst [vmem:[%s2257 + $0x111] sm:$0xff] %v2248
        %2282 = vst [vmem:[%s2257 + $0x121] sm:$0xff] %v2249
        %2283 = vst [vmem:[%s2257 + $0x129] sm:$0xff] %v2250
        %2284 = vst [vmem:[%s2257 + $0x139] sm:$0xff] %v2251
        %2285 = vst [vmem:[%s2257 + $0x141] sm:$0xff] %v2252
        %2286 = vst [vmem:[%s2257 + $0x151] sm:$0xff] %v2253
        %2287 = vst [vmem:[%s2257 + $0x159] sm:$0xff] %v2254
        %2288 = vst [vmem:[%s2257 + $0x169] sm:$0xff] %v2255
        %2289 = vst [vmem:[%s2257 + $0x171] sm:$0xff] %v2256
        %v2290 = vld [vmem:[#allocation2] sm:$0xff]
        %v2291 = vld [vmem:[#allocation2 + $0x8] sm:$0xff]
        %v2292 = vld [vmem:[#allocation2 + $0x10] sm:$0x3]
        %v2293 = vld [vmem:[#allocation2 + $0x18] sm:$0xff]
        %v2294 = vld [vmem:[#allocation2 + $0x20] sm:$0xff]
        %v2295 = vld [vmem:[#allocation2 + $0x28] sm:$0x3]
        %v2296 = vld [vmem:[#allocation2 + $0x30] sm:$0xff]
        %v2297 = vld [vmem:[#allocation2 + $0x38] sm:$0xff]
        %v2298 = vld [vmem:[#allocation2 + $0x40] sm:$0x3]
        %v2299 = vld [vmem:[#allocation2 + $0x48] sm:$0xff]
        %v2300 = vld [vmem:[#allocation2 + $0x50] sm:$0xff]
        %v2301 = vld [vmem:[#allocation2 + $0x58] sm:$0x3]
        %v2302 = vld [vmem:[#allocation2 + $0x60] sm:$0xff]
        %v2303 = vld [vmem:[#allocation2 + $0x68] sm:$0xff]
        %v2304 = vld [vmem:[#allocation2 + $0x70] sm:$0x3]
        %v2305 = vld [vmem:[#allocation2 + $0x78] sm:$0xff]
        %v2306 = vld [vmem:[#allocation2 + $0x80] sm:$0xff]
        %v2307 = vld [vmem:[#allocation2 + $0x88] sm:$0x3]
        %v2308 = vld [vmem:[#allocation2 + $0x90] sm:$0xff]
        %v2309 = vld [vmem:[#allocation2 + $0x98] sm:$0xff]
        %v2310 = vld [vmem:[#allocation2 + $0xa0] sm:$0x3]
        %v2311 = vld [vmem:[#allocation2 + $0xa8] sm:$0xff]
        %v2312 = vld [vmem:[#allocation2 + $0xb0] sm:$0xff]
        %v2313 = vld [vmem:[#allocation2 + $0xb8] sm:$0x3]
        %v2314 = vld [vmem:[#allocation2 + $0xc0] sm:$0xff]
        %v2315 = vld [vmem:[#allocation2 + $0xc8] sm:$0xff]
        %v2316 = vld [vmem:[#allocation2 + $0xd0] sm:$0x3]
        %v2317 = vld [vmem:[#allocation2 + $0xd8] sm:$0xff]
        %v2318 = vld [vmem:[#allocation2 + $0xe0] sm:$0xff]
        %v2319 = vld [vmem:[#allocation2 + $0xe8] sm:$0x3]
        %v2320 = vld [vmem:[#allocation2 + $0xf0] sm:$0xff]
        %v2321 = vld [vmem:[#allocation2 + $0xf8] sm:$0xff]
        %v2322 = vld [vmem:[#allocation2 + $0x100] sm:$0x3]
        %v2323 = vld [vmem:[#allocation2 + $0x108] sm:$0xff]
        %v2324 = vld [vmem:[#allocation2 + $0x110] sm:$0xff]
        %v2325 = vld [vmem:[#allocation2 + $0x118] sm:$0x3]
        %v2326 = vld [vmem:[#allocation2 + $0x120] sm:$0xff]
        %v2327 = vld [vmem:[#allocation2 + $0x128] sm:$0xff]
        %v2328 = vld [vmem:[#allocation2 + $0x130] sm:$0x3]
        %v2329 = vld [vmem:[#allocation2 + $0x138] sm:$0xff]
        %v2330 = vld [vmem:[#allocation2 + $0x140] sm:$0xff]
        %v2331 = vld [vmem:[#allocation2 + $0x148] sm:$0x3]
        %v2332 = vld [vmem:[#allocation2 + $0x150] sm:$0xff]
        %v2333 = vld [vmem:[#allocation2 + $0x158] sm:$0xff]
        %v2334 = vld [vmem:[#allocation2 + $0x160] sm:$0x3]
        %v2335 = vld [vmem:[#allocation2 + $0x168] sm:$0xff]
        %v2336 = vld [vmem:[#allocation2 + $0x170] sm:$0xff]
        %v2337 = vld [vmem:[#allocation2 + $0x178] sm:$0x3]
        %v2338 = vld [vmem:[#allocation2 + $0x180] sm:$0xff]
        %v2339 = vld [vmem:[#allocation2 + $0x188] sm:$0xff]
        %v2340 = vld [vmem:[#allocation2 + $0x190] sm:$0x3]
        %v2341 = vld [vmem:[#allocation2 + $0x198] sm:$0xff]
        %v2342 = vld [vmem:[#allocation2 + $0x1a0] sm:$0xff]
        %v2343 = vld [vmem:[#allocation2 + $0x1a8] sm:$0x3]
        %v2344 = vpack.c.bf16 %v2291, %v2290
        %v2345 = vpack.c.bf16 %v2292, %v2292
        %v2346 = vpack.c.bf16 %v2294, %v2293
        %v2347 = vpack.c.bf16 %v2295, %v2295
        %v2348 = vpack.c.bf16 %v2297, %v2296
        %v2349 = vpack.c.bf16 %v2298, %v2298
        %v2350 = vpack.c.bf16 %v2300, %v2299
        %v2351 = vpack.c.bf16 %v2301, %v2301
        %v2352 = vpack.c.bf16 %v2303, %v2302
        %v2353 = vpack.c.bf16 %v2304, %v2304
        %v2354 = vpack.c.bf16 %v2306, %v2305
        %v2355 = vpack.c.bf16 %v2307, %v2307
        %v2356 = vpack.c.bf16 %v2309, %v2308
        %v2357 = vpack.c.bf16 %v2310, %v2310
        %v2358 = vpack.c.bf16 %v2312, %v2311
        %v2359 = vpack.c.bf16 %v2313, %v2313
        %v2360 = vpack.c.bf16 %v2315, %v2314
        %v2361 = vpack.c.bf16 %v2316, %v2316
        %v2362 = vpack.c.bf16 %v2318, %v2317
        %v2363 = vpack.c.bf16 %v2319, %v2319
        %v2364 = vpack.c.bf16 %v2321, %v2320
        %v2365 = vpack.c.bf16 %v2322, %v2322
        %v2366 = vpack.c.bf16 %v2324, %v2323
        %v2367 = vpack.c.bf16 %v2325, %v2325
        %v2368 = vpack.c.bf16 %v2327, %v2326
        %v2369 = vpack.c.bf16 %v2328, %v2328
        %v2370 = vpack.c.bf16 %v2330, %v2329
        %v2371 = vpack.c.bf16 %v2331, %v2331
        %v2372 = vpack.c.bf16 %v2333, %v2332
        %v2373 = vpack.c.bf16 %v2334, %v2334
        %v2374 = vpack.c.bf16 %v2336, %v2335
        %v2375 = vpack.c.bf16 %v2337, %v2337
        %v2376 = vpack.c.bf16 %v2339, %v2338
        %v2377 = vpack.c.bf16 %v2340, %v2340
        %v2378 = vpack.c.bf16 %v2342, %v2341
        %v2379 = vpack.c.bf16 %v2343, %v2343
        %v2381 = vshrl.u32 %v2344, 16
        %v2383 = vshll.u32 %v2344, 16
        %v2385 = vrot.slane %v2383, 1
        %v2386 = vor.u32 %v2381, %v2385
        %v2388 = vshll.u32 %v2345, 16
        %v2390 = vrot.slane %v2388, 1
        %v2391 = vsel %vm368, %v2386, %v2390
        %v2393 = vshrl.u32 %v2346, 16
        %v2395 = vshll.u32 %v2346, 16
        %v2397 = vrot.slane %v2395, 1
        %v2398 = vor.u32 %v2393, %v2397
        %v2400 = vshll.u32 %v2347, 16
        %v2402 = vrot.slane %v2400, 1
        %v2403 = vsel %vm368, %v2398, %v2402
        %v2405 = vshrl.u32 %v2348, 16
        %v2407 = vshll.u32 %v2348, 16
        %v2409 = vrot.slane %v2407, 1
        %v2410 = vor.u32 %v2405, %v2409
        %v2412 = vshll.u32 %v2349, 16
        %v2414 = vrot.slane %v2412, 1
        %v2415 = vsel %vm368, %v2410, %v2414
        %v2417 = vshrl.u32 %v2350, 16
        %v2419 = vshll.u32 %v2350, 16
        %v2421 = vrot.slane %v2419, 1
        %v2422 = vor.u32 %v2417, %v2421
        %v2424 = vshll.u32 %v2351, 16
        %v2426 = vrot.slane %v2424, 1
        %v2427 = vsel %vm368, %v2422, %v2426
        %v2429 = vshrl.u32 %v2352, 16
        %v2431 = vshll.u32 %v2352, 16
        %v2433 = vrot.slane %v2431, 1
        %v2434 = vor.u32 %v2429, %v2433
        %v2436 = vshll.u32 %v2353, 16
        %v2438 = vrot.slane %v2436, 1
        %v2439 = vsel %vm368, %v2434, %v2438
        %v2441 = vshrl.u32 %v2354, 16
        %v2443 = vshll.u32 %v2354, 16
        %v2445 = vrot.slane %v2443, 1
        %v2446 = vor.u32 %v2441, %v2445
        %v2448 = vshll.u32 %v2355, 16
        %v2450 = vrot.slane %v2448, 1
        %v2451 = vsel %vm368, %v2446, %v2450
        %v2453 = vshrl.u32 %v2356, 16
        %v2455 = vshll.u32 %v2356, 16
        %v2457 = vrot.slane %v2455, 1
        %v2458 = vor.u32 %v2453, %v2457
        %v2460 = vshll.u32 %v2357, 16
        %v2462 = vrot.slane %v2460, 1
        %v2463 = vsel %vm368, %v2458, %v2462
        %v2465 = vshrl.u32 %v2358, 16
        %v2467 = vshll.u32 %v2358, 16
        %v2469 = vrot.slane %v2467, 1
        %v2470 = vor.u32 %v2465, %v2469
        %v2472 = vshll.u32 %v2359, 16
        %v2474 = vrot.slane %v2472, 1
        %v2475 = vsel %vm368, %v2470, %v2474
        %v2477 = vshrl.u32 %v2360, 16
        %v2479 = vshll.u32 %v2360, 16
        %v2481 = vrot.slane %v2479, 1
        %v2482 = vor.u32 %v2477, %v2481
        %v2484 = vshll.u32 %v2361, 16
        %v2486 = vrot.slane %v2484, 1
        %v2487 = vsel %vm368, %v2482, %v2486
        %v2489 = vshrl.u32 %v2362, 16
        %v2491 = vshll.u32 %v2362, 16
        %v2493 = vrot.slane %v2491, 1
        %v2494 = vor.u32 %v2489, %v2493
        %v2496 = vshll.u32 %v2363, 16
        %v2498 = vrot.slane %v2496, 1
        %v2499 = vsel %vm368, %v2494, %v2498
        %v2501 = vshrl.u32 %v2364, 16
        %v2503 = vshll.u32 %v2364, 16
        %v2505 = vrot.slane %v2503, 1
        %v2506 = vor.u32 %v2501, %v2505
        %v2508 = vshll.u32 %v2365, 16
        %v2510 = vrot.slane %v2508, 1
        %v2511 = vsel %vm368, %v2506, %v2510
        %v2513 = vshrl.u32 %v2366, 16
        %v2515 = vshll.u32 %v2366, 16
        %v2517 = vrot.slane %v2515, 1
        %v2518 = vor.u32 %v2513, %v2517
        %v2520 = vshll.u32 %v2367, 16
        %v2522 = vrot.slane %v2520, 1
        %v2523 = vsel %vm368, %v2518, %v2522
        %v2525 = vshrl.u32 %v2368, 16
        %v2527 = vshll.u32 %v2368, 16
        %v2529 = vrot.slane %v2527, 1
        %v2530 = vor.u32 %v2525, %v2529
        %v2532 = vshll.u32 %v2369, 16
        %v2534 = vrot.slane %v2532, 1
        %v2535 = vsel %vm368, %v2530, %v2534
        %v2537 = vshrl.u32 %v2370, 16
        %v2539 = vshll.u32 %v2370, 16
        %v2541 = vrot.slane %v2539, 1
        %v2542 = vor.u32 %v2537, %v2541
        %v2544 = vshll.u32 %v2371, 16
        %v2546 = vrot.slane %v2544, 1
        %v2547 = vsel %vm368, %v2542, %v2546
        %v2549 = vshrl.u32 %v2372, 16
        %v2551 = vshll.u32 %v2372, 16
        %v2553 = vrot.slane %v2551, 1
        %v2554 = vor.u32 %v2549, %v2553
        %v2556 = vshll.u32 %v2373, 16
        %v2558 = vrot.slane %v2556, 1
        %v2559 = vsel %vm368, %v2554, %v2558
        %v2561 = vshrl.u32 %v2374, 16
        %v2563 = vshll.u32 %v2374, 16
        %v2565 = vrot.slane %v2563, 1
        %v2566 = vor.u32 %v2561, %v2565
        %v2568 = vshll.u32 %v2375, 16
        %v2570 = vrot.slane %v2568, 1
        %v2571 = vsel %vm368, %v2566, %v2570
        %v2620 = vrot.slane %v2344, 1
        %v2621 = vrot.slane %v2345, 1
        %v2622 = vsel %vm609, %v2620, %v2621
        %v2623 = vrot.slane %v2346, 1
        %v2624 = vrot.slane %v2347, 1
        %v2625 = vsel %vm609, %v2623, %v2624
        %v2626 = vrot.slane %v2348, 1
        %v2627 = vrot.slane %v2349, 1
        %v2628 = vsel %vm609, %v2626, %v2627
        %v2629 = vrot.slane %v2350, 1
        %v2630 = vrot.slane %v2351, 1
        %v2631 = vsel %vm609, %v2629, %v2630
        %v2632 = vrot.slane %v2352, 1
        %v2633 = vrot.slane %v2353, 1
        %v2634 = vsel %vm609, %v2632, %v2633
        %v2635 = vrot.slane %v2354, 1
        %v2636 = vrot.slane %v2355, 1
        %v2637 = vsel %vm609, %v2635, %v2636
        %v2638 = vrot.slane %v2356, 1
        %v2639 = vrot.slane %v2357, 1
        %v2640 = vsel %vm609, %v2638, %v2639
        %v2641 = vrot.slane %v2358, 1
        %v2642 = vrot.slane %v2359, 1
        %v2643 = vsel %vm609, %v2641, %v2642
        %v2644 = vrot.slane %v2360, 1
        %v2645 = vrot.slane %v2361, 1
        %v2646 = vsel %vm609, %v2644, %v2645
        %v2647 = vrot.slane %v2362, 1
        %v2648 = vrot.slane %v2363, 1
        %v2649 = vsel %vm609, %v2647, %v2648
        %v2650 = vrot.slane %v2364, 1
        %v2651 = vrot.slane %v2365, 1
        %v2652 = vsel %vm609, %v2650, %v2651
        %v2653 = vrot.slane %v2366, 1
        %v2654 = vrot.slane %v2367, 1
        %v2655 = vsel %vm609, %v2653, %v2654
        %v2656 = vrot.slane %v2368, 1
        %v2657 = vrot.slane %v2369, 1
        %v2658 = vsel %vm609, %v2656, %v2657
        %v2659 = vrot.slane %v2370, 1
        %v2660 = vrot.slane %v2371, 1
        %v2661 = vsel %vm609, %v2659, %v2660
        %v2662 = vrot.slane %v2372, 1
        %v2663 = vrot.slane %v2373, 1
        %v2664 = vsel %vm609, %v2662, %v2663
        %v2665 = vrot.slane %v2374, 1
        %v2666 = vrot.slane %v2375, 1
        %v2667 = vsel %vm609, %v2665, %v2666
        %v2685 = vshrl.u32 %v2376, 16
        %v2687 = vshll.u32 %v2376, 16
        %v2689 = vrot.slane %v2687, 1
        %v2690 = vor.u32 %v2685, %v2689
        %v2692 = vshll.u32 %v2377, 16
        %v2694 = vrot.slane %v2692, 1
        %v2695 = vsel %vm368, %v2690, %v2694
        %v2699 = vrot.slane %v2376, 1
        %v2700 = vrot.slane %v2377, 1
        %v2701 = vsel %vm609, %v2699, %v2700
        %v2704 = vshrl.u32 %v2378, 16
        %v2706 = vshll.u32 %v2378, 16
        %v2708 = vrot.slane %v2706, 1
        %v2709 = vor.u32 %v2704, %v2708
        %v2711 = vshll.u32 %v2379, 16
        %v2713 = vrot.slane %v2711, 1
        %v2714 = vsel %vm368, %v2709, %v2713
        %v2718 = vrot.slane %v2378, 1
        %v2719 = vrot.slane %v2379, 1
        %v2720 = vsel %vm609, %v2718, %v2719
        %v2722 = vld [vmem:[%s4] sm:$0xf]
        %v2723 = vld [vmem:[%s4 + $0x4] sm:$0xf]
        %v2724 = vld [vmem:[%s4 + $0x8] sm:$0xf]
        %v2725 = vld [vmem:[%s4 + $0xc] sm:$0xf]
        %v2726 = vld [vmem:[%s4 + $0x10] sm:$0xf]
        %v2727 = vld [vmem:[%s4 + $0x14] sm:$0xf]
        %v2728 = vld [vmem:[%s4 + $0x18] sm:$0xf]
        %v2729 = vld [vmem:[%s4 + $0x1c] sm:$0xf]
        %v2730 = vld [vmem:[%s4 + $0x20] sm:$0xf]
        %v2731 = vld [vmem:[%s4 + $0x24] sm:$0xf]
        %v2732 = vld [vmem:[%s4 + $0x28] sm:$0xf]
        %v2733 = vld [vmem:[%s4 + $0x2c] sm:$0xf]
        %v2734 = vld [vmem:[%s4 + $0x30] sm:$0xf]
        %v2735 = vld [vmem:[%s4 + $0x34] sm:$0xf]
        %v2736 = vld [vmem:[%s4 + $0x38] sm:$0xf]
        %v2737 = vld [vmem:[%s4 + $0x3c] sm:$0xf]
        %v2738 = vld [vmem:[%s4 + $0x40] sm:$0xf]
        %v2739 = vld [vmem:[%s4 + $0x44] sm:$0xf]
        %v2740 = vld [vmem:[%s4 + $0x48] sm:$0xf]
        %v2741 = vld [vmem:[%s4 + $0x4c] sm:$0xf]
        %v2742 = vld [vmem:[%s4 + $0x50] sm:$0xf]
        %v2743 = vld [vmem:[%s4 + $0x54] sm:$0xf]
        %v2744 = vld [vmem:[%s4 + $0x58] sm:$0xf]
        %v2745 = vld [vmem:[%s4 + $0x5c] sm:$0xf]
        %v2746 = vld [vmem:[%s4 + $0x60] sm:$0xf]
        %v2747 = vld [vmem:[%s4 + $0x64] sm:$0xf]
        %v2748 = vld [vmem:[%s4 + $0x68] sm:$0xf]
        %v2749 = vld [vmem:[%s4 + $0x6c] sm:$0xf]
        %v2750 = vld [vmem:[%s4 + $0x70] sm:$0xf]
        %v2751 = vld [vmem:[%s4 + $0x74] sm:$0xf]
        %v2752 = vld [vmem:[%s4 + $0x78] sm:$0xf]
        %v2753 = vld [vmem:[%s4 + $0x7c] sm:$0xf]
        %v2754 = vld [vmem:[%s4 + $0x80] sm:$0xf]
        %v2755 = vld [vmem:[%s4 + $0x84] sm:$0xf]
        %v2756 = vld [vmem:[%s4 + $0x88] sm:$0xf]
        %v2757 = vld [vmem:[%s4 + $0x8c] sm:$0xf]
        %v2758 = vld [vmem:[%s4 + $0x90] sm:$0xf]
        %v2759 = vld [vmem:[%s4 + $0x94] sm:$0xf]
        %v2760 = vld [vmem:[%s4 + $0x98] sm:$0xf]
        %v2761 = vld [vmem:[%s4 + $0x9c] sm:$0xf]
        %v2762 = vld [vmem:[%s4 + $0xa0] sm:$0xf]
        %v2763 = vld [vmem:[%s4 + $0xa4] sm:$0xf]
        %v2764 = vld [vmem:[%s4 + $0xa8] sm:$0xf]
        %v2765 = vld [vmem:[%s4 + $0xac] sm:$0xf]
        %v2766 = vld [vmem:[%s4 + $0xb0] sm:$0xf]
        %v2767 = vld [vmem:[%s4 + $0xb4] sm:$0xf]
        %v2768 = vld [vmem:[%s4 + $0xb8] sm:$0xf]
        %v2769 = vld [vmem:[%s4 + $0xbc] sm:$0xf]
        %v2770 = vld [vmem:[%s4 + $0xc0] sm:$0xf]
        %v2771 = vld [vmem:[%s4 + $0xc4] sm:$0xf]
        %v2772 = vld [vmem:[%s4 + $0xc8] sm:$0xf]
        %v2773 = vld [vmem:[%s4 + $0xcc] sm:$0xf]
        %v2774 = vld [vmem:[%s4 + $0xd0] sm:$0xf]
        %v2775 = vld [vmem:[%s4 + $0xd4] sm:$0xf]
        %v2776 = vld [vmem:[%s4 + $0xd8] sm:$0xf]
        %v2777 = vld [vmem:[%s4 + $0xdc] sm:$0xf]
        %v2778 = vld [vmem:[%s4 + $0xe0] sm:$0xf]
        %v2779 = vld [vmem:[%s4 + $0xe4] sm:$0xf]
        %v2780 = vld [vmem:[%s4 + $0xe8] sm:$0xf]
        %v2781 = vld [vmem:[%s4 + $0xec] sm:$0xf]
        %v2782 = vld [vmem:[%s4 + $0xf0] sm:$0xf]
        %v2783 = vld [vmem:[%s4 + $0xf4] sm:$0xf]
        %v2784 = vld [vmem:[%s4 + $0xf8] sm:$0xf]
        %v2785 = vld [vmem:[%s4 + $0xfc] sm:$0xf]
        %v2786 = vld [vmem:[%s4 + $0x100] sm:$0xf]
        %v2787 = vld [vmem:[%s4 + $0x104] sm:$0xf]
        %v2788 = vld [vmem:[%s4 + $0x108] sm:$0xf]
        %v2789 = vld [vmem:[%s4 + $0x10c] sm:$0xf]
        %v2790 = vld [vmem:[%s4 + $0x110] sm:$0xf]
        %v2791 = vld [vmem:[%s4 + $0x114] sm:$0xf]
        %v2792 = vld [vmem:[%s4 + $0x118] sm:$0xf]
        %v2793 = vld [vmem:[%s4 + $0x11c] sm:$0xf]
        %v2794 = vld [vmem:[%s4 + $0x120] sm:$0xf]
        %v2795 = vld [vmem:[%s4 + $0x124] sm:$0xf]
        %v2796 = vld [vmem:[%s4 + $0x128] sm:$0xf]
        %v2797 = vld [vmem:[%s4 + $0x12c] sm:$0xf]
        %v2798 = vld [vmem:[%s4 + $0x130] sm:$0xf]
        %v2799 = vld [vmem:[%s4 + $0x134] sm:$0xf]
        %v2800 = vld [vmem:[%s4 + $0x138] sm:$0xf]
        %v2801 = vld [vmem:[%s4 + $0x13c] sm:$0xf]
        %v2802 = vld [vmem:[%s4 + $0x140] sm:$0xf]
        %v2803 = vld [vmem:[%s4 + $0x144] sm:$0xf]
        %v2804 = vld [vmem:[%s4 + $0x148] sm:$0xf]
        %v2805 = vld [vmem:[%s4 + $0x14c] sm:$0xf]
        %v2806 = vld [vmem:[%s4 + $0x150] sm:$0xf]
        %v2807 = vld [vmem:[%s4 + $0x154] sm:$0xf]
        %v2808 = vld [vmem:[%s4 + $0x158] sm:$0xf]
        %v2809 = vld [vmem:[%s4 + $0x15c] sm:$0xf]
        %v2810 = vld [vmem:[%s4 + $0x160] sm:$0xf]
        %v2811 = vld [vmem:[%s4 + $0x164] sm:$0xf]
        %v2812 = vld [vmem:[%s4 + $0x168] sm:$0xf]
        %v2813 = vld [vmem:[%s4 + $0x16c] sm:$0xf]
        %v2814 = vld [vmem:[%s4 + $0x170] sm:$0xf]
        %v2815 = vld [vmem:[%s4 + $0x174] sm:$0xf]
        %v2816 = vld [vmem:[%s4 + $0x178] sm:$0xf]
        %v2817 = vld [vmem:[%s4 + $0x17c] sm:$0xf]
        %v2818 = vld [vmem:[%s4 + $0x180] sm:$0xf]
        %v2819 = vld [vmem:[%s4 + $0x184] sm:$0xf]
        %v2820 = vld [vmem:[%s4 + $0x188] sm:$0xf]
        %v2821 = vld [vmem:[%s4 + $0x18c] sm:$0xf]
        %v2822 = vld [vmem:[%s4 + $0x190] sm:$0xf]
        %v2823 = vld [vmem:[%s4 + $0x194] sm:$0xf]
        %v2824 = vld [vmem:[%s4 + $0x198] sm:$0xf]
        %v2825 = vld [vmem:[%s4 + $0x19c] sm:$0xf]
        %v2826 = vld [vmem:[%s4 + $0x1a0] sm:$0xf]
        %v2827 = vld [vmem:[%s4 + $0x1a4] sm:$0xf]
        %v2828 = vld [vmem:[%s4 + $0x1a8] sm:$0xf]
        %v2829 = vld [vmem:[%s4 + $0x1ac] sm:$0xf]
        %v2830 = vld [vmem:[%s4 + $0x1b0] sm:$0xf]
        %v2831 = vld [vmem:[%s4 + $0x1b4] sm:$0xf]
        %v2832 = vld [vmem:[%s4 + $0x1b8] sm:$0xf]
        %v2833 = vld [vmem:[%s4 + $0x1bc] sm:$0xf]
        %v2834 = vld [vmem:[%s4 + $0x1c0] sm:$0xf]
        %v2835 = vld [vmem:[%s4 + $0x1c4] sm:$0xf]
        %v2836 = vld [vmem:[%s4 + $0x1c8] sm:$0xf]
        %v2837 = vld [vmem:[%s4 + $0x1cc] sm:$0xf]
        %v2838 = vld [vmem:[%s4 + $0x1d0] sm:$0xf]
        %v2839 = vld [vmem:[%s4 + $0x1d4] sm:$0xf]
        %v2840 = vld [vmem:[%s4 + $0x1d8] sm:$0xf]
        %v2841 = vld [vmem:[%s4 + $0x1dc] sm:$0xf]
        %v2842 = vld [vmem:[%s4 + $0x1e0] sm:$0xf]
        %v2843 = vld [vmem:[%s4 + $0x1e4] sm:$0xf]
        %v2844 = vld [vmem:[%s4 + $0x1e8] sm:$0xf]
        %v2845 = vld [vmem:[%s4 + $0x1ec] sm:$0xf]
        %v2846 = vld [vmem:[%s4 + $0x1f0] sm:$0xf]
        %v2847 = vld [vmem:[%s4 + $0x1f4] sm:$0xf]
        %v2848 = vld [vmem:[%s4 + $0x1f8] sm:$0xf]
        %v2849 = vld [vmem:[%s4 + $0x1fc] sm:$0xf]
        %v2850 = vld [vmem:[%s4 + $0x200] sm:$0xf]
        %v2851 = vld [vmem:[%s4 + $0x204] sm:$0xf]
        %v2852 = vld [vmem:[%s4 + $0x208] sm:$0xf]
        %v2853 = vld [vmem:[%s4 + $0x20c] sm:$0xf]
        %v2854 = vld [vmem:[%s4 + $0x210] sm:$0xf]
        %v2855 = vld [vmem:[%s4 + $0x214] sm:$0xf]
        %v2856 = vld [vmem:[%s4 + $0x218] sm:$0xf]
        %v2857 = vld [vmem:[%s4 + $0x21c] sm:$0xf]
        %v2858 = vld [vmem:[%s4 + $0x220] sm:$0xf]
        %v2859 = vld [vmem:[%s4 + $0x224] sm:$0xf]
        %v2860 = vld [vmem:[%s4 + $0x228] sm:$0xf]
        %v2861 = vld [vmem:[%s4 + $0x22c] sm:$0xf]
        %v2862 = vld [vmem:[%s4 + $0x230] sm:$0xf]
        %v2863 = vld [vmem:[%s4 + $0x234] sm:$0xf]
        %v2864 = vld [vmem:[%s4 + $0x238] sm:$0xf]
        %v2865 = vld [vmem:[%s4 + $0x23c] sm:$0xf]
        %v3010 = vunpack.c.l.b16 %v2722
        %v3011 = vunpack.c.l.b16 %v2723
        %v3012 = vunpack.c.l.b16 %v2724
        %v3013 = vunpack.c.l.b16 %v2725
        %v3014 = vunpack.c.l.b16 %v2726
        %v3015 = vunpack.c.l.b16 %v2727
        %v3016 = vunpack.c.l.b16 %v2728
        %v3017 = vunpack.c.l.b16 %v2729
        %v3018 = vunpack.c.l.b16 %v2730
        %v3019 = vunpack.c.l.b16 %v2731
        %v3020 = vunpack.c.l.b16 %v2732
        %v3021 = vunpack.c.l.b16 %v2733
        %v3022 = vunpack.c.l.b16 %v2734
        %v3023 = vunpack.c.l.b16 %v2735
        %v3024 = vunpack.c.l.b16 %v2736
        %v3025 = vunpack.c.l.b16 %v2737
        %v3026 = vunpack.c.l.b16 %v2738
        %v3027 = vunpack.c.l.b16 %v2739
        %v3028 = vunpack.c.l.b16 %v2740
        %v3029 = vunpack.c.l.b16 %v2741
        %v3030 = vunpack.c.l.b16 %v2742
        %v3031 = vunpack.c.l.b16 %v2743
        %v3032 = vunpack.c.l.b16 %v2744
        %v3033 = vunpack.c.l.b16 %v2745
        %v3034 = vunpack.c.l.b16 %v2746
        %v3035 = vunpack.c.l.b16 %v2747
        %v3036 = vunpack.c.l.b16 %v2748
        %v3037 = vunpack.c.l.b16 %v2749
        %v3038 = vunpack.c.l.b16 %v2750
        %v3039 = vunpack.c.l.b16 %v2751
        %v3040 = vunpack.c.l.b16 %v2752
        %v3041 = vunpack.c.l.b16 %v2753
        %v3042 = vunpack.c.l.b16 %v2754
        %v3043 = vunpack.c.l.b16 %v2755
        %v3044 = vunpack.c.l.b16 %v2756
        %v3045 = vunpack.c.l.b16 %v2757
        %v3046 = vunpack.c.l.b16 %v2758
        %v3047 = vunpack.c.l.b16 %v2759
        %v3048 = vunpack.c.l.b16 %v2760
        %v3049 = vunpack.c.l.b16 %v2761
        %v3050 = vunpack.c.l.b16 %v2762
        %v3051 = vunpack.c.l.b16 %v2763
        %v3052 = vunpack.c.l.b16 %v2764
        %v3053 = vunpack.c.l.b16 %v2765
        %v3054 = vunpack.c.l.b16 %v2766
        %v3055 = vunpack.c.l.b16 %v2767
        %v3056 = vunpack.c.l.b16 %v2768
        %v3057 = vunpack.c.l.b16 %v2769
        %v3058 = vunpack.c.l.b16 %v2770
        %v3059 = vunpack.c.l.b16 %v2771
        %v3060 = vunpack.c.l.b16 %v2772
        %v3061 = vunpack.c.l.b16 %v2773
        %v3062 = vunpack.c.l.b16 %v2774
        %v3063 = vunpack.c.l.b16 %v2775
        %v3064 = vunpack.c.l.b16 %v2776
        %v3065 = vunpack.c.l.b16 %v2777
        %v3066 = vunpack.c.l.b16 %v2778
        %v3067 = vunpack.c.l.b16 %v2779
        %v3068 = vunpack.c.l.b16 %v2780
        %v3069 = vunpack.c.l.b16 %v2781
        %v3070 = vunpack.c.l.b16 %v2782
        %v3071 = vunpack.c.l.b16 %v2783
        %v3072 = vunpack.c.l.b16 %v2784
        %v3073 = vunpack.c.l.b16 %v2785
        %v3074 = vunpack.c.l.b16 %v2786
        %v3075 = vunpack.c.l.b16 %v2787
        %v3076 = vunpack.c.l.b16 %v2788
        %v3077 = vunpack.c.l.b16 %v2789
        %v3078 = vunpack.c.l.b16 %v2790
        %v3079 = vunpack.c.l.b16 %v2791
        %v3080 = vunpack.c.l.b16 %v2792
        %v3081 = vunpack.c.l.b16 %v2793
        %v3082 = vunpack.c.l.b16 %v2794
        %v3083 = vunpack.c.l.b16 %v2795
        %v3084 = vunpack.c.l.b16 %v2796
        %v3085 = vunpack.c.l.b16 %v2797
        %v3086 = vunpack.c.l.b16 %v2798
        %v3087 = vunpack.c.l.b16 %v2799
        %v3088 = vunpack.c.l.b16 %v2800
        %v3089 = vunpack.c.l.b16 %v2801
        %v3090 = vunpack.c.l.b16 %v2802
        %v3091 = vunpack.c.l.b16 %v2803
        %v3092 = vunpack.c.l.b16 %v2804
        %v3093 = vunpack.c.l.b16 %v2805
        %v3094 = vunpack.c.l.b16 %v2806
        %v3095 = vunpack.c.l.b16 %v2807
        %v3096 = vunpack.c.l.b16 %v2808
        %v3097 = vunpack.c.l.b16 %v2809
        %v3098 = vunpack.c.l.b16 %v2810
        %v3099 = vunpack.c.l.b16 %v2811
        %v3100 = vunpack.c.l.b16 %v2812
        %v3101 = vunpack.c.l.b16 %v2813
        %v3102 = vunpack.c.l.b16 %v2814
        %v3103 = vunpack.c.l.b16 %v2815
        %v3104 = vunpack.c.l.b16 %v2816
        %v3105 = vunpack.c.l.b16 %v2817
        %v3106 = vunpack.c.l.b16 %v2818
        %v3107 = vunpack.c.l.b16 %v2819
        %v3108 = vunpack.c.l.b16 %v2820
        %v3109 = vunpack.c.l.b16 %v2821
        %v3110 = vunpack.c.l.b16 %v2822
        %v3111 = vunpack.c.l.b16 %v2823
        %v3112 = vunpack.c.l.b16 %v2824
        %v3113 = vunpack.c.l.b16 %v2825
        %v3114 = vunpack.c.l.b16 %v2826
        %v3115 = vunpack.c.l.b16 %v2827
        %v3116 = vunpack.c.l.b16 %v2828
        %v3117 = vunpack.c.l.b16 %v2829
        %v3118 = vunpack.c.l.b16 %v2830
        %v3119 = vunpack.c.l.b16 %v2831
        %v3120 = vunpack.c.l.b16 %v2832
        %v3121 = vunpack.c.l.b16 %v2833
        %v3122 = vunpack.c.l.b16 %v2834
        %v3123 = vunpack.c.l.b16 %v2835
        %v3124 = vunpack.c.l.b16 %v2836
        %v3125 = vunpack.c.l.b16 %v2837
        %v3126 = vunpack.c.l.b16 %v2838
        %v3127 = vunpack.c.l.b16 %v2839
        %v3128 = vunpack.c.l.b16 %v2840
        %v3129 = vunpack.c.l.b16 %v2841
        %v3130 = vunpack.c.l.b16 %v2842
        %v3131 = vunpack.c.l.b16 %v2843
        %v3132 = vunpack.c.l.b16 %v2844
        %v3133 = vunpack.c.l.b16 %v2845
        %v3134 = vunpack.c.l.b16 %v2846
        %v3135 = vunpack.c.l.b16 %v2847
        %v3136 = vunpack.c.l.b16 %v2848
        %v3137 = vunpack.c.l.b16 %v2849
        %v3138 = vunpack.c.l.b16 %v2850
        %v3139 = vunpack.c.l.b16 %v2851
        %v3140 = vunpack.c.l.b16 %v2852
        %v3141 = vunpack.c.l.b16 %v2853
        %v3142 = vunpack.c.l.b16 %v2854
        %v3143 = vunpack.c.l.b16 %v2855
        %v3144 = vunpack.c.l.b16 %v2856
        %v3145 = vunpack.c.l.b16 %v2857
        %v3146 = vunpack.c.l.b16 %v2858
        %v3147 = vunpack.c.l.b16 %v2859
        %v3148 = vunpack.c.l.b16 %v2860
        %v3149 = vunpack.c.l.b16 %v2861
        %v3150 = vunpack.c.l.b16 %v2862
        %v3151 = vunpack.c.l.b16 %v2863
        %v3152 = vunpack.c.l.b16 %v2864
        %v3153 = vunpack.c.l.b16 %v2865
        %v3154 = vpack.c.b16 %v3011, %v3010
        %v3155 = vpack.c.b16 %v3013, %v3012
        %v3156 = vpack.c.b16 %v3015, %v3014
        %v3157 = vpack.c.b16 %v3017, %v3016
        %v3158 = vpack.c.b16 %v3019, %v3018
        %v3159 = vpack.c.b16 %v3021, %v3020
        %v3160 = vpack.c.b16 %v3023, %v3022
        %v3161 = vpack.c.b16 %v3025, %v3024
        %v3162 = vpack.c.b16 %v3027, %v3026
        %v3163 = vpack.c.b16 %v3029, %v3028
        %v3164 = vpack.c.b16 %v3031, %v3030
        %v3165 = vpack.c.b16 %v3033, %v3032
        %v3166 = vpack.c.b16 %v3035, %v3034
        %v3167 = vpack.c.b16 %v3037, %v3036
        %v3168 = vpack.c.b16 %v3039, %v3038
        %v3169 = vpack.c.b16 %v3041, %v3040
        %v3170 = vpack.c.b16 %v3043, %v3042
        %v3171 = vpack.c.b16 %v3045, %v3044
        %v3172 = vpack.c.b16 %v3047, %v3046
        %v3173 = vpack.c.b16 %v3049, %v3048
        %v3174 = vpack.c.b16 %v3051, %v3050
        %v3175 = vpack.c.b16 %v3053, %v3052
        %v3176 = vpack.c.b16 %v3055, %v3054
        %v3177 = vpack.c.b16 %v3057, %v3056
        %v3178 = vpack.c.b16 %v3059, %v3058
        %v3179 = vpack.c.b16 %v3061, %v3060
        %v3180 = vpack.c.b16 %v3063, %v3062
        %v3181 = vpack.c.b16 %v3065, %v3064
        %v3182 = vpack.c.b16 %v3067, %v3066
        %v3183 = vpack.c.b16 %v3069, %v3068
        %v3184 = vpack.c.b16 %v3071, %v3070
        %v3185 = vpack.c.b16 %v3073, %v3072
        %v3186 = vpack.c.b16 %v3075, %v3074
        %v3187 = vpack.c.b16 %v3077, %v3076
        %v3188 = vpack.c.b16 %v3079, %v3078
        %v3189 = vpack.c.b16 %v3081, %v3080
        %v3190 = vpack.c.b16 %v3083, %v3082
        %v3191 = vpack.c.b16 %v3085, %v3084
        %v3192 = vpack.c.b16 %v3087, %v3086
        %v3193 = vpack.c.b16 %v3089, %v3088
        %v3194 = vpack.c.b16 %v3091, %v3090
        %v3195 = vpack.c.b16 %v3093, %v3092
        %v3196 = vpack.c.b16 %v3095, %v3094
        %v3197 = vpack.c.b16 %v3097, %v3096
        %v3198 = vpack.c.b16 %v3099, %v3098
        %v3199 = vpack.c.b16 %v3101, %v3100
        %v3200 = vpack.c.b16 %v3103, %v3102
        %v3201 = vpack.c.b16 %v3105, %v3104
        %v3202 = vpack.c.b16 %v3107, %v3106
        %v3203 = vpack.c.b16 %v3109, %v3108
        %v3204 = vpack.c.b16 %v3111, %v3110
        %v3205 = vpack.c.b16 %v3113, %v3112
        %v3206 = vpack.c.b16 %v3115, %v3114
        %v3207 = vpack.c.b16 %v3117, %v3116
        %v3208 = vpack.c.b16 %v3119, %v3118
        %v3209 = vpack.c.b16 %v3121, %v3120
        %v3210 = vpack.c.b16 %v3123, %v3122
        %v3211 = vpack.c.b16 %v3125, %v3124
        %v3212 = vpack.c.b16 %v3127, %v3126
        %v3213 = vpack.c.b16 %v3129, %v3128
        %v3214 = vpack.c.b16 %v3131, %v3130
        %v3215 = vpack.c.b16 %v3133, %v3132
        %v3216 = vpack.c.b16 %v3135, %v3134
        %v3217 = vpack.c.b16 %v3137, %v3136
        %v3218 = vpack.c.b16 %v3139, %v3138
        %v3219 = vpack.c.b16 %v3141, %v3140
        %v3220 = vpack.c.b16 %v3143, %v3142
        %v3221 = vpack.c.b16 %v3145, %v3144
        %v3222 = vpack.c.b16 %v3147, %v3146
        %v3223 = vpack.c.b16 %v3149, %v3148
        %v3224 = vpack.c.b16 %v3151, %v3150
        %v3225 = vpack.c.b16 %v3153, %v3152
        %3298 = vmatprep.subr.bf16.mxu0 0
        %3299 = vmatpush1.bf16.msra.mxu0 %v3161
        %3300 = vmatprep.subr.bf16.mxu0 0
        %3301 = vmatpush1.bf16.msra.mxu0 %v3160
        %3302 = vmatprep.subr.bf16.mxu0 0
        %3303 = vmatpush1.bf16.msra.mxu0 %v3159
        %3304 = vmatprep.subr.bf16.mxu0 0
        %3305 = vmatpush1.bf16.msra.mxu0 %v3158
        %3306 = vmatprep.subr.bf16.mxu0 0
        %3307 = vmatpush1.bf16.msra.mxu0 %v3157
        %3308 = vmatprep.subr.bf16.mxu0 0
        %3309 = vmatpush1.bf16.msra.mxu0 %v3156
        %3310 = vmatprep.subr.bf16.mxu0 0
        %3311 = vmatpush1.bf16.msra.mxu0 %v3155
        %3312 = vmatprep.subr.bf16.mxu0 0
        %3313 = vmatpush1.bf16.msra.mxu0 %v3154
        %3314 = vmatprep.subr.bf16.mxu0 0
        %3315 = vmatpush2.bf16.msra.mxu0 %v3169
        %3316 = vmatprep.subr.bf16.mxu0 0
        %3317 = vmatpush2.bf16.msra.mxu0 %v3168
        %3318 = vmatprep.subr.bf16.mxu0 0
        %3319 = vmatpush2.bf16.msra.mxu0 %v3167
        %3320 = vmatprep.subr.bf16.mxu0 0
        %3321 = vmatpush2.bf16.msra.mxu0 %v3166
        %3322 = vmatprep.subr.bf16.mxu0 0
        %3323 = vmatpush2.bf16.msra.mxu0 %v3165
        %3324 = vmatprep.subr.bf16.mxu0 0
        %3325 = vmatpush2.bf16.msra.mxu0 %v3164
        %3326 = vmatprep.subr.bf16.mxu0 0
        %3327 = vmatpush2.bf16.msra.mxu0 %v3163
        %3328 = vmatprep.subr.bf16.mxu0 0
        %3329 = vmatpush2.bf16.msra.mxu0 %v3162
        %3330 = vmatprep.mubr.bf16.mxu0 %v2391
        %3331 = vmatmul.mubr.bf16.gmra.mxu0 %v2344
        %v3332 = vpop.f32.mrf.mxu0
        %v3333 = vadd.f32 0.0, %v3332
        %v3334 = vpop.f32.mrf.mxu0
        %v3335 = vpop.f32.mrf.mxu0
        %v3336 = vadd.f32 0.0, %v3335
        %v3337 = vpop.f32.mrf.mxu0
        %3338 = vmatprep.mubr.bf16.mxu0 %v2403
        %3339 = vmatmul.mubr.bf16.gmra.mxu0 %v2346
        %v3340 = vpop.f32.mrf.mxu0
        %v3341 = vadd.f32 0.0, %v3340
        %v3342 = vpop.f32.mrf.mxu0
        %v3343 = vpop.f32.mrf.mxu0
        %v3344 = vadd.f32 0.0, %v3343
        %v3345 = vpop.f32.mrf.mxu0
        %3346 = vmatprep.mubr.bf16.mxu0 %v2415
        %3347 = vmatmul.mubr.bf16.gmra.mxu0 %v2348
        %v3348 = vpop.f32.mrf.mxu0
        %v3349 = vadd.f32 0.0, %v3348
        %v3350 = vpop.f32.mrf.mxu0
        %v3351 = vpop.f32.mrf.mxu0
        %v3352 = vadd.f32 0.0, %v3351
        %v3353 = vpop.f32.mrf.mxu0
        %3354 = vmatprep.mubr.bf16.mxu0 %v2427
        %3355 = vmatmul.mubr.bf16.gmra.mxu0 %v2350
        %v3356 = vpop.f32.mrf.mxu0
        %v3357 = vadd.f32 0.0, %v3356
        %v3358 = vpop.f32.mrf.mxu0
        %v3359 = vpop.f32.mrf.mxu0
        %v3360 = vadd.f32 0.0, %v3359
        %v3361 = vpop.f32.mrf.mxu0
        %3362 = vmatprep.mubr.bf16.mxu0 %v2439
        %3363 = vmatmul.mubr.bf16.gmra.mxu0 %v2352
        %v3364 = vpop.f32.mrf.mxu0
        %v3365 = vadd.f32 0.0, %v3364
        %v3366 = vpop.f32.mrf.mxu0
        %v3367 = vpop.f32.mrf.mxu0
        %v3368 = vadd.f32 0.0, %v3367
        %v3369 = vpop.f32.mrf.mxu0
        %3370 = vmatprep.mubr.bf16.mxu0 %v2451
        %3371 = vmatmul.mubr.bf16.gmra.mxu0 %v2354
        %v3372 = vpop.f32.mrf.mxu0
        %v3373 = vadd.f32 0.0, %v3372
        %v3374 = vpop.f32.mrf.mxu0
        %v3375 = vpop.f32.mrf.mxu0
        %v3376 = vadd.f32 0.0, %v3375
        %v3377 = vpop.f32.mrf.mxu0
        %3378 = vmatprep.mubr.bf16.mxu0 %v2463
        %3379 = vmatmul.mubr.bf16.gmra.mxu0 %v2356
        %v3380 = vpop.f32.mrf.mxu0
        %v3381 = vadd.f32 0.0, %v3380
        %v3382 = vpop.f32.mrf.mxu0
        %v3383 = vpop.f32.mrf.mxu0
        %v3384 = vadd.f32 0.0, %v3383
        %v3385 = vpop.f32.mrf.mxu0
        %3386 = vmatprep.mubr.bf16.mxu0 %v2475
        %3387 = vmatmul.mubr.bf16.gmra.mxu0 %v2358
        %v3388 = vpop.f32.mrf.mxu0
        %v3389 = vadd.f32 0.0, %v3388
        %v3390 = vpop.f32.mrf.mxu0
        %v3391 = vpop.f32.mrf.mxu0
        %v3392 = vadd.f32 0.0, %v3391
        %v3393 = vpop.f32.mrf.mxu0
        %3394 = vmatprep.mubr.bf16.mxu0 %v2487
        %3395 = vmatmul.mubr.bf16.gmra.mxu0 %v2360
        %v3396 = vpop.f32.mrf.mxu0
        %v3397 = vadd.f32 0.0, %v3396
        %v3398 = vpop.f32.mrf.mxu0
        %v3399 = vpop.f32.mrf.mxu0
        %v3400 = vadd.f32 0.0, %v3399
        %v3401 = vpop.f32.mrf.mxu0
        %3402 = vmatprep.mubr.bf16.mxu0 %v2499
        %3403 = vmatmul.mubr.bf16.gmra.mxu0 %v2362
        %v3404 = vpop.f32.mrf.mxu0
        %v3405 = vadd.f32 0.0, %v3404
        %v3406 = vpop.f32.mrf.mxu0
        %v3407 = vpop.f32.mrf.mxu0
        %v3408 = vadd.f32 0.0, %v3407
        %v3409 = vpop.f32.mrf.mxu0
        %3410 = vmatprep.mubr.bf16.mxu0 %v2511
        %3411 = vmatmul.mubr.bf16.gmra.mxu0 %v2364
        %v3412 = vpop.f32.mrf.mxu0
        %v3413 = vadd.f32 0.0, %v3412
        %v3414 = vpop.f32.mrf.mxu0
        %v3415 = vpop.f32.mrf.mxu0
        %v3416 = vadd.f32 0.0, %v3415
        %v3417 = vpop.f32.mrf.mxu0
        %3418 = vmatprep.mubr.bf16.mxu0 %v2523
        %3419 = vmatmul.mubr.bf16.gmra.mxu0 %v2366
        %v3420 = vpop.f32.mrf.mxu0
        %v3421 = vadd.f32 0.0, %v3420
        %v3422 = vpop.f32.mrf.mxu0
        %v3423 = vpop.f32.mrf.mxu0
        %v3424 = vadd.f32 0.0, %v3423
        %v3425 = vpop.f32.mrf.mxu0
        %3426 = vmatprep.mubr.bf16.mxu0 %v2535
        %3427 = vmatmul.mubr.bf16.gmra.mxu0 %v2368
        %v3428 = vpop.f32.mrf.mxu0
        %v3429 = vadd.f32 0.0, %v3428
        %v3430 = vpop.f32.mrf.mxu0
        %v3431 = vpop.f32.mrf.mxu0
        %v3432 = vadd.f32 0.0, %v3431
        %v3433 = vpop.f32.mrf.mxu0
        %3434 = vmatprep.mubr.bf16.mxu0 %v2547
        %3435 = vmatmul.mubr.bf16.gmra.mxu0 %v2370
        %v3436 = vpop.f32.mrf.mxu0
        %v3437 = vadd.f32 0.0, %v3436
        %v3438 = vpop.f32.mrf.mxu0
        %v3439 = vpop.f32.mrf.mxu0
        %v3440 = vadd.f32 0.0, %v3439
        %v3441 = vpop.f32.mrf.mxu0
        %3442 = vmatprep.mubr.bf16.mxu0 %v2559
        %3443 = vmatmul.mubr.bf16.gmra.mxu0 %v2372
        %v3444 = vpop.f32.mrf.mxu0
        %v3445 = vadd.f32 0.0, %v3444
        %v3446 = vpop.f32.mrf.mxu0
        %v3447 = vpop.f32.mrf.mxu0
        %v3448 = vadd.f32 0.0, %v3447
        %v3449 = vpop.f32.mrf.mxu0
        %3450 = vmatprep.mubr.bf16.mxu0 %v2571
        %3451 = vmatmul.mubr.bf16.gmra.mxu0 %v2374
        %v3452 = vpop.f32.mrf.mxu0
        %v3453 = vadd.f32 0.0, %v3452
        %v3454 = vpop.f32.mrf.mxu0
        %v3455 = vpop.f32.mrf.mxu0
        %v3456 = vadd.f32 0.0, %v3455
        %v3457 = vpop.f32.mrf.mxu0
        %3458 = vdwg.mxu0
        %3459 = vmatprep.subr.bf16.mxu0 0
        %3460 = vmatpush1.bf16.msra.mxu0 %v3177
        %3461 = vmatprep.subr.bf16.mxu0 0
        %3462 = vmatpush1.bf16.msra.mxu0 %v3176
        %3463 = vmatprep.subr.bf16.mxu0 0
        %3464 = vmatpush1.bf16.msra.mxu0 %v3175
        %3465 = vmatprep.subr.bf16.mxu0 0
        %3466 = vmatpush1.bf16.msra.mxu0 %v3174
        %3467 = vmatprep.subr.bf16.mxu0 0
        %3468 = vmatpush1.bf16.msra.mxu0 %v3173
        %3469 = vmatprep.subr.bf16.mxu0 0
        %3470 = vmatpush1.bf16.msra.mxu0 %v3172
        %3471 = vmatprep.subr.bf16.mxu0 0
        %3472 = vmatpush1.bf16.msra.mxu0 %v3171
        %3473 = vmatprep.subr.bf16.mxu0 0
        %3474 = vmatpush1.bf16.msra.mxu0 %v3170
        %3475 = vmatprep.subr.bf16.mxu0 0
        %3476 = vmatpush2.bf16.msra.mxu0 %v3185
        %3477 = vmatprep.subr.bf16.mxu0 0
        %3478 = vmatpush2.bf16.msra.mxu0 %v3184
        %3479 = vmatprep.subr.bf16.mxu0 0
        %3480 = vmatpush2.bf16.msra.mxu0 %v3183
        %3481 = vmatprep.subr.bf16.mxu0 0
        %3482 = vmatpush2.bf16.msra.mxu0 %v3182
        %3483 = vmatprep.subr.bf16.mxu0 0
        %3484 = vmatpush2.bf16.msra.mxu0 %v3181
        %3485 = vmatprep.subr.bf16.mxu0 0
        %3486 = vmatpush2.bf16.msra.mxu0 %v3180
        %3487 = vmatprep.subr.bf16.mxu0 0
        %3488 = vmatpush2.bf16.msra.mxu0 %v3179
        %3489 = vmatprep.subr.bf16.mxu0 0
        %3490 = vmatpush2.bf16.msra.mxu0 %v3178
        %3491 = vmatprep.mubr.bf16.mxu0 %v2346
        %3492 = vmatmul.mubr.bf16.gmra.mxu0 %v2622
        %v3493 = vpop.f32.mrf.mxu0
        %v3494 = vadd.f32 %v3333, %v3493
        %v3495 = vpop.f32.mrf.mxu0
        %v3496 = vpop.f32.mrf.mxu0
        %v3497 = vadd.f32 %v3336, %v3496
        %v3498 = vpop.f32.mrf.mxu0
        %3499 = vmatprep.mubr.bf16.mxu0 %v2348
        %3500 = vmatmul.mubr.bf16.gmra.mxu0 %v2625
        %v3501 = vpop.f32.mrf.mxu0
        %v3502 = vadd.f32 %v3341, %v3501
        %v3503 = vpop.f32.mrf.mxu0
        %v3504 = vpop.f32.mrf.mxu0
        %v3505 = vadd.f32 %v3344, %v3504
        %v3506 = vpop.f32.mrf.mxu0
        %3507 = vmatprep.mubr.bf16.mxu0 %v2350
        %3508 = vmatmul.mubr.bf16.gmra.mxu0 %v2628
        %v3509 = vpop.f32.mrf.mxu0
        %v3510 = vadd.f32 %v3349, %v3509
        %v3511 = vpop.f32.mrf.mxu0
        %v3512 = vpop.f32.mrf.mxu0
        %v3513 = vadd.f32 %v3352, %v3512
        %v3514 = vpop.f32.mrf.mxu0
        %3515 = vmatprep.mubr.bf16.mxu0 %v2352
        %3516 = vmatmul.mubr.bf16.gmra.mxu0 %v2631
        %v3517 = vpop.f32.mrf.mxu0
        %v3518 = vadd.f32 %v3357, %v3517
        %v3519 = vpop.f32.mrf.mxu0
        %v3520 = vpop.f32.mrf.mxu0
        %v3521 = vadd.f32 %v3360, %v3520
        %v3522 = vpop.f32.mrf.mxu0
        %3523 = vmatprep.mubr.bf16.mxu0 %v2354
        %3524 = vmatmul.mubr.bf16.gmra.mxu0 %v2634
        %v3525 = vpop.f32.mrf.mxu0
        %v3526 = vadd.f32 %v3365, %v3525
        %v3527 = vpop.f32.mrf.mxu0
        %v3528 = vpop.f32.mrf.mxu0
        %v3529 = vadd.f32 %v3368, %v3528
        %v3530 = vpop.f32.mrf.mxu0
        %3531 = vmatprep.mubr.bf16.mxu0 %v2356
        %3532 = vmatmul.mubr.bf16.gmra.mxu0 %v2637
        %v3533 = vpop.f32.mrf.mxu0
        %v3534 = vadd.f32 %v3373, %v3533
        %v3535 = vpop.f32.mrf.mxu0
        %v3536 = vpop.f32.mrf.mxu0
        %v3537 = vadd.f32 %v3376, %v3536
        %v3538 = vpop.f32.mrf.mxu0
        %3539 = vmatprep.mubr.bf16.mxu0 %v2358
        %3540 = vmatmul.mubr.bf16.gmra.mxu0 %v2640
        %v3541 = vpop.f32.mrf.mxu0
        %v3542 = vadd.f32 %v3381, %v3541
        %v3543 = vpop.f32.mrf.mxu0
        %v3544 = vpop.f32.mrf.mxu0
        %v3545 = vadd.f32 %v3384, %v3544
        %v3546 = vpop.f32.mrf.mxu0
        %3547 = vmatprep.mubr.bf16.mxu0 %v2360
        %3548 = vmatmul.mubr.bf16.gmra.mxu0 %v2643
        %v3549 = vpop.f32.mrf.mxu0
        %v3550 = vadd.f32 %v3389, %v3549
        %v3551 = vpop.f32.mrf.mxu0
        %v3552 = vpop.f32.mrf.mxu0
        %v3553 = vadd.f32 %v3392, %v3552
        %v3554 = vpop.f32.mrf.mxu0
        %3555 = vmatprep.mubr.bf16.mxu0 %v2362
        %3556 = vmatmul.mubr.bf16.gmra.mxu0 %v2646
        %v3557 = vpop.f32.mrf.mxu0
        %v3558 = vadd.f32 %v3397, %v3557
        %v3559 = vpop.f32.mrf.mxu0
        %v3560 = vpop.f32.mrf.mxu0
        %v3561 = vadd.f32 %v3400, %v3560
        %v3562 = vpop.f32.mrf.mxu0
        %3563 = vmatprep.mubr.bf16.mxu0 %v2364
        %3564 = vmatmul.mubr.bf16.gmra.mxu0 %v2649
        %v3565 = vpop.f32.mrf.mxu0
        %v3566 = vadd.f32 %v3405, %v3565
        %v3567 = vpop.f32.mrf.mxu0
        %v3568 = vpop.f32.mrf.mxu0
        %v3569 = vadd.f32 %v3408, %v3568
        %v3570 = vpop.f32.mrf.mxu0
        %3571 = vmatprep.mubr.bf16.mxu0 %v2366
        %3572 = vmatmul.mubr.bf16.gmra.mxu0 %v2652
        %v3573 = vpop.f32.mrf.mxu0
        %v3574 = vadd.f32 %v3413, %v3573
        %v3575 = vpop.f32.mrf.mxu0
        %v3576 = vpop.f32.mrf.mxu0
        %v3577 = vadd.f32 %v3416, %v3576
        %v3578 = vpop.f32.mrf.mxu0
        %3579 = vmatprep.mubr.bf16.mxu0 %v2368
        %3580 = vmatmul.mubr.bf16.gmra.mxu0 %v2655
        %v3581 = vpop.f32.mrf.mxu0
        %v3582 = vadd.f32 %v3421, %v3581
        %v3583 = vpop.f32.mrf.mxu0
        %v3584 = vpop.f32.mrf.mxu0
        %v3585 = vadd.f32 %v3424, %v3584
        %v3586 = vpop.f32.mrf.mxu0
        %3587 = vmatprep.mubr.bf16.mxu0 %v2370
        %3588 = vmatmul.mubr.bf16.gmra.mxu0 %v2658
        %v3589 = vpop.f32.mrf.mxu0
        %v3590 = vadd.f32 %v3429, %v3589
        %v3591 = vpop.f32.mrf.mxu0
        %v3592 = vpop.f32.mrf.mxu0
        %v3593 = vadd.f32 %v3432, %v3592
        %v3594 = vpop.f32.mrf.mxu0
        %3595 = vmatprep.mubr.bf16.mxu0 %v2372
        %3596 = vmatmul.mubr.bf16.gmra.mxu0 %v2661
        %v3597 = vpop.f32.mrf.mxu0
        %v3598 = vadd.f32 %v3437, %v3597
        %v3599 = vpop.f32.mrf.mxu0
        %v3600 = vpop.f32.mrf.mxu0
        %v3601 = vadd.f32 %v3440, %v3600
        %v3602 = vpop.f32.mrf.mxu0
        %3603 = vmatprep.mubr.bf16.mxu0 %v2374
        %3604 = vmatmul.mubr.bf16.gmra.mxu0 %v2664
        %v3605 = vpop.f32.mrf.mxu0
        %v3606 = vadd.f32 %v3445, %v3605
        %v3607 = vpop.f32.mrf.mxu0
        %v3608 = vpop.f32.mrf.mxu0
        %v3609 = vadd.f32 %v3448, %v3608
        %v3610 = vpop.f32.mrf.mxu0
        %3611 = vmatprep.mubr.bf16.mxu0 %v2376
        %3612 = vmatmul.mubr.bf16.gmra.mxu0 %v2667
        %v3613 = vpop.f32.mrf.mxu0
        %v3614 = vadd.f32 %v3453, %v3613
        %v3615 = vpop.f32.mrf.mxu0
        %v3616 = vpop.f32.mrf.mxu0
        %v3617 = vadd.f32 %v3456, %v3616
        %v3618 = vpop.f32.mrf.mxu0
        %3619 = vdwg.mxu0
        %3620 = vmatprep.subr.bf16.mxu0 0
        %3621 = vmatpush1.bf16.msra.mxu0 %v3193
        %3622 = vmatprep.subr.bf16.mxu0 0
        %3623 = vmatpush1.bf16.msra.mxu0 %v3192
        %3624 = vmatprep.subr.bf16.mxu0 0
        %3625 = vmatpush1.bf16.msra.mxu0 %v3191
        %3626 = vmatprep.subr.bf16.mxu0 0
        %3627 = vmatpush1.bf16.msra.mxu0 %v3190
        %3628 = vmatprep.subr.bf16.mxu0 0
        %3629 = vmatpush1.bf16.msra.mxu0 %v3189
        %3630 = vmatprep.subr.bf16.mxu0 0
        %3631 = vmatpush1.bf16.msra.mxu0 %v3188
        %3632 = vmatprep.subr.bf16.mxu0 0
        %3633 = vmatpush1.bf16.msra.mxu0 %v3187
        %3634 = vmatprep.subr.bf16.mxu0 0
        %3635 = vmatpush1.bf16.msra.mxu0 %v3186
        %3636 = vmatprep.subr.bf16.mxu0 0
        %3637 = vmatpush2.bf16.msra.mxu0 %v3201
        %3638 = vmatprep.subr.bf16.mxu0 0
        %3639 = vmatpush2.bf16.msra.mxu0 %v3200
        %3640 = vmatprep.subr.bf16.mxu0 0
        %3641 = vmatpush2.bf16.msra.mxu0 %v3199
        %3642 = vmatprep.subr.bf16.mxu0 0
        %3643 = vmatpush2.bf16.msra.mxu0 %v3198
        %3644 = vmatprep.subr.bf16.mxu0 0
        %3645 = vmatpush2.bf16.msra.mxu0 %v3197
        %3646 = vmatprep.subr.bf16.mxu0 0
        %3647 = vmatpush2.bf16.msra.mxu0 %v3196
        %3648 = vmatprep.subr.bf16.mxu0 0
        %3649 = vmatpush2.bf16.msra.mxu0 %v3195
        %3650 = vmatprep.subr.bf16.mxu0 0
        %3651 = vmatpush2.bf16.msra.mxu0 %v3194
        %3652 = vmatprep.mubr.bf16.mxu0 %v2625
        %3653 = vmatmul.mubr.bf16.gmra.mxu0 %v2403
        %v3654 = vpop.f32.mrf.mxu0
        %v3655 = vadd.f32 %v3494, %v3654
        %v3656 = vpop.f32.mrf.mxu0
        %v3657 = vpop.f32.mrf.mxu0
        %v3658 = vadd.f32 %v3497, %v3657
        %v3659 = vpop.f32.mrf.mxu0
        %3660 = vmatprep.mubr.bf16.mxu0 %v2628
        %3661 = vmatmul.mubr.bf16.gmra.mxu0 %v2415
        %v3662 = vpop.f32.mrf.mxu0
        %v3663 = vadd.f32 %v3502, %v3662
        %v3664 = vpop.f32.mrf.mxu0
        %v3665 = vpop.f32.mrf.mxu0
        %v3666 = vadd.f32 %v3505, %v3665
        %v3667 = vpop.f32.mrf.mxu0
        %3668 = vmatprep.mubr.bf16.mxu0 %v2631
        %3669 = vmatmul.mubr.bf16.gmra.mxu0 %v2427
        %v3670 = vpop.f32.mrf.mxu0
        %v3671 = vadd.f32 %v3510, %v3670
        %v3672 = vpop.f32.mrf.mxu0
        %v3673 = vpop.f32.mrf.mxu0
        %v3674 = vadd.f32 %v3513, %v3673
        %v3675 = vpop.f32.mrf.mxu0
        %3676 = vmatprep.mubr.bf16.mxu0 %v2634
        %3677 = vmatmul.mubr.bf16.gmra.mxu0 %v2439
        %v3678 = vpop.f32.mrf.mxu0
        %v3679 = vadd.f32 %v3518, %v3678
        %v3680 = vpop.f32.mrf.mxu0
        %v3681 = vpop.f32.mrf.mxu0
        %v3682 = vadd.f32 %v3521, %v3681
        %v3683 = vpop.f32.mrf.mxu0
        %3684 = vmatprep.mubr.bf16.mxu0 %v2637
        %3685 = vmatmul.mubr.bf16.gmra.mxu0 %v2451
        %v3686 = vpop.f32.mrf.mxu0
        %v3687 = vadd.f32 %v3526, %v3686
        %v3688 = vpop.f32.mrf.mxu0
        %v3689 = vpop.f32.mrf.mxu0
        %v3690 = vadd.f32 %v3529, %v3689
        %v3691 = vpop.f32.mrf.mxu0
        %3692 = vmatprep.mubr.bf16.mxu0 %v2640
        %3693 = vmatmul.mubr.bf16.gmra.mxu0 %v2463
        %v3694 = vpop.f32.mrf.mxu0
        %v3695 = vadd.f32 %v3534, %v3694
        %v3696 = vpop.f32.mrf.mxu0
        %v3697 = vpop.f32.mrf.mxu0
        %v3698 = vadd.f32 %v3537, %v3697
        %v3699 = vpop.f32.mrf.mxu0
        %3700 = vmatprep.mubr.bf16.mxu0 %v2643
        %3701 = vmatmul.mubr.bf16.gmra.mxu0 %v2475
        %v3702 = vpop.f32.mrf.mxu0
        %v3703 = vadd.f32 %v3542, %v3702
        %v3704 = vpop.f32.mrf.mxu0
        %v3705 = vpop.f32.mrf.mxu0
        %v3706 = vadd.f32 %v3545, %v3705
        %v3707 = vpop.f32.mrf.mxu0
        %3708 = vmatprep.mubr.bf16.mxu0 %v2646
        %3709 = vmatmul.mubr.bf16.gmra.mxu0 %v2487
        %v3710 = vpop.f32.mrf.mxu0
        %v3711 = vadd.f32 %v3550, %v3710
        %v3712 = vpop.f32.mrf.mxu0
        %v3713 = vpop.f32.mrf.mxu0
        %v3714 = vadd.f32 %v3553, %v3713
        %v3715 = vpop.f32.mrf.mxu0
        %3716 = vmatprep.mubr.bf16.mxu0 %v2649
        %3717 = vmatmul.mubr.bf16.gmra.mxu0 %v2499
        %v3718 = vpop.f32.mrf.mxu0
        %v3719 = vadd.f32 %v3558, %v3718
        %v3720 = vpop.f32.mrf.mxu0
        %v3721 = vpop.f32.mrf.mxu0
        %v3722 = vadd.f32 %v3561, %v3721
        %v3723 = vpop.f32.mrf.mxu0
        %3724 = vmatprep.mubr.bf16.mxu0 %v2652
        %3725 = vmatmul.mubr.bf16.gmra.mxu0 %v2511
        %v3726 = vpop.f32.mrf.mxu0
        %v3727 = vadd.f32 %v3566, %v3726
        %v3728 = vpop.f32.mrf.mxu0
        %v3729 = vpop.f32.mrf.mxu0
        %v3730 = vadd.f32 %v3569, %v3729
        %v3731 = vpop.f32.mrf.mxu0
        %3732 = vmatprep.mubr.bf16.mxu0 %v2655
        %3733 = vmatmul.mubr.bf16.gmra.mxu0 %v2523
        %v3734 = vpop.f32.mrf.mxu0
        %v3735 = vadd.f32 %v3574, %v3734
        %v3736 = vpop.f32.mrf.mxu0
        %v3737 = vpop.f32.mrf.mxu0
        %v3738 = vadd.f32 %v3577, %v3737
        %v3739 = vpop.f32.mrf.mxu0
        %3740 = vmatprep.mubr.bf16.mxu0 %v2658
        %3741 = vmatmul.mubr.bf16.gmra.mxu0 %v2535
        %v3742 = vpop.f32.mrf.mxu0
        %v3743 = vadd.f32 %v3582, %v3742
        %v3744 = vpop.f32.mrf.mxu0
        %v3745 = vpop.f32.mrf.mxu0
        %v3746 = vadd.f32 %v3585, %v3745
        %v3747 = vpop.f32.mrf.mxu0
        %3748 = vmatprep.mubr.bf16.mxu0 %v2661
        %3749 = vmatmul.mubr.bf16.gmra.mxu0 %v2547
        %v3750 = vpop.f32.mrf.mxu0
        %v3751 = vadd.f32 %v3590, %v3750
        %v3752 = vpop.f32.mrf.mxu0
        %v3753 = vpop.f32.mrf.mxu0
        %v3754 = vadd.f32 %v3593, %v3753
        %v3755 = vpop.f32.mrf.mxu0
        %3756 = vmatprep.mubr.bf16.mxu0 %v2664
        %3757 = vmatmul.mubr.bf16.gmra.mxu0 %v2559
        %v3758 = vpop.f32.mrf.mxu0
        %v3759 = vadd.f32 %v3598, %v3758
        %v3760 = vpop.f32.mrf.mxu0
        %v3761 = vpop.f32.mrf.mxu0
        %v3762 = vadd.f32 %v3601, %v3761
        %v3763 = vpop.f32.mrf.mxu0
        %3764 = vmatprep.mubr.bf16.mxu0 %v2667
        %3765 = vmatmul.mubr.bf16.gmra.mxu0 %v2571
        %v3766 = vpop.f32.mrf.mxu0
        %v3767 = vadd.f32 %v3606, %v3766
        %v3768 = vpop.f32.mrf.mxu0
        %v3769 = vpop.f32.mrf.mxu0
        %v3770 = vadd.f32 %v3609, %v3769
        %v3771 = vpop.f32.mrf.mxu0
        %3772 = vmatprep.mubr.bf16.mxu0 %v2701
        %3773 = vmatmul.mubr.bf16.gmra.mxu0 %v2695
        %v3774 = vpop.f32.mrf.mxu0
        %v3775 = vadd.f32 %v3614, %v3774
        %v3776 = vpop.f32.mrf.mxu0
        %v3777 = vpop.f32.mrf.mxu0
        %v3778 = vadd.f32 %v3617, %v3777
        %v3779 = vpop.f32.mrf.mxu0
        %3780 = vdwg.mxu0
        %3781 = vmatprep.subr.bf16.mxu0 0
        %3782 = vmatpush1.bf16.msra.mxu0 %v3209
        %3783 = vmatprep.subr.bf16.mxu0 0
        %3784 = vmatpush1.bf16.msra.mxu0 %v3208
        %3785 = vmatprep.subr.bf16.mxu0 0
        %3786 = vmatpush1.bf16.msra.mxu0 %v3207
        %3787 = vmatprep.subr.bf16.mxu0 0
        %3788 = vmatpush1.bf16.msra.mxu0 %v3206
        %3789 = vmatprep.subr.bf16.mxu0 0
        %3790 = vmatpush1.bf16.msra.mxu0 %v3205
        %3791 = vmatprep.subr.bf16.mxu0 0
        %3792 = vmatpush1.bf16.msra.mxu0 %v3204
        %3793 = vmatprep.subr.bf16.mxu0 0
        %3794 = vmatpush1.bf16.msra.mxu0 %v3203
        %3795 = vmatprep.subr.bf16.mxu0 0
        %3796 = vmatpush1.bf16.msra.mxu0 %v3202
        %3797 = vmatprep.subr.bf16.mxu0 0
        %3798 = vmatpush2.bf16.msra.mxu0 %v3217
        %3799 = vmatprep.subr.bf16.mxu0 0
        %3800 = vmatpush2.bf16.msra.mxu0 %v3216
        %3801 = vmatprep.subr.bf16.mxu0 0
        %3802 = vmatpush2.bf16.msra.mxu0 %v3215
        %3803 = vmatprep.subr.bf16.mxu0 0
        %3804 = vmatpush2.bf16.msra.mxu0 %v3214
        %3805 = vmatprep.subr.bf16.mxu0 0
        %3806 = vmatpush2.bf16.msra.mxu0 %v3213
        %3807 = vmatprep.subr.bf16.mxu0 0
        %3808 = vmatpush2.bf16.msra.mxu0 %v3212
        %3809 = vmatprep.subr.bf16.mxu0 0
        %3810 = vmatpush2.bf16.msra.mxu0 %v3211
        %3811 = vmatprep.subr.bf16.mxu0 0
        %3812 = vmatpush2.bf16.msra.mxu0 %v3210
        %3813 = vmatprep.mubr.bf16.mxu0 %v2415
        %3814 = vmatmul.mubr.bf16.gmra.mxu0 %v2348
        %v3815 = vpop.f32.mrf.mxu0
        %v3816 = vadd.f32 %v3655, %v3815
        %v3817 = vpop.f32.mrf.mxu0
        %v3818 = vpop.f32.mrf.mxu0
        %v3819 = vadd.f32 %v3658, %v3818
        %v3820 = vpop.f32.mrf.mxu0
        %3821 = vmatprep.mubr.bf16.mxu0 %v2427
        %3822 = vmatmul.mubr.bf16.gmra.mxu0 %v2350
        %v3823 = vpop.f32.mrf.mxu0
        %v3824 = vadd.f32 %v3663, %v3823
        %v3825 = vpop.f32.mrf.mxu0
        %v3826 = vpop.f32.mrf.mxu0
        %v3827 = vadd.f32 %v3666, %v3826
        %v3828 = vpop.f32.mrf.mxu0
        %3829 = vmatprep.mubr.bf16.mxu0 %v2439
        %3830 = vmatmul.mubr.bf16.gmra.mxu0 %v2352
        %v3831 = vpop.f32.mrf.mxu0
        %v3832 = vadd.f32 %v3671, %v3831
        %v3833 = vpop.f32.mrf.mxu0
        %v3834 = vpop.f32.mrf.mxu0
        %v3835 = vadd.f32 %v3674, %v3834
        %v3836 = vpop.f32.mrf.mxu0
        %3837 = vmatprep.mubr.bf16.mxu0 %v2451
        %3838 = vmatmul.mubr.bf16.gmra.mxu0 %v2354
        %v3839 = vpop.f32.mrf.mxu0
        %v3840 = vadd.f32 %v3679, %v3839
        %v3841 = vpop.f32.mrf.mxu0
        %v3842 = vpop.f32.mrf.mxu0
        %v3843 = vadd.f32 %v3682, %v3842
        %v3844 = vpop.f32.mrf.mxu0
        %3845 = vmatprep.mubr.bf16.mxu0 %v2463
        %3846 = vmatmul.mubr.bf16.gmra.mxu0 %v2356
        %v3847 = vpop.f32.mrf.mxu0
        %v3848 = vadd.f32 %v3687, %v3847
        %v3849 = vpop.f32.mrf.mxu0
        %v3850 = vpop.f32.mrf.mxu0
        %v3851 = vadd.f32 %v3690, %v3850
        %v3852 = vpop.f32.mrf.mxu0
        %3853 = vmatprep.mubr.bf16.mxu0 %v2475
        %3854 = vmatmul.mubr.bf16.gmra.mxu0 %v2358
        %v3855 = vpop.f32.mrf.mxu0
        %v3856 = vadd.f32 %v3695, %v3855
        %v3857 = vpop.f32.mrf.mxu0
        %v3858 = vpop.f32.mrf.mxu0
        %v3859 = vadd.f32 %v3698, %v3858
        %v3860 = vpop.f32.mrf.mxu0
        %3861 = vmatprep.mubr.bf16.mxu0 %v2487
        %3862 = vmatmul.mubr.bf16.gmra.mxu0 %v2360
        %v3863 = vpop.f32.mrf.mxu0
        %v3864 = vadd.f32 %v3703, %v3863
        %v3865 = vpop.f32.mrf.mxu0
        %v3866 = vpop.f32.mrf.mxu0
        %v3867 = vadd.f32 %v3706, %v3866
        %v3868 = vpop.f32.mrf.mxu0
        %3869 = vmatprep.mubr.bf16.mxu0 %v2499
        %3870 = vmatmul.mubr.bf16.gmra.mxu0 %v2362
        %v3871 = vpop.f32.mrf.mxu0
        %v3872 = vadd.f32 %v3711, %v3871
        %v3873 = vpop.f32.mrf.mxu0
        %v3874 = vpop.f32.mrf.mxu0
        %v3875 = vadd.f32 %v3714, %v3874
        %v3876 = vpop.f32.mrf.mxu0
        %3877 = vmatprep.mubr.bf16.mxu0 %v2511
        %3878 = vmatmul.mubr.bf16.gmra.mxu0 %v2364
        %v3879 = vpop.f32.mrf.mxu0
        %v3880 = vadd.f32 %v3719, %v3879
        %v3881 = vpop.f32.mrf.mxu0
        %v3882 = vpop.f32.mrf.mxu0
        %v3883 = vadd.f32 %v3722, %v3882
        %v3884 = vpop.f32.mrf.mxu0
        %3885 = vmatprep.mubr.bf16.mxu0 %v2523
        %3886 = vmatmul.mubr.bf16.gmra.mxu0 %v2366
        %v3887 = vpop.f32.mrf.mxu0
        %v3888 = vadd.f32 %v3727, %v3887
        %v3889 = vpop.f32.mrf.mxu0
        %v3890 = vpop.f32.mrf.mxu0
        %v3891 = vadd.f32 %v3730, %v3890
        %v3892 = vpop.f32.mrf.mxu0
        %3893 = vmatprep.mubr.bf16.mxu0 %v2535
        %3894 = vmatmul.mubr.bf16.gmra.mxu0 %v2368
        %v3895 = vpop.f32.mrf.mxu0
        %v3896 = vadd.f32 %v3735, %v3895
        %v3897 = vpop.f32.mrf.mxu0
        %v3898 = vpop.f32.mrf.mxu0
        %v3899 = vadd.f32 %v3738, %v3898
        %v3900 = vpop.f32.mrf.mxu0
        %3901 = vmatprep.mubr.bf16.mxu0 %v2547
        %3902 = vmatmul.mubr.bf16.gmra.mxu0 %v2370
        %v3903 = vpop.f32.mrf.mxu0
        %v3904 = vadd.f32 %v3743, %v3903
        %v3905 = vpop.f32.mrf.mxu0
        %v3906 = vpop.f32.mrf.mxu0
        %v3907 = vadd.f32 %v3746, %v3906
        %v3908 = vpop.f32.mrf.mxu0
        %3909 = vmatprep.mubr.bf16.mxu0 %v2559
        %3910 = vmatmul.mubr.bf16.gmra.mxu0 %v2372
        %v3911 = vpop.f32.mrf.mxu0
        %v3912 = vadd.f32 %v3751, %v3911
        %v3913 = vpop.f32.mrf.mxu0
        %v3914 = vpop.f32.mrf.mxu0
        %v3915 = vadd.f32 %v3754, %v3914
        %v3916 = vpop.f32.mrf.mxu0
        %3917 = vmatprep.mubr.bf16.mxu0 %v2571
        %3918 = vmatmul.mubr.bf16.gmra.mxu0 %v2374
        %v3919 = vpop.f32.mrf.mxu0
        %v3920 = vadd.f32 %v3759, %v3919
        %v3921 = vpop.f32.mrf.mxu0
        %v3922 = vpop.f32.mrf.mxu0
        %v3923 = vadd.f32 %v3762, %v3922
        %v3924 = vpop.f32.mrf.mxu0
        %3925 = vmatprep.mubr.bf16.mxu0 %v2695
        %3926 = vmatmul.mubr.bf16.gmra.mxu0 %v2376
        %v3927 = vpop.f32.mrf.mxu0
        %v3928 = vadd.f32 %v3767, %v3927
        %v3929 = vpop.f32.mrf.mxu0
        %v3930 = vpop.f32.mrf.mxu0
        %v3931 = vadd.f32 %v3770, %v3930
        %v3932 = vpop.f32.mrf.mxu0
        %3933 = vmatprep.mubr.bf16.mxu0 %v2714
        %3934 = vmatmul.mubr.bf16.gmra.mxu0 %v2378
        %v3935 = vpop.f32.mrf.mxu0
        %v3936 = vadd.f32 %v3775, %v3935
        %v3937 = vpop.f32.mrf.mxu0
        %v3938 = vpop.f32.mrf.mxu0
        %v3939 = vadd.f32 %v3778, %v3938
        %v3940 = vpop.f32.mrf.mxu0
        %3941 = vdwg.mxu0
        %3942 = vmatprep.subr.bf16.mxu0 0
        %3943 = vmatpush1.bf16.msra.mxu0 %v3225
        %3944 = vmatprep.subr.bf16.mxu0 0
        %3945 = vmatpush1.bf16.msra.mxu0 %v3224
        %3946 = vmatprep.subr.bf16.mxu0 0
        %3947 = vmatpush1.bf16.msra.mxu0 %v3223
        %3948 = vmatprep.subr.bf16.mxu0 0
        %3949 = vmatpush1.bf16.msra.mxu0 %v3222
        %3950 = vmatprep.subr.bf16.mxu0 0
        %3951 = vmatpush1.bf16.msra.mxu0 %v3221
        %3952 = vmatprep.subr.bf16.mxu0 0
        %3953 = vmatpush1.bf16.msra.mxu0 %v3220
        %3954 = vmatprep.subr.bf16.mxu0 0
        %3955 = vmatpush1.bf16.msra.mxu0 %v3219
        %3956 = vmatprep.subr.bf16.mxu0 0
        %3957 = vmatpush1.bf16.msra.mxu0 %v3218
        %3958 = vmatprep.subr.bf16.mxu0 0
        %3959 = vmatpush2.bf16.msra.mxu0 0
        %3960 = vmatprep.subr.bf16.mxu0 0
        %3961 = vmatpush2.bf16.msra.mxu0 0
        %3962 = vmatprep.subr.bf16.mxu0 0
        %3963 = vmatpush2.bf16.msra.mxu0 0
        %3964 = vmatprep.subr.bf16.mxu0 0
        %3965 = vmatpush2.bf16.msra.mxu0 0
        %3966 = vmatprep.subr.bf16.mxu0 0
        %3967 = vmatpush2.bf16.msra.mxu0 0
        %3968 = vmatprep.subr.bf16.mxu0 0
        %3969 = vmatpush2.bf16.msra.mxu0 0
        %3970 = vmatprep.subr.bf16.mxu0 0
        %3971 = vmatpush2.bf16.msra.mxu0 0
        %3972 = vmatprep.subr.bf16.mxu0 0
        %3973 = vmatpush2.bf16.msra.mxu0 0
        %3974 = vmatprep.mubr.bf16.mxu0 0
        %3975 = vmatmul.mubr.bf16.gmra.mxu0 %v2628
        %v3976 = vpop.f32.mrf.mxu0
        %v3977 = vadd.f32 %v3816, %v3976
        %v3978 = vpop.f32.mrf.mxu0
        %v3979 = vpop.f32.mrf.mxu0
        %v3980 = vadd.f32 %v3819, %v3979
        %v3981 = vpop.f32.mrf.mxu0
        %3982 = vmatprep.mubr.bf16.mxu0 0
        %3983 = vmatmul.mubr.bf16.gmra.mxu0 %v2631
        %v3984 = vpop.f32.mrf.mxu0
        %v3985 = vadd.f32 %v3824, %v3984
        %v3986 = vpop.f32.mrf.mxu0
        %v3987 = vpop.f32.mrf.mxu0
        %v3988 = vadd.f32 %v3827, %v3987
        %v3989 = vpop.f32.mrf.mxu0
        %3990 = vmatprep.mubr.bf16.mxu0 0
        %3991 = vmatmul.mubr.bf16.gmra.mxu0 %v2634
        %v3992 = vpop.f32.mrf.mxu0
        %v3993 = vadd.f32 %v3832, %v3992
        %v3994 = vpop.f32.mrf.mxu0
        %v3995 = vpop.f32.mrf.mxu0
        %v3996 = vadd.f32 %v3835, %v3995
        %v3997 = vpop.f32.mrf.mxu0
        %3998 = vmatprep.mubr.bf16.mxu0 0
        %3999 = vmatmul.mubr.bf16.gmra.mxu0 %v2637
        %v4000 = vpop.f32.mrf.mxu0
        %v4001 = vadd.f32 %v3840, %v4000
        %v4002 = vpop.f32.mrf.mxu0
        %v4003 = vpop.f32.mrf.mxu0
        %v4004 = vadd.f32 %v3843, %v4003
        %v4005 = vpop.f32.mrf.mxu0
        %4006 = vmatprep.mubr.bf16.mxu0 0
        %4007 = vmatmul.mubr.bf16.gmra.mxu0 %v2640
        %v4008 = vpop.f32.mrf.mxu0
        %v4009 = vadd.f32 %v3848, %v4008
        %v4010 = vpop.f32.mrf.mxu0
        %v4011 = vpop.f32.mrf.mxu0
        %v4012 = vadd.f32 %v3851, %v4011
        %v4013 = vpop.f32.mrf.mxu0
        %4014 = vmatprep.mubr.bf16.mxu0 0
        %4015 = vmatmul.mubr.bf16.gmra.mxu0 %v2643
        %v4016 = vpop.f32.mrf.mxu0
        %v4017 = vadd.f32 %v3856, %v4016
        %v4018 = vpop.f32.mrf.mxu0
        %v4019 = vpop.f32.mrf.mxu0
        %v4020 = vadd.f32 %v3859, %v4019
        %v4021 = vpop.f32.mrf.mxu0
        %4022 = vmatprep.mubr.bf16.mxu0 0
        %4023 = vmatmul.mubr.bf16.gmra.mxu0 %v2646
        %v4024 = vpop.f32.mrf.mxu0
        %v4025 = vadd.f32 %v3864, %v4024
        %v4026 = vpop.f32.mrf.mxu0
        %v4027 = vpop.f32.mrf.mxu0
        %v4028 = vadd.f32 %v3867, %v4027
        %v4029 = vpop.f32.mrf.mxu0
        %4030 = vmatprep.mubr.bf16.mxu0 0
        %4031 = vmatmul.mubr.bf16.gmra.mxu0 %v2649
        %v4032 = vpop.f32.mrf.mxu0
        %v4033 = vadd.f32 %v3872, %v4032
        %v4034 = vpop.f32.mrf.mxu0
        %v4035 = vpop.f32.mrf.mxu0
        %v4036 = vadd.f32 %v3875, %v4035
        %v4037 = vpop.f32.mrf.mxu0
        %4038 = vmatprep.mubr.bf16.mxu0 0
        %4039 = vmatmul.mubr.bf16.gmra.mxu0 %v2652
        %v4040 = vpop.f32.mrf.mxu0
        %v4041 = vadd.f32 %v3880, %v4040
        %v4042 = vpop.f32.mrf.mxu0
        %v4043 = vpop.f32.mrf.mxu0
        %v4044 = vadd.f32 %v3883, %v4043
        %v4045 = vpop.f32.mrf.mxu0
        %4046 = vmatprep.mubr.bf16.mxu0 0
        %4047 = vmatmul.mubr.bf16.gmra.mxu0 %v2655
        %v4048 = vpop.f32.mrf.mxu0
        %v4049 = vadd.f32 %v3888, %v4048
        %v4050 = vpop.f32.mrf.mxu0
        %v4051 = vpop.f32.mrf.mxu0
        %v4052 = vadd.f32 %v3891, %v4051
        %v4053 = vpop.f32.mrf.mxu0
        %4054 = vmatprep.mubr.bf16.mxu0 0
        %4055 = vmatmul.mubr.bf16.gmra.mxu0 %v2658
        %v4056 = vpop.f32.mrf.mxu0
        %v4057 = vadd.f32 %v3896, %v4056
        %v4058 = vpop.f32.mrf.mxu0
        %v4059 = vpop.f32.mrf.mxu0
        %v4060 = vadd.f32 %v3899, %v4059
        %v4061 = vpop.f32.mrf.mxu0
        %4062 = vmatprep.mubr.bf16.mxu0 0
        %4063 = vmatmul.mubr.bf16.gmra.mxu0 %v2661
        %v4064 = vpop.f32.mrf.mxu0
        %v4065 = vadd.f32 %v3904, %v4064
        %v4066 = vpop.f32.mrf.mxu0
        %v4067 = vpop.f32.mrf.mxu0
        %v4068 = vadd.f32 %v3907, %v4067
        %v4069 = vpop.f32.mrf.mxu0
        %4070 = vmatprep.mubr.bf16.mxu0 0
        %4071 = vmatmul.mubr.bf16.gmra.mxu0 %v2664
        %v4072 = vpop.f32.mrf.mxu0
        %v4073 = vadd.f32 %v3912, %v4072
        %v4074 = vpop.f32.mrf.mxu0
        %v4075 = vpop.f32.mrf.mxu0
        %v4076 = vadd.f32 %v3915, %v4075
        %v4077 = vpop.f32.mrf.mxu0
        %4078 = vmatprep.mubr.bf16.mxu0 0
        %4079 = vmatmul.mubr.bf16.gmra.mxu0 %v2667
        %v4080 = vpop.f32.mrf.mxu0
        %v4081 = vadd.f32 %v3920, %v4080
        %v4082 = vpop.f32.mrf.mxu0
        %v4083 = vpop.f32.mrf.mxu0
        %v4084 = vadd.f32 %v3923, %v4083
        %v4085 = vpop.f32.mrf.mxu0
        %4086 = vmatprep.mubr.bf16.mxu0 0
        %4087 = vmatmul.mubr.bf16.gmra.mxu0 %v2701
        %v4088 = vpop.f32.mrf.mxu0
        %v4089 = vadd.f32 %v3928, %v4088
        %v4090 = vpop.f32.mrf.mxu0
        %v4091 = vpop.f32.mrf.mxu0
        %v4092 = vadd.f32 %v3931, %v4091
        %v4093 = vpop.f32.mrf.mxu0
        %4094 = vmatprep.mubr.bf16.mxu0 0
        %4095 = vmatmul.mubr.bf16.gmra.mxu0 %v2720
        %v4096 = vpop.f32.mrf.mxu0
        %v4097 = vadd.f32 %v3936, %v4096
        %v4098 = vpop.f32.mrf.mxu0
        %v4099 = vpop.f32.mrf.mxu0
        %v4100 = vadd.f32 %v3939, %v4099
        %v4101 = vpop.f32.mrf.mxu0
        %4102 = vdwg.mxu0
        %vm4151 = vcmask 1046528
        %v4152 = vrot.slane %v281, 1
        %v4153 = vrot.slane %v282, 1
        %v4154 = vsel %vm4151, %v4152, %v4153
        %v4155 = vrot.slane %v283, 1
        %v4156 = vsel %vm4151, %v4153, %v4155
        %v4157 = vrot.slane %v284, 1
        %v4158 = vrot.slane %v285, 1
        %v4159 = vsel %vm4151, %v4157, %v4158
        %v4160 = vrot.slane %v286, 1
        %v4161 = vsel %vm4151, %v4158, %v4160
        %v4162 = vrot.slane %v287, 1
        %v4163 = vrot.slane %v288, 1
        %v4164 = vsel %vm4151, %v4162, %v4163
        %v4165 = vrot.slane %v289, 1
        %v4166 = vsel %vm4151, %v4163, %v4165
        %v4167 = vrot.slane %v290, 1
        %v4168 = vrot.slane %v291, 1
        %v4169 = vsel %vm4151, %v4167, %v4168
        %v4170 = vrot.slane %v292, 1
        %v4171 = vsel %vm4151, %v4168, %v4170
        %v4172 = vrot.slane %v293, 1
        %v4173 = vrot.slane %v294, 1
        %v4174 = vsel %vm4151, %v4172, %v4173
        %v4175 = vrot.slane %v295, 1
        %v4176 = vsel %vm4151, %v4173, %v4175
        %v4177 = vrot.slane %v296, 1
        %v4178 = vrot.slane %v297, 1
        %v4179 = vsel %vm4151, %v4177, %v4178
        %v4180 = vrot.slane %v298, 1
        %v4181 = vsel %vm4151, %v4178, %v4180
        %v4182 = vrot.slane %v299, 1
        %v4183 = vrot.slane %v300, 1
        %v4184 = vsel %vm4151, %v4182, %v4183
        %v4185 = vrot.slane %v301, 1
        %v4186 = vsel %vm4151, %v4183, %v4185
        %v4187 = vrot.slane %v302, 1
        %v4188 = vrot.slane %v303, 1
        %v4189 = vsel %vm4151, %v4187, %v4188
        %v4190 = vrot.slane %v304, 1
        %v4191 = vsel %vm4151, %v4188, %v4190
        %v4192 = vrot.slane %v305, 1
        %v4193 = vrot.slane %v306, 1
        %v4194 = vsel %vm4151, %v4192, %v4193
        %v4195 = vrot.slane %v307, 1
        %v4196 = vsel %vm4151, %v4193, %v4195
        %v4197 = vrot.slane %v308, 1
        %v4198 = vrot.slane %v309, 1
        %v4199 = vsel %vm4151, %v4197, %v4198
        %v4200 = vrot.slane %v310, 1
        %v4201 = vsel %vm4151, %v4198, %v4200
        %v4202 = vrot.slane %v311, 1
        %v4203 = vrot.slane %v312, 1
        %v4204 = vsel %vm4151, %v4202, %v4203
        %v4205 = vrot.slane %v313, 1
        %v4206 = vsel %vm4151, %v4203, %v4205
        %v4207 = vrot.slane %v314, 1
        %v4208 = vrot.slane %v315, 1
        %v4209 = vsel %vm4151, %v4207, %v4208
        %v4210 = vrot.slane %v316, 1
        %v4211 = vsel %vm4151, %v4208, %v4210
        %v4212 = vrot.slane %v317, 1
        %v4213 = vrot.slane %v318, 1
        %v4214 = vsel %vm4151, %v4212, %v4213
        %v4215 = vrot.slane %v319, 1
        %v4216 = vsel %vm4151, %v4213, %v4215
        %v4217 = vrot.slane %v320, 1
        %v4218 = vrot.slane %v321, 1
        %v4219 = vsel %vm4151, %v4217, %v4218
        %v4220 = vrot.slane %v322, 1
        %v4221 = vsel %vm4151, %v4218, %v4220
        %v4222 = vrot.slane %v323, 1
        %v4223 = vrot.slane %v324, 1
        %v4224 = vsel %vm4151, %v4222, %v4223
        %v4225 = vrot.slane %v325, 1
        %v4226 = vsel %vm4151, %v4223, %v4225
        %v4227 = vrot.slane %v326, 1
        %v4228 = vrot.slane %v327, 1
        %v4229 = vsel %vm4151, %v4227, %v4228
        %v4230 = vrot.slane %v328, 1
        %v4231 = vsel %vm4151, %v4228, %v4230
        %v4264 = vld [vmem:[%s5] sm:$0x1]
        %v4266 = vlaneseq
        %v4267 = vshrl.u32 %v4266, 7
        %v4268 = vsub.s32 0, %v4267
        %v4269 = vrot.slane %v4264, %v4268
        %v4271 = vmul.f32 %v3977, %v4269
        %v4272 = vmul.f32 %v3980, %v4269
        %v4273 = vmul.f32 %v3985, %v4269
        %v4274 = vmul.f32 %v3988, %v4269
        %v4275 = vmul.f32 %v3993, %v4269
        %v4276 = vmul.f32 %v3996, %v4269
        %v4277 = vmul.f32 %v4001, %v4269
        %v4278 = vmul.f32 %v4004, %v4269
        %v4279 = vmul.f32 %v4009, %v4269
        %v4280 = vmul.f32 %v4012, %v4269
        %v4281 = vmul.f32 %v4017, %v4269
        %v4282 = vmul.f32 %v4020, %v4269
        %v4283 = vmul.f32 %v4025, %v4269
        %v4284 = vmul.f32 %v4028, %v4269
        %v4285 = vmul.f32 %v4033, %v4269
        %v4286 = vmul.f32 %v4036, %v4269
        %v4287 = vmul.f32 %v4041, %v4269
        %v4288 = vmul.f32 %v4044, %v4269
        %v4289 = vmul.f32 %v4049, %v4269
        %v4290 = vmul.f32 %v4052, %v4269
        %v4291 = vmul.f32 %v4057, %v4269
        %v4292 = vmul.f32 %v4060, %v4269
        %v4293 = vmul.f32 %v4065, %v4269
        %v4294 = vmul.f32 %v4068, %v4269
        %v4295 = vmul.f32 %v4073, %v4269
        %v4296 = vmul.f32 %v4076, %v4269
        %v4297 = vmul.f32 %v4081, %v4269
        %v4298 = vmul.f32 %v4084, %v4269
        %v4299 = vmul.f32 %v4089, %v4269
        %v4300 = vmul.f32 %v4092, %v4269
        %v4301 = vmul.f32 %v4097, %v4269
        %v4302 = vmul.f32 %v4100, %v4269
        %v4303 = vld [vmem:[%s6] sm:$0x1]
        %v4305 = vlaneseq
        %v4306 = vshrl.u32 %v4305, 7
        %v4307 = vsub.s32 0, %v4306
        %v4308 = vrot.slane %v4303, %v4307
        %v4310 = vadd.f32 %v4271, %v4308
        %v4311 = vadd.f32 %v4272, %v4308
        %v4312 = vadd.f32 %v4273, %v4308
        %v4313 = vadd.f32 %v4274, %v4308
        %v4314 = vadd.f32 %v4275, %v4308
        %v4315 = vadd.f32 %v4276, %v4308
        %v4316 = vadd.f32 %v4277, %v4308
        %v4317 = vadd.f32 %v4278, %v4308
        %v4318 = vadd.f32 %v4279, %v4308
        %v4319 = vadd.f32 %v4280, %v4308
        %v4320 = vadd.f32 %v4281, %v4308
        %v4321 = vadd.f32 %v4282, %v4308
        %v4322 = vadd.f32 %v4283, %v4308
        %v4323 = vadd.f32 %v4284, %v4308
        %v4324 = vadd.f32 %v4285, %v4308
        %v4325 = vadd.f32 %v4286, %v4308
        %v4326 = vadd.f32 %v4287, %v4308
        %v4327 = vadd.f32 %v4288, %v4308
        %v4328 = vadd.f32 %v4289, %v4308
        %v4329 = vadd.f32 %v4290, %v4308
        %v4330 = vadd.f32 %v4291, %v4308
        %v4331 = vadd.f32 %v4292, %v4308
        %v4332 = vadd.f32 %v4293, %v4308
        %v4333 = vadd.f32 %v4294, %v4308
        %v4334 = vadd.f32 %v4295, %v4308
        %v4335 = vadd.f32 %v4296, %v4308
        %v4336 = vadd.f32 %v4297, %v4308
        %v4337 = vadd.f32 %v4298, %v4308
        %v4338 = vadd.f32 %v4299, %v4308
        %v4339 = vadd.f32 %v4300, %v4308
        %v4340 = vadd.f32 %v4301, %v4308
        %v4341 = vadd.f32 %v4302, %v4308
        %v4342 = vadd.f32 %v4310, %v4154
        %v4343 = vadd.f32 %v4311, %v4156
        %v4344 = vadd.f32 %v4312, %v4159
        %v4345 = vadd.f32 %v4313, %v4161
        %v4346 = vadd.f32 %v4314, %v4164
        %v4347 = vadd.f32 %v4315, %v4166
        %v4348 = vadd.f32 %v4316, %v4169
        %v4349 = vadd.f32 %v4317, %v4171
        %v4350 = vadd.f32 %v4318, %v4174
        %v4351 = vadd.f32 %v4319, %v4176
        %v4352 = vadd.f32 %v4320, %v4179
        %v4353 = vadd.f32 %v4321, %v4181
        %v4354 = vadd.f32 %v4322, %v4184
        %v4355 = vadd.f32 %v4323, %v4186
        %v4356 = vadd.f32 %v4324, %v4189
        %v4357 = vadd.f32 %v4325, %v4191
        %v4358 = vadd.f32 %v4326, %v4194
        %v4359 = vadd.f32 %v4327, %v4196
        %v4360 = vadd.f32 %v4328, %v4199
        %v4361 = vadd.f32 %v4329, %v4201
        %v4362 = vadd.f32 %v4330, %v4204
        %v4363 = vadd.f32 %v4331, %v4206
        %v4364 = vadd.f32 %v4332, %v4209
        %v4365 = vadd.f32 %v4333, %v4211
        %v4366 = vadd.f32 %v4334, %v4214
        %v4367 = vadd.f32 %v4335, %v4216
        %v4368 = vadd.f32 %v4336, %v4219
        %v4369 = vadd.f32 %v4337, %v4221
        %v4370 = vadd.f32 %v4338, %v4224
        %v4371 = vadd.f32 %v4339, %v4226
        %v4372 = vadd.f32 %v4340, %v4229
        %v4373 = vadd.f32 %v4341, %v4231
        %v4374 = vmax.f32 %v4342, 0.0
        %v4375 = vmax.f32 %v4343, 0.0
        %v4376 = vmax.f32 %v4344, 0.0
        %v4377 = vmax.f32 %v4345, 0.0
        %v4378 = vmax.f32 %v4346, 0.0
        %v4379 = vmax.f32 %v4347, 0.0
        %v4380 = vmax.f32 %v4348, 0.0
        %v4381 = vmax.f32 %v4349, 0.0
        %v4382 = vmax.f32 %v4350, 0.0
        %v4383 = vmax.f32 %v4351, 0.0
        %v4384 = vmax.f32 %v4352, 0.0
        %v4385 = vmax.f32 %v4353, 0.0
        %v4386 = vmax.f32 %v4354, 0.0
        %v4387 = vmax.f32 %v4355, 0.0
        %v4388 = vmax.f32 %v4356, 0.0
        %v4389 = vmax.f32 %v4357, 0.0
        %v4390 = vmax.f32 %v4358, 0.0
        %v4391 = vmax.f32 %v4359, 0.0
        %v4392 = vmax.f32 %v4360, 0.0
        %v4393 = vmax.f32 %v4361, 0.0
        %v4394 = vmax.f32 %v4362, 0.0
        %v4395 = vmax.f32 %v4363, 0.0
        %v4396 = vmax.f32 %v4364, 0.0
        %v4397 = vmax.f32 %v4365, 0.0
        %v4398 = vmax.f32 %v4366, 0.0
        %v4399 = vmax.f32 %v4367, 0.0
        %v4400 = vmax.f32 %v4368, 0.0
        %v4401 = vmax.f32 %v4369, 0.0
        %v4402 = vmax.f32 %v4370, 0.0
        %v4403 = vmax.f32 %v4371, 0.0
        %v4404 = vmax.f32 %v4372, 0.0
        %v4405 = vmax.f32 %v4373, 0.0
        %4406 = vst [vmem:[%s271] sm:$0xff] %v4374
        %4407 = vst [vmem:[%s271 + $0x8] sm:$0xff] %v4375
        %4408 = vst [vmem:[%s271 + $0x10] sm:$0xff] %v4376
        %4409 = vst [vmem:[%s271 + $0x18] sm:$0xff] %v4377
        %4410 = vst [vmem:[%s271 + $0x20] sm:$0xff] %v4378
        %4411 = vst [vmem:[%s271 + $0x28] sm:$0xff] %v4379
        %4412 = vst [vmem:[%s271 + $0x30] sm:$0xff] %v4380
        %4413 = vst [vmem:[%s271 + $0x38] sm:$0xff] %v4381
        %4414 = vst [vmem:[%s271 + $0x40] sm:$0xff] %v4382
        %4415 = vst [vmem:[%s271 + $0x48] sm:$0xff] %v4383
        %4416 = vst [vmem:[%s271 + $0x50] sm:$0xff] %v4384
        %4417 = vst [vmem:[%s271 + $0x58] sm:$0xff] %v4385
        %4418 = vst [vmem:[%s271 + $0x60] sm:$0xff] %v4386
        %4419 = vst [vmem:[%s271 + $0x68] sm:$0xff] %v4387
        %4420 = vst [vmem:[%s271 + $0x70] sm:$0xff] %v4388
        %4421 = vst [vmem:[%s271 + $0x78] sm:$0xff] %v4389
        %4422 = vst [vmem:[%s271 + $0x80] sm:$0xff] %v4390
        %4423 = vst [vmem:[%s271 + $0x88] sm:$0xff] %v4391
        %4424 = vst [vmem:[%s271 + $0x90] sm:$0xff] %v4392
        %4425 = vst [vmem:[%s271 + $0x98] sm:$0xff] %v4393
        %4426 = vst [vmem:[%s271 + $0xa0] sm:$0xff] %v4394
        %4427 = vst [vmem:[%s271 + $0xa8] sm:$0xff] %v4395
        %4428 = vst [vmem:[%s271 + $0xb0] sm:$0xff] %v4396
        %4429 = vst [vmem:[%s271 + $0xb8] sm:$0xff] %v4397
        %4430 = vst [vmem:[%s271 + $0xc0] sm:$0xff] %v4398
        %4431 = vst [vmem:[%s271 + $0xc8] sm:$0xff] %v4399
        %4432 = vst [vmem:[%s271 + $0xd0] sm:$0xff] %v4400
        %4433 = vst [vmem:[%s271 + $0xd8] sm:$0xff] %v4401
        %4434 = vst [vmem:[%s271 + $0xe0] sm:$0xff] %v4402
        %4435 = vst [vmem:[%s271 + $0xe8] sm:$0xff] %v4403
        %4436 = vst [vmem:[%s271 + $0xf0] sm:$0xff] %v4404
        %4437 = vst [vmem:[%s271 + $0xf8] sm:$0xff] %v4405
        %s4438 = sand.u32 %s181, 1
        %s4439 = scalar_lea.sflag [#allocation4], %s4438
        %s4440 = sand.u32 %s181, 1
        %s4441 = smul.addr %s4440, 256
        %s4442 = scalar_lea.vmem [#allocation3], %s4441
        // Predicated region
        $region49: #{tpu_custom_call.1} parent=47 // pred_check
          %p4443 = pneg %p191
        $region50: #{tpu_custom_call.1} parent=47 // pred_check_branch
          %4445 = sbr.rel (%p4443) target = $region52
        $region51: #{tpu_custom_call.1} parent=47 // pred_region
          %s4447 = ssub.s32 4096, 4096
          %4448 = vsyncadd %s4439, %s4447
          %s4449 = smul.addr %s21, 32
          %s4450 = smul.addr %s4449, 128
          %s4451 = scalar_lea.hbm %s7, %s4450
          %s4452 = sshll.u32 %s4442, 4
          %s4453 = int_to_ptr.vmem [resolvable:$true] %s4452
          %4458 = dma.vmem_to_hbm [thread:$0]  %s4453, 4096, %s4451, %s4439, 128, 128, 8
        $region52: #{tpu_custom_call.1} parent=47 // pred_fallthru
          _
      $region48: #{tpu_custom_call.1} parent=5 // pred_fallthru
        _
      %p4459 = scmp.le.s32.totalorder 2, %s16
      // Predicated region
      $region53: #{tpu_custom_call.1} parent=5 // pred_check
        %p4460 = pneg %p4459
      $region54: #{tpu_custom_call.1} parent=5 // pred_check_branch
        %4462 = sbr.rel (%p4460) target = $region56
      $region55: #{tpu_custom_call.1} parent=5 // pred_region
        %s4463 = ssub.s32 %s16, 2
        // Predicated region
        $region57: #{tpu_custom_call.1} parent=55 // pred_check
          %p4464 = pneg %p197
        $region58: #{tpu_custom_call.1} parent=55 // pred_check_branch
          %4466 = sbr.rel (%p4464) target = $region60
        $region59: #{tpu_custom_call.1} parent=55 // pred_region
          %s4467 = sand.u32 %s182, 1
          %s4468 = scalar_lea.sflag [#allocation4], %s4467
          %s4469 = sand.u32 %s182, 1
          %s4470 = smul.addr %s4469, 256
          %s4471 = scalar_lea.vmem [#allocation3], %s4470
          %4472 = dma.done %s4468, 4096
        $region60: #{tpu_custom_call.1} parent=55 // pred_fallthru
          _
      $region56: #{tpu_custom_call.1} parent=5 // pred_fallthru
        _
    $region6: #{tpu_custom_call.1} parent=1 // loop_footer
      %s20 = sadd.s32 1, %s16
    $region7: #{tpu_custom_call.1} parent=1 // loop_footer_branch
      %15 = sbr.rel target = $region3
    $region8: #{tpu_custom_call.1} parent=1 // loop_exit
      _
    %4473 = vsyncpa [#allocation4], 1
    %s4474 = scalar_lea.sflag [#allocation4], 1
    %4475 = vsyncpa %s4474, 1

</llo_original>
